<compile_context>
chip_gen: v7x
topology: tpu7x:2x2x1
jax: 0.10.0
libtpu: 0.0.40
codegen_flags: <defaults>
</compile_context>

<pallas_src>
import functools

import jax
import jax.numpy as jnp
from jax import lax
from jax.experimental import pallas as pl
from jax.experimental.pallas import tpu as pltpu


def _upconv_kernel(src_ref, w_ref, o_ref, *scratch, plan, rep_w, t_s, w_out):
    """One (batch element, source-row tile) grid step.

    src_ref: (1, Cin, hs+2, ws+2)   zero-padded pre-upsample image (resident)
    w_ref:   (T, Cout, Cin)         packed per-(row-phase, row-tap, dx) weights
    o_ref:   (1, Cout, t_s, rep_h*w_out)   row-phase-major output tile
    scratch: [(Cin, t_s+2, (ws+2)*rep_w)]  column-replicated tile (rep_w > 1)
    """
    i = pl.program_id(1)
    cin = src_ref.shape[1]
    ws = src_ref.shape[3] - 2
    cout = o_ref.shape[1]
    r0 = i * t_s                                  # first source row of this tile

    if rep_w > 1:
        scr_ref = scratch[0]
        # Replicate the *padded* source columns rep_w times: this yields the
        # nearest-upsampled rows with rep_w zero columns on each side, so every
        # conv column tap below is a plain static slice (no border zero pass,
        # single aligned full-scratch store).
        rows = src_ref[0, :, pl.ds(r0, t_s + 2), :]           # (Cin, t_s+2, ws+2)
        rep = jnp.broadcast_to(rows[:, :, :, None],
                               (cin, t_s + 2, ws + 2, rep_w))
        scr_ref[...] = rep.reshape(cin, t_s + 2, (ws + 2) * rep_w)

    def window(sy, dx):
        """(Cin, t_s*w_out) source window for row-tap sy, column-tap dx."""
        if rep_w > 1:
            win = scr_ref[:, sy + 1:sy + 1 + t_s,
                          rep_w + dx:rep_w + dx + w_out]
        else:
            win = src_ref[0, :, pl.ds(r0 + sy + 1, t_s),
                          dx + 1:dx + 1 + w_out]
        return win.reshape(cin, t_s * w_out)

    # Accumulating matmuls (K = Cin) per tap; result is already (Cout, tile).
    for py, row_taps in plan:
        acc = None
        for sy, base in row_taps:
            for j in range(3):                                # dx = j - 1
                part = jnp.dot(w_ref[base + j], window(sy, j - 1),
                               preferred_element_type=jnp.float32)
                acc = part if acc is None else acc + part
        acc = jnp.where(acc > 0, acc, 0.1 * acc)              # LeakyReLU(0.1)
        o_ref[0, :, :, py * w_out:(py + 1) * w_out] = (
            acc.reshape(cout, t_s, w_out).astype(o_ref.dtype))


def _build_phase_weights(weight_oihw, rep_h):
    """Fold the integer nearest row-upsample into the 3x3 conv weight.

    Returns:
      w_packed: (T, Cout, Cin) f32 effective weights.
      plan:     [(py, [(sy, base_tap_index), ...]), ...] static schedule;
                taps base..base+2 of a (py, sy) entry are dx = -1, 0, +1.
    """
    plan = []
    w_list = []
    for py in range(rep_h):
        row_map = {}
        for dy in (-1, 0, 1):
            sy = (py + dy) // rep_h           # which source row this upsampled
            row_map.setdefault(sy, []).append(dy)   # conv tap aliases to
        taps = []
        for sy in sorted(row_map):
            base = len(w_list)
            for dx in (-1, 0, 1):
                dys = row_map[sy]
                w_eff = weight_oihw[:, :, dys[0] + 1, dx + 1]
                for dy in dys[1:]:
                    w_eff = w_eff + weight_oihw[:, :, dy + 1, dx + 1]
                w_list.append(w_eff)                          # (Cout, Cin)
            taps.append((sy, base))
        plan.append((py, taps))
    return jnp.stack(w_list, axis=0), plan


def _choose_src_row_tile(hs, ws, w_out, rep_h, rep_w, cin, cout, n_taps):
    """Largest source-row tile t_s (divisor of hs, layout-legal) whose per-step
    VMEM footprint (blocks x2 + scratch + live temporaries) fits the budget."""
    item = 4

    def est(t):
        src_blk = cin * (hs + 2) * (ws + 2) * item
        w_blk = n_taps * cout * cin * item
        out_blk = cout * t * rep_h * w_out * item
        scr = cin * (t + 2) * (w_out + 2 * rep_w) * item if rep_w > 1 else 0
        tmp = (2 * cin * t * w_out + cout * t * w_out) * item   # live windows+acc
        return 2 * (src_blk + w_blk + out_blk) + scr + tmp

    cands = [t for t in range(1, hs + 1)
             if hs % t == 0 and (t % 8 == 0 or t == hs)]
    budget = 26 << 20                              # keeps limit < v7x 64 MiB VMEM
    fitting = [t for t in cands if est(t) <= budget]
    if not fitting:
        t_s = min(cands)
    else:
        small_out = [t for t in fitting
                     if cout * t * rep_h * w_out * item <= (4 << 20)]
        t_s = max(small_out) if small_out else min(fitting)
    return t_s, est(t_s)


@functools.partial(jax.jit, static_argnames=("shape",))
def upconv2d(x_nchw, weight_oihw, shape):
    """UpConv2d forward: nearest upsample to `shape`, 3x3 conv (pad 1, no bias),
    LeakyReLU(0.1).

    x_nchw:      (N, Cin, h, w) float32
    weight_oihw: (Cout, Cin, 3, 3) float32
    shape:       (H, W) output spatial size
    returns:     (N, Cout, H, W) float32
    """
    N, cin, h, w = x_nchw.shape
    cout = weight_oihw.shape[0]
    H, W = shape

    x = x_nchw.astype(jnp.float32)

    # Integer ratios are folded into the kernel; otherwise fall back to one
    # wrapper-side nearest gather along that axis (PyTorch 'nearest' indexing).
    if H % h == 0:
        rep_h, hs = H // h, h
    else:
        x = x[:, :, (jnp.arange(H) * h) // H, :]
        rep_h, hs = 1, H
    if W % w == 0:
        rep_w, ws = W // w, w
    else:
        x = x[:, :, :, (jnp.arange(W) * w) // W]
        rep_w, ws = 1, W
    # TODO(synk): the non-integer fallback keeps the full gathered image
    # resident per batch element; very large outputs would need row-windowed
    # source DMA instead.

    # Zero-pad the tiny pre-upsample image by 1: provides the conv border (and
    # the top/bottom tile halos) so the kernel needs no pl.when edge logic.
    src_pad = jnp.pad(x, ((0, 0), (0, 0), (1, 1), (1, 1)))

    w_packed, plan = _build_phase_weights(weight_oihw.astype(jnp.float32), rep_h)
    n_taps = int(w_packed.shape[0])

    t_s, est_bytes = _choose_src_row_tile(hs, ws, W, rep_h, rep_w,
                                          cin, cout, n_taps)
    n_tiles = hs // t_s
    vmem_limit = int(min(max(est_bytes * 5 // 4, 16 << 20), 64 << 20))

    cost = pl.CostEstimate(
        flops=2 * N * n_taps * cin * cout * hs * W,
        transcendentals=0,
        bytes_accessed=4 * (N * cin * (hs + 2) * (ws + 2)
                            + n_taps * cout * cin
                            + N * cout * hs * rep_h * W))

    scratch_shapes = []
    if rep_w > 1:
        scratch_shapes = [pltpu.VMEM((cin, t_s + 2, (ws + 2) * rep_w),
                                     jnp.float32)]

    out = pl.pallas_call(
        functools.partial(_upconv_kernel, plan=plan, rep_w=rep_w,
                          t_s=t_s, w_out=W),
        out_shape=jax.ShapeDtypeStruct((N, cout, hs, rep_h * W), jnp.float32),
        grid_spec=pltpu.PrefetchScalarGridSpec(
            num_scalar_prefetch=0,
            grid=(N, n_tiles),
            in_specs=[
                # Small pre-upsample image, constant over the tile axis ->
                # VMEM-resident per batch element.
                pl.BlockSpec((1, cin, hs + 2, ws + 2), lambda n, i: (n, 0, 0, 0)),
                pl.BlockSpec((n_taps, cout, cin), lambda n, i: (0, 0, 0)),
            ],
            out_specs=pl.BlockSpec((1, cout, t_s, rep_h * W),
                                   lambda n, i: (n, 0, i, 0)),
            scratch_shapes=scratch_shapes,
        ),
        compiler_params=pltpu.CompilerParams(
            dimension_semantics=("parallel", "parallel"),
            vmem_limit_bytes=vmem_limit),
        cost_estimate=cost,
    )(src_pad, w_packed)

    # (N, Cout, hs, rep_h*W) -> (N, Cout, H, W): contiguous reshape, free.
    return out.reshape(N, cout, H, W)


def _reference(x_nchw, weight_oihw, shape):
    """Pure-JAX reference: nearest upsample + 3x3 conv (pad 1) + LeakyReLU(0.1)."""
    N, cin, h, w = x_nchw.shape
    H, W = shape
    rows = (jnp.arange(H) * h) // H
    cols = (jnp.arange(W) * w) // W
    up = x_nchw[:, :, rows, :][:, :, :, cols]
    conv = lax.conv_general_dilated(
        up, weight_oihw, window_strides=(1, 1), padding=((1, 1), (1, 1)),
        dimension_numbers=("NCHW", "OIHW", "NCHW"),
        precision=lax.Precision.HIGHEST)
    return jnp.where(conv > 0, conv, 0.1 * conv)


if __name__ == "__main__":
    key = jax.random.PRNGKey(0)
    k_x, k_w = jax.random.split(key)

    N, Cin, Cout = 2, 4, 8
    h_in, w_in = 8, 8

    x = jax.random.normal(k_x, (N, Cin, h_in, w_in), dtype=jnp.float32)
    fan_in = Cin * 3 * 3                      # kaiming-uniform-ish scale
    bound = (6.0 / fan_in) ** 0.5
    weight = jax.random.uniform(k_w, (Cout, Cin, 3, 3), dtype=jnp.float32,
                                minval=-bound, maxval=bound)

    # 2x integer nearest upsample (phase-decomposed fast path).
    out_hw = (16, 16)
    out = jax.block_until_ready(upconv2d(x, weight, out_hw))
    assert out.shape == (N, Cout, out_hw[0], out_hw[1])
    ref = _reference(x, weight, out_hw)
    err = float(jnp.max(jnp.abs(out - ref)))
    assert jnp.allclose(out, ref, atol=5e-3, rtol=5e-3), err

    # Non-integer ratio fallback path (wrapper-side nearest gather, rep = 1).
    out_hw2 = (12, 20)
    out2 = jax.block_until_ready(upconv2d(x, weight, out_hw2))
    assert out2.shape == (N, Cout, out_hw2[0], out_hw2[1])
    ref2 = _reference(x, weight, out_hw2)
    err2 = float(jnp.max(jnp.abs(out2 - ref2)))
    assert jnp.allclose(out2, ref2, atol=5e-3, rtol=5e-3), err2

    print("KERNEL_OK")
</pallas_src>

<mosaic_0001>
module attributes {stable_mosaic.version = 11 : i64} {
  func.func @_upconv_kernel(%arg0: i32, %arg1: i32, %arg2: memref<1x4x10x10xf32, #tpu.memory_space<vmem>>, %arg3: memref<12x8x4xf32, #tpu.memory_space<vmem>>, %arg4: memref<1x8x8x32xf32, #tpu.memory_space<vmem>>, %arg5: memref<4x10x20xf32, #tpu.memory_space<vmem>>) attributes {dimension_semantics = [#tpu.dimension_semantics<parallel>, #tpu.dimension_semantics<parallel>], iteration_bounds = array<i64: 2, 1>, scalar_prefetch = 0 : i64, scratch_operands = 1 : i64, tpu.core_type = #tpu.core_type<tc>, window_params = [{transform_indices = @transform_0, window_bounds = array<i64: 1, 4, 10, 10>}, {pipeline_mode = #tpu.pipeline_mode<synchronous>, transform_indices = @transform_1, window_bounds = array<i64: 12, 8, 4>}, {transform_indices = @transform_2, window_bounds = array<i64: 1, 8, 8, 32>}]} {
    %c8_i32 = arith.constant 8 : i32
    %0 = arith.muli %arg1, %c8_i32 : i32
    %c0 = arith.constant 0 : index
    %c0_0 = arith.constant 0 : index
    %1 = arith.index_cast %0 : i32 to index
    %c0_1 = arith.constant 0 : index
    %2 = vector.load %arg2[%c0, %c0_0, %1, %c0_1] : memref<1x4x10x10xf32, #tpu.memory_space<vmem>>, vector<1x4x10x10xf32>
    %3 = vector.shape_cast %2 : vector<1x4x10x10xf32> to vector<4x10x10xf32>
    %4 = vector.shape_cast %3 : vector<4x10x10xf32> to vector<4x10x10x1xf32>
    %5 = vector.shape_cast %4 : vector<4x10x10x1xf32> to vector<4x10x10x1xf32>
    %6 = vector.broadcast %5 : vector<4x10x10x1xf32> to vector<4x10x10x2xf32>
    %7 = vector.shape_cast %6 : vector<4x10x10x2xf32> to vector<4x10x20xf32>
    %c0_2 = arith.constant 0 : index
    %c0_3 = arith.constant 0 : index
    %c0_4 = arith.constant 0 : index
    %8 = vector.load %arg5[%c0_2, %c0_3, %c0_4] : memref<4x10x20xf32, #tpu.memory_space<vmem>>, vector<4x10x20xf32>
    tpu.vector_store %arg5[%c0_2, %c0_3, %c0_4], %7 {strides = array<i32>} : memref<4x10x20xf32, #tpu.memory_space<vmem>>, vector<4x10x20xf32>,
    %c0_5 = arith.constant 0 : index
    %c0_6 = arith.constant 0 : index
    %c0_7 = arith.constant 0 : index
    %9 = vector.load %arg3[%c0_5, %c0_6, %c0_7] : memref<12x8x4xf32, #tpu.memory_space<vmem>>, vector<1x8x4xf32>
    %10 = vector.shape_cast %9 : vector<1x8x4xf32> to vector<8x4xf32>
    %c0_8 = arith.constant 0 : index
    %c0_9 = arith.constant 0 : index
    %c1 = arith.constant 1 : index
    %11 = vector.load %arg5[%c0_8, %c0_9, %c1] : memref<4x10x20xf32, #tpu.memory_space<vmem>>, vector<4x8x16xf32>
    %12 = vector.shape_cast %11 : vector<4x8x16xf32> to vector<4x128xf32>
    %cst = arith.constant dense<0.000000e+00> : vector<8x128xf32>
    %13 = tpu.matmul %10, %12, %cst {dimension_numbers = #tpu.dot_dimension_numbers<[1], [0], [0], [1], [0, 0, 1, 1], [], []>} : vector<8x4xf32>, vector<4x128xf32>, vector<8x128xf32> -> vector<8x128xf32>
    %c1_10 = arith.constant 1 : index
    %c0_11 = arith.constant 0 : index
    %c0_12 = arith.constant 0 : index
    %14 = vector.load %arg3[%c1_10, %c0_11, %c0_12] : memref<12x8x4xf32, #tpu.memory_space<vmem>>, vector<1x8x4xf32>
    %15 = vector.shape_cast %14 : vector<1x8x4xf32> to vector<8x4xf32>
    %c0_13 = arith.constant 0 : index
    %c0_14 = arith.constant 0 : index
    %c2 = arith.constant 2 : index
    %16 = vector.load %arg5[%c0_13, %c0_14, %c2] : memref<4x10x20xf32, #tpu.memory_space<vmem>>, vector<4x8x16xf32>
    %17 = vector.shape_cast %16 : vector<4x8x16xf32> to vector<4x128xf32>
    %cst_15 = arith.constant dense<0.000000e+00> : vector<8x128xf32>
    %18 = tpu.matmul %15, %17, %cst_15 {dimension_numbers = #tpu.dot_dimension_numbers<[1], [0], [0], [1], [0, 0, 1, 1], [], []>} : vector<8x4xf32>, vector<4x128xf32>, vector<8x128xf32> -> vector<8x128xf32>
    %19 = arith.addf %13, %18 : vector<8x128xf32>
    %c2_16 = arith.constant 2 : index
    %c0_17 = arith.constant 0 : index
    %c0_18 = arith.constant 0 : index
    %20 = vector.load %arg3[%c2_16, %c0_17, %c0_18] : memref<12x8x4xf32, #tpu.memory_space<vmem>>, vector<1x8x4xf32>
    %21 = vector.shape_cast %20 : vector<1x8x4xf32> to vector<8x4xf32>
    %c0_19 = arith.constant 0 : index
    %c0_20 = arith.constant 0 : index
    %c3 = arith.constant 3 : index
    %22 = vector.load %arg5[%c0_19, %c0_20, %c3] : memref<4x10x20xf32, #tpu.memory_space<vmem>>, vector<4x8x16xf32>
    %23 = vector.shape_cast %22 : vector<4x8x16xf32> to vector<4x128xf32>
    %cst_21 = arith.constant dense<0.000000e+00> : vector<8x128xf32>
    %24 = tpu.matmul %21, %23, %cst_21 {dimension_numbers = #tpu.dot_dimension_numbers<[1], [0], [0], [1], [0, 0, 1, 1], [], []>} : vector<8x4xf32>, vector<4x128xf32>, vector<8x128xf32> -> vector<8x128xf32>
    %25 = arith.addf %19, %24 : vector<8x128xf32>
    %c3_22 = arith.constant 3 : index
    %c0_23 = arith.constant 0 : index
    %c0_24 = arith.constant 0 : index
    %26 = vector.load %arg3[%c3_22, %c0_23, %c0_24] : memref<12x8x4xf32, #tpu.memory_space<vmem>>, vector<1x8x4xf32>
    %27 = vector.shape_cast %26 : vector<1x8x4xf32> to vector<8x4xf32>
    %c0_25 = arith.constant 0 : index
    %c1_26 = arith.constant 1 : index
    %c1_27 = arith.constant 1 : index
    %28 = vector.load %arg5[%c0_25, %c1_26, %c1_27] : memref<4x10x20xf32, #tpu.memory_space<vmem>>, vector<4x8x16xf32>
    %29 = vector.shape_cast %28 : vector<4x8x16xf32> to vector<4x128xf32>
    %cst_28 = arith.constant dense<0.000000e+00> : vector<8x128xf32>
    %30 = tpu.matmul %27, %29, %cst_28 {dimension_numbers = #tpu.dot_dimension_numbers<[1], [0], [0], [1], [0, 0, 1, 1], [], []>} : vector<8x4xf32>, vector<4x128xf32>, vector<8x128xf32> -> vector<8x128xf32>
    %31 = arith.addf %25, %30 : vector<8x128xf32>
    %c4 = arith.constant 4 : index
    %c0_29 = arith.constant 0 : index
    %c0_30 = arith.constant 0 : index
    %32 = vector.load %arg3[%c4, %c0_29, %c0_30] : memref<12x8x4xf32, #tpu.memory_space<vmem>>, vector<1x8x4xf32>
    %33 = vector.shape_cast %32 : vector<1x8x4xf32> to vector<8x4xf32>
    %c0_31 = arith.constant 0 : index
    %c1_32 = arith.constant 1 : index
    %c2_33 = arith.constant 2 : index
    %34 = vector.load %arg5[%c0_31, %c1_32, %c2_33] : memref<4x10x20xf32, #tpu.memory_space<vmem>>, vector<4x8x16xf32>
    %35 = vector.shape_cast %34 : vector<4x8x16xf32> to vector<4x128xf32>
    %cst_34 = arith.constant dense<0.000000e+00> : vector<8x128xf32>
    %36 = tpu.matmul %33, %35, %cst_34 {dimension_numbers = #tpu.dot_dimension_numbers<[1], [0], [0], [1], [0, 0, 1, 1], [], []>} : vector<8x4xf32>, vector<4x128xf32>, vector<8x128xf32> -> vector<8x128xf32>
    %37 = arith.addf %31, %36 : vector<8x128xf32>
    %c5 = arith.constant 5 : index
    %c0_35 = arith.constant 0 : index
    %c0_36 = arith.constant 0 : index
    %38 = vector.load %arg3[%c5, %c0_35, %c0_36] : memref<12x8x4xf32, #tpu.memory_space<vmem>>, vector<1x8x4xf32>
    %39 = vector.shape_cast %38 : vector<1x8x4xf32> to vector<8x4xf32>
    %c0_37 = arith.constant 0 : index
    %c1_38 = arith.constant 1 : index
    %c3_39 = arith.constant 3 : index
    %40 = vector.load %arg5[%c0_37, %c1_38, %c3_39] : memref<4x10x20xf32, #tpu.memory_space<vmem>>, vector<4x8x16xf32>
    %41 = vector.shape_cast %40 : vector<4x8x16xf32> to vector<4x128xf32>
    %cst_40 = arith.constant dense<0.000000e+00> : vector<8x128xf32>
    %42 = tpu.matmul %39, %41, %cst_40 {dimension_numbers = #tpu.dot_dimension_numbers<[1], [0], [0], [1], [0, 0, 1, 1], [], []>} : vector<8x4xf32>, vector<4x128xf32>, vector<8x128xf32> -> vector<8x128xf32>
    %43 = arith.addf %37, %42 : vector<8x128xf32>
    %cst_41 = arith.constant 0.000000e+00 : f32
    %44 = vector.broadcast %cst_41 : f32 to vector<8x128xf32>
    %45 = arith.cmpf ogt, %43, %44 : vector<8x128xf32>
    %cst_42 = arith.constant 1.000000e-01 : f32
    %46 = vector.broadcast %cst_42 : f32 to vector<8x128xf32>
    %47 = arith.mulf %46, %43 : vector<8x128xf32>
    %48 = arith.select %45, %43, %47 : vector<8x128xi1>, vector<8x128xf32>
    %49 = vector.shape_cast %48 : vector<8x128xf32> to vector<8x8x16xf32>
    %c0_43 = arith.constant 0 : index
    %c0_44 = arith.constant 0 : index
    %c0_45 = arith.constant 0 : index
    %c0_46 = arith.constant 0 : index
    %50 = vector.load %arg4[%c0_43, %c0_44, %c0_45, %c0_46] : memref<1x8x8x32xf32, #tpu.memory_space<vmem>>, vector<1x8x8x16xf32>
    %51 = vector.shape_cast %50 : vector<1x8x8x16xf32> to vector<8x8x16xf32>
    %52 = vector.shape_cast %49 : vector<8x8x16xf32> to vector<1x8x8x16xf32>
    tpu.vector_store %arg4[%c0_43, %c0_44, %c0_45, %c0_46], %52 {strides = array<i32>} : memref<1x8x8x32xf32, #tpu.memory_space<vmem>>, vector<1x8x8x16xf32>,
    %c6 = arith.constant 6 : index
    %c0_47 = arith.constant 0 : index
    %c0_48 = arith.constant 0 : index
    %53 = vector.load %arg3[%c6, %c0_47, %c0_48] : memref<12x8x4xf32, #tpu.memory_space<vmem>>, vector<1x8x4xf32>
    %54 = vector.shape_cast %53 : vector<1x8x4xf32> to vector<8x4xf32>
    %c0_49 = arith.constant 0 : index
    %c1_50 = arith.constant 1 : index
    %c1_51 = arith.constant 1 : index
    %55 = vector.load %arg5[%c0_49, %c1_50, %c1_51] : memref<4x10x20xf32, #tpu.memory_space<vmem>>, vector<4x8x16xf32>
    %56 = vector.shape_cast %55 : vector<4x8x16xf32> to vector<4x128xf32>
    %cst_52 = arith.constant dense<0.000000e+00> : vector<8x128xf32>
    %57 = tpu.matmul %54, %56, %cst_52 {dimension_numbers = #tpu.dot_dimension_numbers<[1], [0], [0], [1], [0, 0, 1, 1], [], []>} : vector<8x4xf32>, vector<4x128xf32>, vector<8x128xf32> -> vector<8x128xf32>
    %c7 = arith.constant 7 : index
    %c0_53 = arith.constant 0 : index
    %c0_54 = arith.constant 0 : index
    %58 = vector.load %arg3[%c7, %c0_53, %c0_54] : memref<12x8x4xf32, #tpu.memory_space<vmem>>, vector<1x8x4xf32>
    %59 = vector.shape_cast %58 : vector<1x8x4xf32> to vector<8x4xf32>
    %c0_55 = arith.constant 0 : index
    %c1_56 = arith.constant 1 : index
    %c2_57 = arith.constant 2 : index
    %60 = vector.load %arg5[%c0_55, %c1_56, %c2_57] : memref<4x10x20xf32, #tpu.memory_space<vmem>>, vector<4x8x16xf32>
    %61 = vector.shape_cast %60 : vector<4x8x16xf32> to vector<4x128xf32>
    %cst_58 = arith.constant dense<0.000000e+00> : vector<8x128xf32>
    %62 = tpu.matmul %59, %61, %cst_58 {dimension_numbers = #tpu.dot_dimension_numbers<[1], [0], [0], [1], [0, 0, 1, 1], [], []>} : vector<8x4xf32>, vector<4x128xf32>, vector<8x128xf32> -> vector<8x128xf32>
    %63 = arith.addf %57, %62 : vector<8x128xf32>
    %c8 = arith.constant 8 : index
    %c0_59 = arith.constant 0 : index
    %c0_60 = arith.constant 0 : index
    %64 = vector.load %arg3[%c8, %c0_59, %c0_60] : memref<12x8x4xf32, #tpu.memory_space<vmem>>, vector<1x8x4xf32>
    %65 = vector.shape_cast %64 : vector<1x8x4xf32> to vector<8x4xf32>
    %c0_61 = arith.constant 0 : index
    %c1_62 = arith.constant 1 : index
    %c3_63 = arith.constant 3 : index
    %66 = vector.load %arg5[%c0_61, %c1_62, %c3_63] : memref<4x10x20xf32, #tpu.memory_space<vmem>>, vector<4x8x16xf32>
    %67 = vector.shape_cast %66 : vector<4x8x16xf32> to vector<4x128xf32>
    %cst_64 = arith.constant dense<0.000000e+00> : vector<8x128xf32>
    %68 = tpu.matmul %65, %67, %cst_64 {dimension_numbers = #tpu.dot_dimension_numbers<[1], [0], [0], [1], [0, 0, 1, 1], [], []>} : vector<8x4xf32>, vector<4x128xf32>, vector<8x128xf32> -> vector<8x128xf32>
    %69 = arith.addf %63, %68 : vector<8x128xf32>
    %c9 = arith.constant 9 : index
    %c0_65 = arith.constant 0 : index
    %c0_66 = arith.constant 0 : index
    %70 = vector.load %arg3[%c9, %c0_65, %c0_66] : memref<12x8x4xf32, #tpu.memory_space<vmem>>, vector<1x8x4xf32>
    %71 = vector.shape_cast %70 : vector<1x8x4xf32> to vector<8x4xf32>
    %c0_67 = arith.constant 0 : index
    %c2_68 = arith.constant 2 : index
    %c1_69 = arith.constant 1 : index
    %72 = vector.load %arg5[%c0_67, %c2_68, %c1_69] : memref<4x10x20xf32, #tpu.memory_space<vmem>>, vector<4x8x16xf32>
    %73 = vector.shape_cast %72 : vector<4x8x16xf32> to vector<4x128xf32>
    %cst_70 = arith.constant dense<0.000000e+00> : vector<8x128xf32>
    %74 = tpu.matmul %71, %73, %cst_70 {dimension_numbers = #tpu.dot_dimension_numbers<[1], [0], [0], [1], [0, 0, 1, 1], [], []>} : vector<8x4xf32>, vector<4x128xf32>, vector<8x128xf32> -> vector<8x128xf32>
    %75 = arith.addf %69, %74 : vector<8x128xf32>
    %c10 = arith.constant 10 : index
    %c0_71 = arith.constant 0 : index
    %c0_72 = arith.constant 0 : index
    %76 = vector.load %arg3[%c10, %c0_71, %c0_72] : memref<12x8x4xf32, #tpu.memory_space<vmem>>, vector<1x8x4xf32>
    %77 = vector.shape_cast %76 : vector<1x8x4xf32> to vector<8x4xf32>
    %c0_73 = arith.constant 0 : index
    %c2_74 = arith.constant 2 : index
    %c2_75 = arith.constant 2 : index
    %78 = vector.load %arg5[%c0_73, %c2_74, %c2_75] : memref<4x10x20xf32, #tpu.memory_space<vmem>>, vector<4x8x16xf32>
    %79 = vector.shape_cast %78 : vector<4x8x16xf32> to vector<4x128xf32>
    %cst_76 = arith.constant dense<0.000000e+00> : vector<8x128xf32>
    %80 = tpu.matmul %77, %79, %cst_76 {dimension_numbers = #tpu.dot_dimension_numbers<[1], [0], [0], [1], [0, 0, 1, 1], [], []>} : vector<8x4xf32>, vector<4x128xf32>, vector<8x128xf32> -> vector<8x128xf32>
    %81 = arith.addf %75, %80 : vector<8x128xf32>
    %c11 = arith.constant 11 : index
    %c0_77 = arith.constant 0 : index
    %c0_78 = arith.constant 0 : index
    %82 = vector.load %arg3[%c11, %c0_77, %c0_78] : memref<12x8x4xf32, #tpu.memory_space<vmem>>, vector<1x8x4xf32>
    %83 = vector.shape_cast %82 : vector<1x8x4xf32> to vector<8x4xf32>
    %c0_79 = arith.constant 0 : index
    %c2_80 = arith.constant 2 : index
    %c3_81 = arith.constant 3 : index
    %84 = vector.load %arg5[%c0_79, %c2_80, %c3_81] : memref<4x10x20xf32, #tpu.memory_space<vmem>>, vector<4x8x16xf32>
    %85 = vector.shape_cast %84 : vector<4x8x16xf32> to vector<4x128xf32>
    %cst_82 = arith.constant dense<0.000000e+00> : vector<8x128xf32>
    %86 = tpu.matmul %83, %85, %cst_82 {dimension_numbers = #tpu.dot_dimension_numbers<[1], [0], [0], [1], [0, 0, 1, 1], [], []>} : vector<8x4xf32>, vector<4x128xf32>, vector<8x128xf32> -> vector<8x128xf32>
    %87 = arith.addf %81, %86 : vector<8x128xf32>
    %cst_83 = arith.constant 0.000000e+00 : f32
    %88 = vector.broadcast %cst_83 : f32 to vector<8x128xf32>
    %89 = arith.cmpf ogt, %87, %88 : vector<8x128xf32>
    %cst_84 = arith.constant 1.000000e-01 : f32
    %90 = vector.broadcast %cst_84 : f32 to vector<8x128xf32>
    %91 = arith.mulf %90, %87 : vector<8x128xf32>
    %92 = arith.select %89, %87, %91 : vector<8x128xi1>, vector<8x128xf32>
    %93 = vector.shape_cast %92 : vector<8x128xf32> to vector<8x8x16xf32>
    %c0_85 = arith.constant 0 : index
    %c0_86 = arith.constant 0 : index
    %c0_87 = arith.constant 0 : index
    %c16 = arith.constant 16 : index
    %94 = vector.load %arg4[%c0_85, %c0_86, %c0_87, %c16] : memref<1x8x8x32xf32, #tpu.memory_space<vmem>>, vector<1x8x8x16xf32>
    %95 = vector.shape_cast %94 : vector<1x8x8x16xf32> to vector<8x8x16xf32>
    %96 = vector.shape_cast %93 : vector<8x8x16xf32> to vector<1x8x8x16xf32>
    tpu.vector_store %arg4[%c0_85, %c0_86, %c0_87, %c16], %96 {strides = array<i32>} : memref<1x8x8x32xf32, #tpu.memory_space<vmem>>, vector<1x8x8x16xf32>,
    return
  }
  func.func @transform_0(%arg0: i32, %arg1: i32) -> (i32, i32, i32, i32) {
    %c0_i32 = arith.constant 0 : i32
    %c0_i32_0 = arith.constant 0 : i32
    %c0_i32_1 = arith.constant 0 : i32
    %c0_i32_2 = arith.constant 0 : i32
    return %arg0, %c0_i32, %c0_i32_0, %c0_i32_1 : i32, i32, i32, i32
  }
  func.func @transform_1(%arg0: i32, %arg1: i32) -> (i32, i32, i32) {
    %c0_i32 = arith.constant 0 : i32
    %c0_i32_0 = arith.constant 0 : i32
    %c0_i32_1 = arith.constant 0 : i32
    %c0_i32_2 = arith.constant 0 : i32
    return %c0_i32, %c0_i32_0, %c0_i32_1 : i32, i32, i32
  }
  func.func @transform_2(%arg0: i32, %arg1: i32) -> (i32, i32, i32, i32) {
    %c0_i32 = arith.constant 0 : i32
    %c0_i32_0 = arith.constant 0 : i32
    %c0_i32_1 = arith.constant 0 : i32
    return %arg0, %c0_i32, %arg1, %c0_i32_0 : i32, i32, i32, i32
  }
}

</mosaic_0001>

<llo_original>
// kernel: upconv2d.1
$region0: #{upconv2d.1}
  #allocation0 [shape = 'u32[]', space=smem, size = 0x4, offset = 0x4, fixed_abs, tag = 'smem constant byte address 0x4 - core index']
  #allocation1 [shape = 'u32[144,128]{1,0:T(1,128)}', space=vmem, size = 0x12000, scoped, tag = 'internal scratch']
  #allocation2 [shape = 'f32[4,10,20]{2,1,0:T(8,128)}', space=vmem, size = 0x8000, scoped, tag = 'scratch operand']
  %s0 = inlined_call_operand.vmem [shape: f32[2,4,10,10], index: 0, kind: input, shape index: {}]
  %s1 = inlined_call_operand.vmem [shape: f32[12,8,4], index: 1, kind: input, shape index: {}]
  %s2 = inlined_call_operand.vmem [shape: f32[2,8,8,32], index: 2, kind: output, shape index: {}]
  %s3 = sld [smem:[#allocation0]]
  $region41: #{upconv2d.1} parent=0
    _
  %s5 = ssub.s32 1, %s3
  %s6 = scalar_select 0, %s5, %s3
  loop: start=0, step=1, limit=4
  $region2: #{upconv2d.1} parent=0 // loop_pre_header
    _
  $region3: #{upconv2d.1} parent=0 // loop_header
    %s8 = sphi 0, %s12
    %p9 = scmp.ge.s32.totalorder %s8, 4
    %s15 = sphi 0, %s27
    %s16 = sphi 0, %s23
    %s17 = sphi 0, %s15
    %s18 = sphi 0, %s16
    %s19 = sphi 0, %s17
    %s20 = sphi 0, %s18
    %s30 = sphi 0, %s32
    %s33 = sphi 0, %s30
    %s34 = sphi 0, %s33
    %s50 = sphi 0, %s34
    %s54 = sphi 0, %s54
    %s56 = sphi 0, %s54
    %s57 = sphi 0, %s56
    %s71 = sphi 0, %s57
    %s79 = sphi 0, %s81
    %s82 = sphi 0, %s79
    %s83 = sphi 0, %s82
    %s99 = sphi 0, %s83
  $region4: #{upconv2d.1} parent=0 // loop_header_branch
    %11 = sbr.rel (%p9) target = $region8
  $region5: #{upconv2d.1} parent=0 // loop_body
    %s13 = ssub.s32 %s8, 1
    %s14 = ssub.s32 %s8, 2
    %s21 = sadd.s32 1, %s16
    %p22 = scmp.ge.s32.totalorder %s21, 1
    %s23 = scalar_select %p22, 0, %s21
    %s24 = sadd.s32 1, %s15
    %s25 = scalar_select %p22, %s24, %s15
    %p26 = scmp.ge.s32.totalorder %s25, 2
    %s27 = scalar_select %p26, 0, %s25
    %s28 = ssub.s32 %s15, %s27
    %p29 = scmp.eq.s32.totalorder %s28, 0
    %s31 = sadd.s32 %s30, 1
    %s32 = scalar_select %p29, %s30, %s31
    %p35 = pneg %p29
    %p36 = scmp.eq.s32.totalorder %s8, 1
    %p37 = por %p35, %p36
    %p38 = scmp.ne.s32.totalorder %s30, %s33
    %p39 = scmp.eq.s32.totalorder %s8, 0
    %p40 = por %p38, %p39
    %p41 = scmp.ne.s32.totalorder %s30, %s33
    %p42 = scmp.eq.s32.totalorder %s13, 1
    %p43 = por %p41, %p42
    %p44 = scmp.ne.s32.totalorder %s33, %s34
    %p45 = scmp.eq.s32.totalorder %s13, 0
    %p46 = por %p44, %p45
    %p47 = scmp.ne.s32.totalorder %s33, %s34
    %p48 = scmp.eq.s32.totalorder %s14, 1
    %p49 = por %p47, %p48
    %p51 = scmp.ne.s32.totalorder %s34, %s50
    %p52 = scmp.eq.s32.totalorder %s14, 0
    %p53 = por %p51, %p52
    %s55 = sadd.s32 %s54, 1
    %p58 = scmp.eq.s32.totalorder %s8, 1
    %p59 = scmp.ne.s32.totalorder %s54, %s56
    %p60 = scmp.eq.s32.totalorder %s8, 0
    %p61 = por %p59, %p60
    %p62 = scmp.ne.s32.totalorder %s54, %s56
    %p63 = scmp.eq.s32.totalorder %s13, 1
    %p64 = por %p62, %p63
    %p65 = scmp.ne.s32.totalorder %s56, %s57
    %p66 = scmp.eq.s32.totalorder %s13, 0
    %p67 = por %p65, %p66
    %p68 = scmp.ne.s32.totalorder %s56, %s57
    %p69 = scmp.eq.s32.totalorder %s14, 1
    %p70 = por %p68, %p69
    %p72 = scmp.ne.s32.totalorder %s57, %s71
    %p73 = scmp.eq.s32.totalorder %s14, 0
    %p74 = por %p72, %p73
    %s75 = ssub.s32 %s15, %s27
    %s76 = ssub.s32 %s16, %s23
    %s77 = sor.u32 %s75, %s76
    %p78 = scmp.eq.s32.totalorder %s77, 0
    %s80 = sadd.s32 %s79, 1
    %s81 = scalar_select %p78, %s79, %s80
    %p84 = pneg %p78
    %p85 = scmp.eq.s32.totalorder %s8, 1
    %p86 = por %p84, %p85
    %p87 = scmp.ne.s32.totalorder %s79, %s82
    %p88 = scmp.eq.s32.totalorder %s8, 0
    %p89 = por %p87, %p88
    %p90 = scmp.ne.s32.totalorder %s79, %s82
    %p91 = scmp.eq.s32.totalorder %s13, 1
    %p92 = por %p90, %p91
    %p93 = scmp.ne.s32.totalorder %s82, %s83
    %p94 = scmp.eq.s32.totalorder %s13, 0
    %p95 = por %p93, %p94
    %p96 = scmp.ne.s32.totalorder %s82, %s83
    %p97 = scmp.eq.s32.totalorder %s14, 1
    %p98 = por %p96, %p97
    %p100 = scmp.ne.s32.totalorder %s83, %s99
    %p101 = scmp.eq.s32.totalorder %s14, 0
    %p102 = por %p100, %p101
    %p103 = scmp.le.s32.totalorder 1, %s8
    %p104 = scmp.lt.s32.totalorder %s8, 3
    %p105 = pnand %p103, %p104
    %p106 = pneg %p105
    // Predicated region
    $region9: #{upconv2d.1} parent=5 // pred_check
      _
    $region10: #{upconv2d.1} parent=5 // pred_check_branch
      %108 = sbr.rel (%p105) target = $region12
    $region11: #{upconv2d.1} parent=5 // pred_region
      %s109 = ssub.s32 %s8, 1
      // Predicated region
      $region13: #{upconv2d.1} parent=11 // pred_check
        %p110 = pneg %p67
      $region14: #{upconv2d.1} parent=11 // pred_check_branch
        %112 = sbr.rel (%p110) target = $region16
      $region15: #{upconv2d.1} parent=11 // pred_region
        _
      $region16: #{upconv2d.1} parent=11 // pred_fallthru
        _
    $region12: #{upconv2d.1} parent=5 // pred_fallthru
      _
    %p113 = scmp.lt.s32.totalorder %s8, 2
    // Predicated region
    $region17: #{upconv2d.1} parent=5 // pred_check
      %p114 = pneg %p113
    $region18: #{upconv2d.1} parent=5 // pred_check_branch
      %116 = sbr.rel (%p114) target = $region20
    $region19: #{upconv2d.1} parent=5 // pred_region
      // Predicated region
      $region21: #{upconv2d.1} parent=19 // pred_check
        %p117 = pneg %p40
      $region22: #{upconv2d.1} parent=19 // pred_check_branch
        %119 = sbr.rel (%p117) target = $region24
      $region23: #{upconv2d.1} parent=19 // pred_region
        %p120 = scmp.lt.s32.totalorder %s15, 1
        %s121 = scalar_select %p120, %s15, 1
        %s122 = smul.addr %s121, 8
        %s123 = smul.addr %s122, 8
        %s124 = scalar_lea.vmem %s0, %s123
      $region24: #{upconv2d.1} parent=19 // pred_fallthru
        _
    $region20: #{upconv2d.1} parent=5 // pred_fallthru
      _
    %p125 = scmp.le.s32.totalorder 1, %s8
    %p126 = scmp.lt.s32.totalorder %s8, 3
    %p127 = pnand %p125, %p126
    %p128 = pneg %p127
    // Predicated region
    $region25: #{upconv2d.1} parent=5 // pred_check
      _
    $region26: #{upconv2d.1} parent=5 // pred_check_branch
      %130 = sbr.rel (%p127) target = $region28
    $region27: #{upconv2d.1} parent=5 // pred_region
      %s131 = ssub.s32 %s8, 1
      %p132 = scmp.lt.s32.totalorder %s17, 1
      %s133 = scalar_select %p132, %s17, 1
      %s134 = smul.addr %s133, 8
      %s135 = smul.addr %s134, 8
      %s136 = scalar_lea.vmem %s0, %s135
      %p137 = pneg %p46
      %p138 = pneg %p43
      %p139 = pneg %p67
      %p140 = pneg %p64
      %p141 = pneg %p95
      %p142 = pneg %p92
      %p143 = scmp.lt.s32.totalorder %s17, 1
      %s144 = scalar_select %p143, %s17, 1
      %p145 = scmp.lt.s32.totalorder %s18, 0
      %s146 = scalar_select %p145, %s18, 0
      %s147 = smul.addr %s144, 8
      %s148 = sadd.s32 %s146, %s147
      %s149 = smul.addr %s148, 8
      %s150 = scalar_lea.vmem %s2, %s149
      %p151 = scmp.lt.s32.totalorder %s17, 1
      %s152 = scalar_select %p151, %s17, 1
      %s153 = smul.addr %s152, 8
      %s154 = smul.addr %s153, 8
      %s155 = scalar_lea.vmem %s0, %s154
      %p156 = scmp.lt.s32.totalorder %s17, 1
      %s157 = scalar_select %p156, %s17, 1
      %p158 = scmp.lt.s32.totalorder %s18, 0
      %s159 = scalar_select %p158, %s18, 0
      %s160 = smul.addr %s157, 8
      %s161 = sadd.s32 %s159, %s160
      %s162 = smul.addr %s161, 8
      %s163 = scalar_lea.vmem %s2, %s162
      %s164 = smul.u32 %s18, 8
      %s165 = scalar_lea.vmem %s155, %s164
      %v166 = vld [vmem:[%s165] sm:$0xff]
      %v167 = vld [vmem:[%s165 + $0x8] sm:$0x3]
      %v168 = vld [vmem:[%s165 + $0x10] sm:$0xff]
      %v169 = vld [vmem:[%s165 + $0x18] sm:$0x3]
      %v170 = vld [vmem:[%s165 + $0x20] sm:$0xff]
      %v171 = vld [vmem:[%s165 + $0x28] sm:$0x3]
      %v172 = vld [vmem:[%s165 + $0x30] sm:$0xff]
      %v173 = vld [vmem:[%s165 + $0x38] sm:$0x3]
      %v174 = vlaneseq
      %v175 = vshrl.u32 %v174, 7
      %v176 = vsub.s32 0, %v175
      %v177 = vrot.slane %v166, %v176
      %179 = vbcast.lane.b32.xlu0 %v177, 256
      %v180 = vpop.permute.xlu0 %179
      %s182 = sor.u32 256, 8
      %183 = vbcast.lane.b32.xlu0 %v177, %s182
      %v184 = vpop.permute.xlu0 %183
      %v185 = vlaneseq
      %v186 = vshrl.u32 %v185, 7
      %v187 = vsub.s32 1, %v186
      %v188 = vrot.slane %v166, %v187
      %190 = vbcast.lane.b32.xlu0 %v188, 256
      %v191 = vpop.permute.xlu0 %190
      %s193 = sor.u32 256, 8
      %194 = vbcast.lane.b32.xlu0 %v188, %s193
      %v195 = vpop.permute.xlu0 %194
      %v196 = vlaneseq
      %v197 = vshrl.u32 %v196, 7
      %v198 = vsub.s32 2, %v197
      %v199 = vrot.slane %v166, %v198
      %201 = vbcast.lane.b32.xlu0 %v199, 256
      %v202 = vpop.permute.xlu0 %201
      %s204 = sor.u32 256, 8
      %205 = vbcast.lane.b32.xlu0 %v199, %s204
      %v206 = vpop.permute.xlu0 %205
      %v207 = vlaneseq
      %v208 = vshrl.u32 %v207, 7
      %v209 = vsub.s32 3, %v208
      %v210 = vrot.slane %v166, %v209
      %212 = vbcast.lane.b32.xlu0 %v210, 256
      %v213 = vpop.permute.xlu0 %212
      %s215 = sor.u32 256, 8
      %216 = vbcast.lane.b32.xlu0 %v210, %s215
      %v217 = vpop.permute.xlu0 %216
      %v218 = vlaneseq
      %v219 = vshrl.u32 %v218, 7
      %v220 = vsub.s32 4, %v219
      %v221 = vrot.slane %v166, %v220
      %223 = vbcast.lane.b32.xlu0 %v221, 256
      %v224 = vpop.permute.xlu0 %223
      %s226 = sor.u32 256, 8
      %227 = vbcast.lane.b32.xlu0 %v221, %s226
      %v228 = vpop.permute.xlu0 %227
      %v229 = vlaneseq
      %v230 = vshrl.u32 %v229, 7
      %v231 = vsub.s32 5, %v230
      %v232 = vrot.slane %v166, %v231
      %234 = vbcast.lane.b32.xlu0 %v232, 256
      %v235 = vpop.permute.xlu0 %234
      %s237 = sor.u32 256, 8
      %238 = vbcast.lane.b32.xlu0 %v232, %s237
      %v239 = vpop.permute.xlu0 %238
      %v240 = vlaneseq
      %v241 = vshrl.u32 %v240, 7
      %v242 = vsub.s32 6, %v241
      %v243 = vrot.slane %v166, %v242
      %245 = vbcast.lane.b32.xlu0 %v243, 256
      %v246 = vpop.permute.xlu0 %245
      %s248 = sor.u32 256, 8
      %249 = vbcast.lane.b32.xlu0 %v243, %s248
      %v250 = vpop.permute.xlu0 %249
      %v251 = vlaneseq
      %v252 = vshrl.u32 %v251, 7
      %v253 = vsub.s32 7, %v252
      %v254 = vrot.slane %v166, %v253
      %256 = vbcast.lane.b32.xlu0 %v254, 256
      %v257 = vpop.permute.xlu0 %256
      %s259 = sor.u32 256, 8
      %260 = vbcast.lane.b32.xlu0 %v254, %s259
      %v261 = vpop.permute.xlu0 %260
      %v262 = vlaneseq
      %v263 = vshrl.u32 %v262, 7
      %v264 = vsub.s32 0, %v263
      %v265 = vrot.slane %v167, %v264
      %267 = vbcast.lane.b32.xlu0 %v265, 256
      %v268 = vpop.permute.xlu0 %267
      %v269 = vlaneseq
      %v270 = vshrl.u32 %v269, 7
      %v271 = vsub.s32 1, %v270
      %v272 = vrot.slane %v167, %v271
      %274 = vbcast.lane.b32.xlu0 %v272, 256
      %v275 = vpop.permute.xlu0 %274
      %v276 = vlaneseq
      %v277 = vshrl.u32 %v276, 7
      %v278 = vsub.s32 0, %v277
      %v279 = vrot.slane %v168, %v278
      %281 = vbcast.lane.b32.xlu0 %v279, 256
      %v282 = vpop.permute.xlu0 %281
      %s284 = sor.u32 256, 8
      %285 = vbcast.lane.b32.xlu0 %v279, %s284
      %v286 = vpop.permute.xlu0 %285
      %v287 = vlaneseq
      %v288 = vshrl.u32 %v287, 7
      %v289 = vsub.s32 1, %v288
      %v290 = vrot.slane %v168, %v289
      %292 = vbcast.lane.b32.xlu0 %v290, 256
      %v293 = vpop.permute.xlu0 %292
      %s295 = sor.u32 256, 8
      %296 = vbcast.lane.b32.xlu0 %v290, %s295
      %v297 = vpop.permute.xlu0 %296
      %v298 = vlaneseq
      %v299 = vshrl.u32 %v298, 7
      %v300 = vsub.s32 2, %v299
      %v301 = vrot.slane %v168, %v300
      %303 = vbcast.lane.b32.xlu0 %v301, 256
      %v304 = vpop.permute.xlu0 %303
      %s306 = sor.u32 256, 8
      %307 = vbcast.lane.b32.xlu0 %v301, %s306
      %v308 = vpop.permute.xlu0 %307
      %v309 = vlaneseq
      %v310 = vshrl.u32 %v309, 7
      %v311 = vsub.s32 3, %v310
      %v312 = vrot.slane %v168, %v311
      %314 = vbcast.lane.b32.xlu0 %v312, 256
      %v315 = vpop.permute.xlu0 %314
      %s317 = sor.u32 256, 8
      %318 = vbcast.lane.b32.xlu0 %v312, %s317
      %v319 = vpop.permute.xlu0 %318
      %v320 = vlaneseq
      %v321 = vshrl.u32 %v320, 7
      %v322 = vsub.s32 4, %v321
      %v323 = vrot.slane %v168, %v322
      %325 = vbcast.lane.b32.xlu0 %v323, 256
      %v326 = vpop.permute.xlu0 %325
      %s328 = sor.u32 256, 8
      %329 = vbcast.lane.b32.xlu0 %v323, %s328
      %v330 = vpop.permute.xlu0 %329
      %v331 = vlaneseq
      %v332 = vshrl.u32 %v331, 7
      %v333 = vsub.s32 5, %v332
      %v334 = vrot.slane %v168, %v333
      %336 = vbcast.lane.b32.xlu0 %v334, 256
      %v337 = vpop.permute.xlu0 %336
      %s339 = sor.u32 256, 8
      %340 = vbcast.lane.b32.xlu0 %v334, %s339
      %v341 = vpop.permute.xlu0 %340
      %v342 = vlaneseq
      %v343 = vshrl.u32 %v342, 7
      %v344 = vsub.s32 6, %v343
      %v345 = vrot.slane %v168, %v344
      %347 = vbcast.lane.b32.xlu0 %v345, 256
      %v348 = vpop.permute.xlu0 %347
      %s350 = sor.u32 256, 8
      %351 = vbcast.lane.b32.xlu0 %v345, %s350
      %v352 = vpop.permute.xlu0 %351
      %v353 = vlaneseq
      %v354 = vshrl.u32 %v353, 7
      %v355 = vsub.s32 7, %v354
      %v356 = vrot.slane %v168, %v355
      %358 = vbcast.lane.b32.xlu0 %v356, 256
      %v359 = vpop.permute.xlu0 %358
      %s361 = sor.u32 256, 8
      %362 = vbcast.lane.b32.xlu0 %v356, %s361
      %v363 = vpop.permute.xlu0 %362
      %v364 = vlaneseq
      %v365 = vshrl.u32 %v364, 7
      %v366 = vsub.s32 0, %v365
      %v367 = vrot.slane %v169, %v366
      %369 = vbcast.lane.b32.xlu0 %v367, 256
      %v370 = vpop.permute.xlu0 %369
      %v371 = vlaneseq
      %v372 = vshrl.u32 %v371, 7
      %v373 = vsub.s32 1, %v372
      %v374 = vrot.slane %v169, %v373
      %376 = vbcast.lane.b32.xlu0 %v374, 256
      %v377 = vpop.permute.xlu0 %376
      %v378 = vlaneseq
      %v379 = vshrl.u32 %v378, 7
      %v380 = vsub.s32 0, %v379
      %v381 = vrot.slane %v170, %v380
      %383 = vbcast.lane.b32.xlu0 %v381, 256
      %v384 = vpop.permute.xlu0 %383
      %s386 = sor.u32 256, 8
      %387 = vbcast.lane.b32.xlu0 %v381, %s386
      %v388 = vpop.permute.xlu0 %387
      %v389 = vlaneseq
      %v390 = vshrl.u32 %v389, 7
      %v391 = vsub.s32 1, %v390
      %v392 = vrot.slane %v170, %v391
      %394 = vbcast.lane.b32.xlu0 %v392, 256
      %v395 = vpop.permute.xlu0 %394
      %s397 = sor.u32 256, 8
      %398 = vbcast.lane.b32.xlu0 %v392, %s397
      %v399 = vpop.permute.xlu0 %398
      %v400 = vlaneseq
      %v401 = vshrl.u32 %v400, 7
      %v402 = vsub.s32 2, %v401
      %v403 = vrot.slane %v170, %v402
      %405 = vbcast.lane.b32.xlu0 %v403, 256
      %v406 = vpop.permute.xlu0 %405
      %s408 = sor.u32 256, 8
      %409 = vbcast.lane.b32.xlu0 %v403, %s408
      %v410 = vpop.permute.xlu0 %409
      %v411 = vlaneseq
      %v412 = vshrl.u32 %v411, 7
      %v413 = vsub.s32 3, %v412
      %v414 = vrot.slane %v170, %v413
      %416 = vbcast.lane.b32.xlu0 %v414, 256
      %v417 = vpop.permute.xlu0 %416
      %s419 = sor.u32 256, 8
      %420 = vbcast.lane.b32.xlu0 %v414, %s419
      %v421 = vpop.permute.xlu0 %420
      %v422 = vlaneseq
      %v423 = vshrl.u32 %v422, 7
      %v424 = vsub.s32 4, %v423
      %v425 = vrot.slane %v170, %v424
      %427 = vbcast.lane.b32.xlu0 %v425, 256
      %v428 = vpop.permute.xlu0 %427
      %s430 = sor.u32 256, 8
      %431 = vbcast.lane.b32.xlu0 %v425, %s430
      %v432 = vpop.permute.xlu0 %431
      %v433 = vlaneseq
      %v434 = vshrl.u32 %v433, 7
      %v435 = vsub.s32 5, %v434
      %v436 = vrot.slane %v170, %v435
      %438 = vbcast.lane.b32.xlu0 %v436, 256
      %v439 = vpop.permute.xlu0 %438
      %s441 = sor.u32 256, 8
      %442 = vbcast.lane.b32.xlu0 %v436, %s441
      %v443 = vpop.permute.xlu0 %442
      %v444 = vlaneseq
      %v445 = vshrl.u32 %v444, 7
      %v446 = vsub.s32 6, %v445
      %v447 = vrot.slane %v170, %v446
      %449 = vbcast.lane.b32.xlu0 %v447, 256
      %v450 = vpop.permute.xlu0 %449
      %s452 = sor.u32 256, 8
      %453 = vbcast.lane.b32.xlu0 %v447, %s452
      %v454 = vpop.permute.xlu0 %453
      %v455 = vlaneseq
      %v456 = vshrl.u32 %v455, 7
      %v457 = vsub.s32 7, %v456
      %v458 = vrot.slane %v170, %v457
      %460 = vbcast.lane.b32.xlu0 %v458, 256
      %v461 = vpop.permute.xlu0 %460
      %s463 = sor.u32 256, 8
      %464 = vbcast.lane.b32.xlu0 %v458, %s463
      %v465 = vpop.permute.xlu0 %464
      %v466 = vlaneseq
      %v467 = vshrl.u32 %v466, 7
      %v468 = vsub.s32 0, %v467
      %v469 = vrot.slane %v171, %v468
      %471 = vbcast.lane.b32.xlu0 %v469, 256
      %v472 = vpop.permute.xlu0 %471
      %v473 = vlaneseq
      %v474 = vshrl.u32 %v473, 7
      %v475 = vsub.s32 1, %v474
      %v476 = vrot.slane %v171, %v475
      %478 = vbcast.lane.b32.xlu0 %v476, 256
      %v479 = vpop.permute.xlu0 %478
      %v480 = vlaneseq
      %v481 = vshrl.u32 %v480, 7
      %v482 = vsub.s32 0, %v481
      %v483 = vrot.slane %v172, %v482
      %485 = vbcast.lane.b32.xlu0 %v483, 256
      %v486 = vpop.permute.xlu0 %485
      %s488 = sor.u32 256, 8
      %489 = vbcast.lane.b32.xlu0 %v483, %s488
      %v490 = vpop.permute.xlu0 %489
      %v491 = vlaneseq
      %v492 = vshrl.u32 %v491, 7
      %v493 = vsub.s32 1, %v492
      %v494 = vrot.slane %v172, %v493
      %496 = vbcast.lane.b32.xlu0 %v494, 256
      %v497 = vpop.permute.xlu0 %496
      %s499 = sor.u32 256, 8
      %500 = vbcast.lane.b32.xlu0 %v494, %s499
      %v501 = vpop.permute.xlu0 %500
      %v502 = vlaneseq
      %v503 = vshrl.u32 %v502, 7
      %v504 = vsub.s32 2, %v503
      %v505 = vrot.slane %v172, %v504
      %507 = vbcast.lane.b32.xlu0 %v505, 256
      %v508 = vpop.permute.xlu0 %507
      %s510 = sor.u32 256, 8
      %511 = vbcast.lane.b32.xlu0 %v505, %s510
      %v512 = vpop.permute.xlu0 %511
      %v513 = vlaneseq
      %v514 = vshrl.u32 %v513, 7
      %v515 = vsub.s32 3, %v514
      %v516 = vrot.slane %v172, %v515
      %518 = vbcast.lane.b32.xlu0 %v516, 256
      %v519 = vpop.permute.xlu0 %518
      %s521 = sor.u32 256, 8
      %522 = vbcast.lane.b32.xlu0 %v516, %s521
      %v523 = vpop.permute.xlu0 %522
      %v524 = vlaneseq
      %v525 = vshrl.u32 %v524, 7
      %v526 = vsub.s32 4, %v525
      %v527 = vrot.slane %v172, %v526
      %529 = vbcast.lane.b32.xlu0 %v527, 256
      %v530 = vpop.permute.xlu0 %529
      %s532 = sor.u32 256, 8
      %533 = vbcast.lane.b32.xlu0 %v527, %s532
      %v534 = vpop.permute.xlu0 %533
      %v535 = vlaneseq
      %v536 = vshrl.u32 %v535, 7
      %v537 = vsub.s32 5, %v536
      %v538 = vrot.slane %v172, %v537
      %540 = vbcast.lane.b32.xlu0 %v538, 256
      %v541 = vpop.permute.xlu0 %540
      %s543 = sor.u32 256, 8
      %544 = vbcast.lane.b32.xlu0 %v538, %s543
      %v545 = vpop.permute.xlu0 %544
      %v546 = vlaneseq
      %v547 = vshrl.u32 %v546, 7
      %v548 = vsub.s32 6, %v547
      %v549 = vrot.slane %v172, %v548
      %551 = vbcast.lane.b32.xlu0 %v549, 256
      %v552 = vpop.permute.xlu0 %551
      %s554 = sor.u32 256, 8
      %555 = vbcast.lane.b32.xlu0 %v549, %s554
      %v556 = vpop.permute.xlu0 %555
      %v557 = vlaneseq
      %v558 = vshrl.u32 %v557, 7
      %v559 = vsub.s32 7, %v558
      %v560 = vrot.slane %v172, %v559
      %562 = vbcast.lane.b32.xlu0 %v560, 256
      %v563 = vpop.permute.xlu0 %562
      %s565 = sor.u32 256, 8
      %566 = vbcast.lane.b32.xlu0 %v560, %s565
      %v567 = vpop.permute.xlu0 %566
      %v568 = vlaneseq
      %v569 = vshrl.u32 %v568, 7
      %v570 = vsub.s32 0, %v569
      %v571 = vrot.slane %v173, %v570
      %573 = vbcast.lane.b32.xlu0 %v571, 256
      %v574 = vpop.permute.xlu0 %573
      %v575 = vlaneseq
      %v576 = vshrl.u32 %v575, 7
      %v577 = vsub.s32 1, %v576
      %v578 = vrot.slane %v173, %v577
      %580 = vbcast.lane.b32.xlu0 %v578, 256
      %v581 = vpop.permute.xlu0 %580
      %v582 = vcombine.low %v180, %v202
      %v583 = vcombine.high %v180, %v202
      %v585 = vunpack.c.l.s4 1983009808
      %v586 = vunpack.c.0.s8 %v585
      %v587 = vlaneseq
      %v588 = vshrl.u32 %v587, 7
      %v589 = vsub.s32 %v586, %v588
      %v590 = vrot.slane %v582, %v589
      %v592 = vunpack.c.l.s4 1983009808
      %v593 = vunpack.c.0.s8 %v592
      %v594 = vlaneseq
      %v595 = vshrl.u32 %v594, 7
      %v596 = vsub.s32 %v593, %v595
      %v597 = vrot.slane %v583, %v596
      %v598 = vcombine.low %v191, %v213
      %v599 = vcombine.high %v191, %v213
      %v601 = vunpack.c.l.s4 1983009808
      %v602 = vunpack.c.0.s8 %v601
      %v603 = vlaneseq
      %v604 = vshrl.u32 %v603, 7
      %v605 = vsub.s32 %v602, %v604
      %v606 = vrot.slane %v598, %v605
      %v608 = vunpack.c.l.s4 1983009808
      %v609 = vunpack.c.0.s8 %v608
      %v610 = vlaneseq
      %v611 = vshrl.u32 %v610, 7
      %v612 = vsub.s32 %v609, %v611
      %v613 = vrot.slane %v599, %v612
      %v614 = vcombine.low %v224, %v246
      %v615 = vcombine.high %v224, %v246
      %v617 = vunpack.c.l.s4 1983009808
      %v618 = vunpack.c.0.s8 %v617
      %v619 = vlaneseq
      %v620 = vshrl.u32 %v619, 7
      %v621 = vsub.s32 %v618, %v620
      %v622 = vrot.slane %v614, %v621
      %v624 = vunpack.c.l.s4 1983009808
      %v625 = vunpack.c.0.s8 %v624
      %v626 = vlaneseq
      %v627 = vshrl.u32 %v626, 7
      %v628 = vsub.s32 %v625, %v627
      %v629 = vrot.slane %v615, %v628
      %v630 = vcombine.low %v235, %v257
      %v631 = vcombine.high %v235, %v257
      %v633 = vunpack.c.l.s4 1983009808
      %v634 = vunpack.c.0.s8 %v633
      %v635 = vlaneseq
      %v636 = vshrl.u32 %v635, 7
      %v637 = vsub.s32 %v634, %v636
      %v638 = vrot.slane %v630, %v637
      %v640 = vunpack.c.l.s4 1983009808
      %v641 = vunpack.c.0.s8 %v640
      %v642 = vlaneseq
      %v643 = vshrl.u32 %v642, 7
      %v644 = vsub.s32 %v641, %v643
      %v645 = vrot.slane %v631, %v644
      %v646 = vcombine.low %v590, %v606
      %v647 = vcombine.high %v590, %v606
      %v649 = vunpack.c.l.s4 1934713408
      %v650 = vunpack.c.0.s8 %v649
      %v651 = vlaneseq
      %v652 = vshrl.u32 %v651, 7
      %v653 = vsub.s32 %v650, %v652
      %v654 = vrot.slane %v646, %v653
      %v656 = vunpack.c.l.s4 1934713408
      %v657 = vunpack.c.0.s8 %v656
      %v658 = vlaneseq
      %v659 = vshrl.u32 %v658, 7
      %v660 = vsub.s32 %v657, %v659
      %v661 = vrot.slane %v647, %v660
      %v662 = vcombine.low %v597, %v613
      %v663 = vcombine.high %v597, %v613
      %v665 = vunpack.c.l.s4 1934713408
      %v666 = vunpack.c.0.s8 %v665
      %v667 = vlaneseq
      %v668 = vshrl.u32 %v667, 7
      %v669 = vsub.s32 %v666, %v668
      %v670 = vrot.slane %v662, %v669
      %v672 = vunpack.c.l.s4 1934713408
      %v673 = vunpack.c.0.s8 %v672
      %v674 = vlaneseq
      %v675 = vshrl.u32 %v674, 7
      %v676 = vsub.s32 %v673, %v675
      %v677 = vrot.slane %v663, %v676
      %v678 = vcombine.low %v622, %v638
      %v679 = vcombine.high %v622, %v638
      %v681 = vunpack.c.l.s4 1934713408
      %v682 = vunpack.c.0.s8 %v681
      %v683 = vlaneseq
      %v684 = vshrl.u32 %v683, 7
      %v685 = vsub.s32 %v682, %v684
      %v686 = vrot.slane %v678, %v685
      %v688 = vunpack.c.l.s4 1934713408
      %v689 = vunpack.c.0.s8 %v688
      %v690 = vlaneseq
      %v691 = vshrl.u32 %v690, 7
      %v692 = vsub.s32 %v689, %v691
      %v693 = vrot.slane %v679, %v692
      %v694 = vcombine.low %v629, %v645
      %v695 = vcombine.high %v629, %v645
      %v697 = vunpack.c.l.s4 1934713408
      %v698 = vunpack.c.0.s8 %v697
      %v699 = vlaneseq
      %v700 = vshrl.u32 %v699, 7
      %v701 = vsub.s32 %v698, %v700
      %v702 = vrot.slane %v694, %v701
      %v704 = vunpack.c.l.s4 1934713408
      %v705 = vunpack.c.0.s8 %v704
      %v706 = vlaneseq
      %v707 = vshrl.u32 %v706, 7
      %v708 = vsub.s32 %v705, %v707
      %v709 = vrot.slane %v695, %v708
      %v710 = vcombine.low %v654, %v686
      %v711 = vcombine.high %v654, %v686
      %v712 = vcombine.low %v661, %v693
      %v713 = vcombine.high %v661, %v693
      %v714 = vcombine.low %v670, %v702
      %v715 = vcombine.high %v670, %v702
      %v716 = vcombine.low %v677, %v709
      %v717 = vcombine.high %v677, %v709
      %v718 = vcombine.high %v268, 0.0
      %v720 = vunpack.c.l.s4 1983009808
      %v721 = vunpack.c.0.s8 %v720
      %v722 = vlaneseq
      %v723 = vshrl.u32 %v722, 7
      %v724 = vsub.s32 %v721, %v723
      %v725 = vrot.slane %v268, %v724
      %v727 = vunpack.c.l.s4 1983009808
      %v728 = vunpack.c.0.s8 %v727
      %v729 = vlaneseq
      %v730 = vshrl.u32 %v729, 7
      %v731 = vsub.s32 %v728, %v730
      %v732 = vrot.slane %v718, %v731
      %v733 = vcombine.high %v275, 0.0
      %v735 = vunpack.c.l.s4 1983009808
      %v736 = vunpack.c.0.s8 %v735
      %v737 = vlaneseq
      %v738 = vshrl.u32 %v737, 7
      %v739 = vsub.s32 %v736, %v738
      %v740 = vrot.slane %v275, %v739
      %v742 = vunpack.c.l.s4 1983009808
      %v743 = vunpack.c.0.s8 %v742
      %v744 = vlaneseq
      %v745 = vshrl.u32 %v744, 7
      %v746 = vsub.s32 %v743, %v745
      %v747 = vrot.slane %v733, %v746
      %v748 = vcombine.low %v725, %v740
      %v749 = vcombine.high %v725, %v740
      %v751 = vunpack.c.l.s4 1934713408
      %v752 = vunpack.c.0.s8 %v751
      %v753 = vlaneseq
      %v754 = vshrl.u32 %v753, 7
      %v755 = vsub.s32 %v752, %v754
      %v756 = vrot.slane %v748, %v755
      %v758 = vunpack.c.l.s4 1934713408
      %v759 = vunpack.c.0.s8 %v758
      %v760 = vlaneseq
      %v761 = vshrl.u32 %v760, 7
      %v762 = vsub.s32 %v759, %v761
      %v763 = vrot.slane %v749, %v762
      %v764 = vcombine.low %v732, %v747
      %v765 = vcombine.high %v732, %v747
      %v767 = vunpack.c.l.s4 1934713408
      %v768 = vunpack.c.0.s8 %v767
      %v769 = vlaneseq
      %v770 = vshrl.u32 %v769, 7
      %v771 = vsub.s32 %v768, %v770
      %v772 = vrot.slane %v764, %v771
      %v774 = vunpack.c.l.s4 1934713408
      %v775 = vunpack.c.0.s8 %v774
      %v776 = vlaneseq
      %v777 = vshrl.u32 %v776, 7
      %v778 = vsub.s32 %v775, %v777
      %v779 = vrot.slane %v765, %v778
      %v780 = vcombine.high %v756, 0.0
      %v781 = vcombine.high %v763, 0.0
      %v782 = vcombine.high %v772, 0.0
      %v783 = vcombine.high %v779, 0.0
      %v784 = vcombine.low %v184, %v206
      %v786 = vunpack.c.l.s4 1983009808
      %v787 = vunpack.c.0.s8 %v786
      %v788 = vlaneseq
      %v789 = vshrl.u32 %v788, 7
      %v790 = vsub.s32 %v787, %v789
      %v791 = vrot.slane %v784, %v790
      %v792 = vcombine.low %v195, %v217
      %v794 = vunpack.c.l.s4 1983009808
      %v795 = vunpack.c.0.s8 %v794
      %v796 = vlaneseq
      %v797 = vshrl.u32 %v796, 7
      %v798 = vsub.s32 %v795, %v797
      %v799 = vrot.slane %v792, %v798
      %v800 = vcombine.low %v228, %v250
      %v802 = vunpack.c.l.s4 1983009808
      %v803 = vunpack.c.0.s8 %v802
      %v804 = vlaneseq
      %v805 = vshrl.u32 %v804, 7
      %v806 = vsub.s32 %v803, %v805
      %v807 = vrot.slane %v800, %v806
      %v808 = vcombine.low %v239, %v261
      %v810 = vunpack.c.l.s4 1983009808
      %v811 = vunpack.c.0.s8 %v810
      %v812 = vlaneseq
      %v813 = vshrl.u32 %v812, 7
      %v814 = vsub.s32 %v811, %v813
      %v815 = vrot.slane %v808, %v814
      %v816 = vcombine.low %v791, %v799
      %v818 = vunpack.c.l.s4 1934713408
      %v819 = vunpack.c.0.s8 %v818
      %v820 = vlaneseq
      %v821 = vshrl.u32 %v820, 7
      %v822 = vsub.s32 %v819, %v821
      %v823 = vrot.slane %v816, %v822
      %v824 = vcombine.low %v807, %v815
      %v826 = vunpack.c.l.s4 1934713408
      %v827 = vunpack.c.0.s8 %v826
      %v828 = vlaneseq
      %v829 = vshrl.u32 %v828, 7
      %v830 = vsub.s32 %v827, %v829
      %v831 = vrot.slane %v824, %v830
      %v832 = vcombine.low %v823, %v831
      %v833 = vcombine.high %v823, %v831
      %s835 = sor.u32 256, 8
      %836 = vbcast.lane.b32.xlu0 %v265, %s835
      %v837 = vpop.permute.xlu0 %836
      %s839 = sor.u32 256, 8
      %840 = vbcast.lane.b32.xlu0 %v272, %s839
      %v841 = vpop.permute.xlu0 %840
      %v842 = vcombine.low %v837, %v841
      %v844 = vunpack.c.l.s4 1934713408
      %v845 = vunpack.c.0.s8 %v844
      %v846 = vlaneseq
      %v847 = vshrl.u32 %v846, 7
      %v848 = vsub.s32 %v845, %v847
      %v849 = vrot.slane %v842, %v848
      %v850 = vcombine.high %v849, 0.0
      %v851 = vcombine.low %v282, %v304
      %v852 = vcombine.high %v282, %v304
      %v854 = vunpack.c.l.s4 1983009808
      %v855 = vunpack.c.0.s8 %v854
      %v856 = vlaneseq
      %v857 = vshrl.u32 %v856, 7
      %v858 = vsub.s32 %v855, %v857
      %v859 = vrot.slane %v851, %v858
      %v861 = vunpack.c.l.s4 1983009808
      %v862 = vunpack.c.0.s8 %v861
      %v863 = vlaneseq
      %v864 = vshrl.u32 %v863, 7
      %v865 = vsub.s32 %v862, %v864
      %v866 = vrot.slane %v852, %v865
      %v867 = vcombine.low %v293, %v315
      %v868 = vcombine.high %v293, %v315
      %v870 = vunpack.c.l.s4 1983009808
      %v871 = vunpack.c.0.s8 %v870
      %v872 = vlaneseq
      %v873 = vshrl.u32 %v872, 7
      %v874 = vsub.s32 %v871, %v873
      %v875 = vrot.slane %v867, %v874
      %v877 = vunpack.c.l.s4 1983009808
      %v878 = vunpack.c.0.s8 %v877
      %v879 = vlaneseq
      %v880 = vshrl.u32 %v879, 7
      %v881 = vsub.s32 %v878, %v880
      %v882 = vrot.slane %v868, %v881
      %v883 = vcombine.low %v326, %v348
      %v884 = vcombine.high %v326, %v348
      %v886 = vunpack.c.l.s4 1983009808
      %v887 = vunpack.c.0.s8 %v886
      %v888 = vlaneseq
      %v889 = vshrl.u32 %v888, 7
      %v890 = vsub.s32 %v887, %v889
      %v891 = vrot.slane %v883, %v890
      %v893 = vunpack.c.l.s4 1983009808
      %v894 = vunpack.c.0.s8 %v893
      %v895 = vlaneseq
      %v896 = vshrl.u32 %v895, 7
      %v897 = vsub.s32 %v894, %v896
      %v898 = vrot.slane %v884, %v897
      %v899 = vcombine.low %v337, %v359
      %v900 = vcombine.high %v337, %v359
      %v902 = vunpack.c.l.s4 1983009808
      %v903 = vunpack.c.0.s8 %v902
      %v904 = vlaneseq
      %v905 = vshrl.u32 %v904, 7
      %v906 = vsub.s32 %v903, %v905
      %v907 = vrot.slane %v899, %v906
      %v909 = vunpack.c.l.s4 1983009808
      %v910 = vunpack.c.0.s8 %v909
      %v911 = vlaneseq
      %v912 = vshrl.u32 %v911, 7
      %v913 = vsub.s32 %v910, %v912
      %v914 = vrot.slane %v900, %v913
      %v915 = vcombine.low %v859, %v875
      %v916 = vcombine.high %v859, %v875
      %v918 = vunpack.c.l.s4 1934713408
      %v919 = vunpack.c.0.s8 %v918
      %v920 = vlaneseq
      %v921 = vshrl.u32 %v920, 7
      %v922 = vsub.s32 %v919, %v921
      %v923 = vrot.slane %v915, %v922
      %v925 = vunpack.c.l.s4 1934713408
      %v926 = vunpack.c.0.s8 %v925
      %v927 = vlaneseq
      %v928 = vshrl.u32 %v927, 7
      %v929 = vsub.s32 %v926, %v928
      %v930 = vrot.slane %v916, %v929
      %v931 = vcombine.low %v866, %v882
      %v932 = vcombine.high %v866, %v882
      %v934 = vunpack.c.l.s4 1934713408
      %v935 = vunpack.c.0.s8 %v934
      %v936 = vlaneseq
      %v937 = vshrl.u32 %v936, 7
      %v938 = vsub.s32 %v935, %v937
      %v939 = vrot.slane %v931, %v938
      %v941 = vunpack.c.l.s4 1934713408
      %v942 = vunpack.c.0.s8 %v941
      %v943 = vlaneseq
      %v944 = vshrl.u32 %v943, 7
      %v945 = vsub.s32 %v942, %v944
      %v946 = vrot.slane %v932, %v945
      %v947 = vcombine.low %v891, %v907
      %v948 = vcombine.high %v891, %v907
      %v950 = vunpack.c.l.s4 1934713408
      %v951 = vunpack.c.0.s8 %v950
      %v952 = vlaneseq
      %v953 = vshrl.u32 %v952, 7
      %v954 = vsub.s32 %v951, %v953
      %v955 = vrot.slane %v947, %v954
      %v957 = vunpack.c.l.s4 1934713408
      %v958 = vunpack.c.0.s8 %v957
      %v959 = vlaneseq
      %v960 = vshrl.u32 %v959, 7
      %v961 = vsub.s32 %v958, %v960
      %v962 = vrot.slane %v948, %v961
      %v963 = vcombine.low %v898, %v914
      %v964 = vcombine.high %v898, %v914
      %v966 = vunpack.c.l.s4 1934713408
      %v967 = vunpack.c.0.s8 %v966
      %v968 = vlaneseq
      %v969 = vshrl.u32 %v968, 7
      %v970 = vsub.s32 %v967, %v969
      %v971 = vrot.slane %v963, %v970
      %v973 = vunpack.c.l.s4 1934713408
      %v974 = vunpack.c.0.s8 %v973
      %v975 = vlaneseq
      %v976 = vshrl.u32 %v975, 7
      %v977 = vsub.s32 %v974, %v976
      %v978 = vrot.slane %v964, %v977
      %v979 = vcombine.low %v923, %v955
      %v980 = vcombine.high %v923, %v955
      %v981 = vcombine.low %v930, %v962
      %v982 = vcombine.high %v930, %v962
      %v983 = vcombine.low %v939, %v971
      %v984 = vcombine.high %v939, %v971
      %v985 = vcombine.low %v946, %v978
      %v986 = vcombine.high %v946, %v978
      %v987 = vcombine.high %v370, 0.0
      %v989 = vunpack.c.l.s4 1983009808
      %v990 = vunpack.c.0.s8 %v989
      %v991 = vlaneseq
      %v992 = vshrl.u32 %v991, 7
      %v993 = vsub.s32 %v990, %v992
      %v994 = vrot.slane %v370, %v993
      %v996 = vunpack.c.l.s4 1983009808
      %v997 = vunpack.c.0.s8 %v996
      %v998 = vlaneseq
      %v999 = vshrl.u32 %v998, 7
      %v1000 = vsub.s32 %v997, %v999
      %v1001 = vrot.slane %v987, %v1000
      %v1002 = vcombine.high %v377, 0.0
      %v1004 = vunpack.c.l.s4 1983009808
      %v1005 = vunpack.c.0.s8 %v1004
      %v1006 = vlaneseq
      %v1007 = vshrl.u32 %v1006, 7
      %v1008 = vsub.s32 %v1005, %v1007
      %v1009 = vrot.slane %v377, %v1008
      %v1011 = vunpack.c.l.s4 1983009808
      %v1012 = vunpack.c.0.s8 %v1011
      %v1013 = vlaneseq
      %v1014 = vshrl.u32 %v1013, 7
      %v1015 = vsub.s32 %v1012, %v1014
      %v1016 = vrot.slane %v1002, %v1015
      %v1017 = vcombine.low %v994, %v1009
      %v1018 = vcombine.high %v994, %v1009
      %v1020 = vunpack.c.l.s4 1934713408
      %v1021 = vunpack.c.0.s8 %v1020
      %v1022 = vlaneseq
      %v1023 = vshrl.u32 %v1022, 7
      %v1024 = vsub.s32 %v1021, %v1023
      %v1025 = vrot.slane %v1017, %v1024
      %v1027 = vunpack.c.l.s4 1934713408
      %v1028 = vunpack.c.0.s8 %v1027
      %v1029 = vlaneseq
      %v1030 = vshrl.u32 %v1029, 7
      %v1031 = vsub.s32 %v1028, %v1030
      %v1032 = vrot.slane %v1018, %v1031
      %v1033 = vcombine.low %v1001, %v1016
      %v1034 = vcombine.high %v1001, %v1016
      %v1036 = vunpack.c.l.s4 1934713408
      %v1037 = vunpack.c.0.s8 %v1036
      %v1038 = vlaneseq
      %v1039 = vshrl.u32 %v1038, 7
      %v1040 = vsub.s32 %v1037, %v1039
      %v1041 = vrot.slane %v1033, %v1040
      %v1043 = vunpack.c.l.s4 1934713408
      %v1044 = vunpack.c.0.s8 %v1043
      %v1045 = vlaneseq
      %v1046 = vshrl.u32 %v1045, 7
      %v1047 = vsub.s32 %v1044, %v1046
      %v1048 = vrot.slane %v1034, %v1047
      %v1049 = vcombine.high %v1025, 0.0
      %v1050 = vcombine.high %v1032, 0.0
      %v1051 = vcombine.high %v1041, 0.0
      %v1052 = vcombine.high %v1048, 0.0
      %v1053 = vcombine.low %v286, %v308
      %v1055 = vunpack.c.l.s4 1983009808
      %v1056 = vunpack.c.0.s8 %v1055
      %v1057 = vlaneseq
      %v1058 = vshrl.u32 %v1057, 7
      %v1059 = vsub.s32 %v1056, %v1058
      %v1060 = vrot.slane %v1053, %v1059
      %v1061 = vcombine.low %v297, %v319
      %v1063 = vunpack.c.l.s4 1983009808
      %v1064 = vunpack.c.0.s8 %v1063
      %v1065 = vlaneseq
      %v1066 = vshrl.u32 %v1065, 7
      %v1067 = vsub.s32 %v1064, %v1066
      %v1068 = vrot.slane %v1061, %v1067
      %v1069 = vcombine.low %v330, %v352
      %v1071 = vunpack.c.l.s4 1983009808
      %v1072 = vunpack.c.0.s8 %v1071
      %v1073 = vlaneseq
      %v1074 = vshrl.u32 %v1073, 7
      %v1075 = vsub.s32 %v1072, %v1074
      %v1076 = vrot.slane %v1069, %v1075
      %v1077 = vcombine.low %v341, %v363
      %v1079 = vunpack.c.l.s4 1983009808
      %v1080 = vunpack.c.0.s8 %v1079
      %v1081 = vlaneseq
      %v1082 = vshrl.u32 %v1081, 7
      %v1083 = vsub.s32 %v1080, %v1082
      %v1084 = vrot.slane %v1077, %v1083
      %v1085 = vcombine.low %v1060, %v1068
      %v1087 = vunpack.c.l.s4 1934713408
      %v1088 = vunpack.c.0.s8 %v1087
      %v1089 = vlaneseq
      %v1090 = vshrl.u32 %v1089, 7
      %v1091 = vsub.s32 %v1088, %v1090
      %v1092 = vrot.slane %v1085, %v1091
      %v1093 = vcombine.low %v1076, %v1084
      %v1095 = vunpack.c.l.s4 1934713408
      %v1096 = vunpack.c.0.s8 %v1095
      %v1097 = vlaneseq
      %v1098 = vshrl.u32 %v1097, 7
      %v1099 = vsub.s32 %v1096, %v1098
      %v1100 = vrot.slane %v1093, %v1099
      %v1101 = vcombine.low %v1092, %v1100
      %v1102 = vcombine.high %v1092, %v1100
      %s1104 = sor.u32 256, 8
      %1105 = vbcast.lane.b32.xlu0 %v367, %s1104
      %v1106 = vpop.permute.xlu0 %1105
      %s1108 = sor.u32 256, 8
      %1109 = vbcast.lane.b32.xlu0 %v374, %s1108
      %v1110 = vpop.permute.xlu0 %1109
      %v1111 = vcombine.low %v1106, %v1110
      %v1113 = vunpack.c.l.s4 1934713408
      %v1114 = vunpack.c.0.s8 %v1113
      %v1115 = vlaneseq
      %v1116 = vshrl.u32 %v1115, 7
      %v1117 = vsub.s32 %v1114, %v1116
      %v1118 = vrot.slane %v1111, %v1117
      %v1119 = vcombine.high %v1118, 0.0
      %v1120 = vcombine.low %v384, %v406
      %v1121 = vcombine.high %v384, %v406
      %v1123 = vunpack.c.l.s4 1983009808
      %v1124 = vunpack.c.0.s8 %v1123
      %v1125 = vlaneseq
      %v1126 = vshrl.u32 %v1125, 7
      %v1127 = vsub.s32 %v1124, %v1126
      %v1128 = vrot.slane %v1120, %v1127
      %v1130 = vunpack.c.l.s4 1983009808
      %v1131 = vunpack.c.0.s8 %v1130
      %v1132 = vlaneseq
      %v1133 = vshrl.u32 %v1132, 7
      %v1134 = vsub.s32 %v1131, %v1133
      %v1135 = vrot.slane %v1121, %v1134
      %v1136 = vcombine.low %v395, %v417
      %v1137 = vcombine.high %v395, %v417
      %v1139 = vunpack.c.l.s4 1983009808
      %v1140 = vunpack.c.0.s8 %v1139
      %v1141 = vlaneseq
      %v1142 = vshrl.u32 %v1141, 7
      %v1143 = vsub.s32 %v1140, %v1142
      %v1144 = vrot.slane %v1136, %v1143
      %v1146 = vunpack.c.l.s4 1983009808
      %v1147 = vunpack.c.0.s8 %v1146
      %v1148 = vlaneseq
      %v1149 = vshrl.u32 %v1148, 7
      %v1150 = vsub.s32 %v1147, %v1149
      %v1151 = vrot.slane %v1137, %v1150
      %v1152 = vcombine.low %v428, %v450
      %v1153 = vcombine.high %v428, %v450
      %v1155 = vunpack.c.l.s4 1983009808
      %v1156 = vunpack.c.0.s8 %v1155
      %v1157 = vlaneseq
      %v1158 = vshrl.u32 %v1157, 7
      %v1159 = vsub.s32 %v1156, %v1158
      %v1160 = vrot.slane %v1152, %v1159
      %v1162 = vunpack.c.l.s4 1983009808
      %v1163 = vunpack.c.0.s8 %v1162
      %v1164 = vlaneseq
      %v1165 = vshrl.u32 %v1164, 7
      %v1166 = vsub.s32 %v1163, %v1165
      %v1167 = vrot.slane %v1153, %v1166
      %v1168 = vcombine.low %v439, %v461
      %v1169 = vcombine.high %v439, %v461
      %v1171 = vunpack.c.l.s4 1983009808
      %v1172 = vunpack.c.0.s8 %v1171
      %v1173 = vlaneseq
      %v1174 = vshrl.u32 %v1173, 7
      %v1175 = vsub.s32 %v1172, %v1174
      %v1176 = vrot.slane %v1168, %v1175
      %v1178 = vunpack.c.l.s4 1983009808
      %v1179 = vunpack.c.0.s8 %v1178
      %v1180 = vlaneseq
      %v1181 = vshrl.u32 %v1180, 7
      %v1182 = vsub.s32 %v1179, %v1181
      %v1183 = vrot.slane %v1169, %v1182
      %v1184 = vcombine.low %v1128, %v1144
      %v1185 = vcombine.high %v1128, %v1144
      %v1187 = vunpack.c.l.s4 1934713408
      %v1188 = vunpack.c.0.s8 %v1187
      %v1189 = vlaneseq
      %v1190 = vshrl.u32 %v1189, 7
      %v1191 = vsub.s32 %v1188, %v1190
      %v1192 = vrot.slane %v1184, %v1191
      %v1194 = vunpack.c.l.s4 1934713408
      %v1195 = vunpack.c.0.s8 %v1194
      %v1196 = vlaneseq
      %v1197 = vshrl.u32 %v1196, 7
      %v1198 = vsub.s32 %v1195, %v1197
      %v1199 = vrot.slane %v1185, %v1198
      %v1200 = vcombine.low %v1135, %v1151
      %v1201 = vcombine.high %v1135, %v1151
      %v1203 = vunpack.c.l.s4 1934713408
      %v1204 = vunpack.c.0.s8 %v1203
      %v1205 = vlaneseq
      %v1206 = vshrl.u32 %v1205, 7
      %v1207 = vsub.s32 %v1204, %v1206
      %v1208 = vrot.slane %v1200, %v1207
      %v1210 = vunpack.c.l.s4 1934713408
      %v1211 = vunpack.c.0.s8 %v1210
      %v1212 = vlaneseq
      %v1213 = vshrl.u32 %v1212, 7
      %v1214 = vsub.s32 %v1211, %v1213
      %v1215 = vrot.slane %v1201, %v1214
      %v1216 = vcombine.low %v1160, %v1176
      %v1217 = vcombine.high %v1160, %v1176
      %v1219 = vunpack.c.l.s4 1934713408
      %v1220 = vunpack.c.0.s8 %v1219
      %v1221 = vlaneseq
      %v1222 = vshrl.u32 %v1221, 7
      %v1223 = vsub.s32 %v1220, %v1222
      %v1224 = vrot.slane %v1216, %v1223
      %v1226 = vunpack.c.l.s4 1934713408
      %v1227 = vunpack.c.0.s8 %v1226
      %v1228 = vlaneseq
      %v1229 = vshrl.u32 %v1228, 7
      %v1230 = vsub.s32 %v1227, %v1229
      %v1231 = vrot.slane %v1217, %v1230
      %v1232 = vcombine.low %v1167, %v1183
      %v1233 = vcombine.high %v1167, %v1183
      %v1235 = vunpack.c.l.s4 1934713408
      %v1236 = vunpack.c.0.s8 %v1235
      %v1237 = vlaneseq
      %v1238 = vshrl.u32 %v1237, 7
      %v1239 = vsub.s32 %v1236, %v1238
      %v1240 = vrot.slane %v1232, %v1239
      %v1242 = vunpack.c.l.s4 1934713408
      %v1243 = vunpack.c.0.s8 %v1242
      %v1244 = vlaneseq
      %v1245 = vshrl.u32 %v1244, 7
      %v1246 = vsub.s32 %v1243, %v1245
      %v1247 = vrot.slane %v1233, %v1246
      %v1248 = vcombine.low %v1192, %v1224
      %v1249 = vcombine.high %v1192, %v1224
      %v1250 = vcombine.low %v1199, %v1231
      %v1251 = vcombine.high %v1199, %v1231
      %v1252 = vcombine.low %v1208, %v1240
      %v1253 = vcombine.high %v1208, %v1240
      %v1254 = vcombine.low %v1215, %v1247
      %v1255 = vcombine.high %v1215, %v1247
      %v1256 = vcombine.high %v472, 0.0
      %v1258 = vunpack.c.l.s4 1983009808
      %v1259 = vunpack.c.0.s8 %v1258
      %v1260 = vlaneseq
      %v1261 = vshrl.u32 %v1260, 7
      %v1262 = vsub.s32 %v1259, %v1261
      %v1263 = vrot.slane %v472, %v1262
      %v1265 = vunpack.c.l.s4 1983009808
      %v1266 = vunpack.c.0.s8 %v1265
      %v1267 = vlaneseq
      %v1268 = vshrl.u32 %v1267, 7
      %v1269 = vsub.s32 %v1266, %v1268
      %v1270 = vrot.slane %v1256, %v1269
      %v1271 = vcombine.high %v479, 0.0
      %v1273 = vunpack.c.l.s4 1983009808
      %v1274 = vunpack.c.0.s8 %v1273
      %v1275 = vlaneseq
      %v1276 = vshrl.u32 %v1275, 7
      %v1277 = vsub.s32 %v1274, %v1276
      %v1278 = vrot.slane %v479, %v1277
      %v1280 = vunpack.c.l.s4 1983009808
      %v1281 = vunpack.c.0.s8 %v1280
      %v1282 = vlaneseq
      %v1283 = vshrl.u32 %v1282, 7
      %v1284 = vsub.s32 %v1281, %v1283
      %v1285 = vrot.slane %v1271, %v1284
      %v1286 = vcombine.low %v1263, %v1278
      %v1287 = vcombine.high %v1263, %v1278
      %v1289 = vunpack.c.l.s4 1934713408
      %v1290 = vunpack.c.0.s8 %v1289
      %v1291 = vlaneseq
      %v1292 = vshrl.u32 %v1291, 7
      %v1293 = vsub.s32 %v1290, %v1292
      %v1294 = vrot.slane %v1286, %v1293
      %v1296 = vunpack.c.l.s4 1934713408
      %v1297 = vunpack.c.0.s8 %v1296
      %v1298 = vlaneseq
      %v1299 = vshrl.u32 %v1298, 7
      %v1300 = vsub.s32 %v1297, %v1299
      %v1301 = vrot.slane %v1287, %v1300
      %v1302 = vcombine.low %v1270, %v1285
      %v1303 = vcombine.high %v1270, %v1285
      %v1305 = vunpack.c.l.s4 1934713408
      %v1306 = vunpack.c.0.s8 %v1305
      %v1307 = vlaneseq
      %v1308 = vshrl.u32 %v1307, 7
      %v1309 = vsub.s32 %v1306, %v1308
      %v1310 = vrot.slane %v1302, %v1309
      %v1312 = vunpack.c.l.s4 1934713408
      %v1313 = vunpack.c.0.s8 %v1312
      %v1314 = vlaneseq
      %v1315 = vshrl.u32 %v1314, 7
      %v1316 = vsub.s32 %v1313, %v1315
      %v1317 = vrot.slane %v1303, %v1316
      %v1318 = vcombine.high %v1294, 0.0
      %v1319 = vcombine.high %v1301, 0.0
      %v1320 = vcombine.high %v1310, 0.0
      %v1321 = vcombine.high %v1317, 0.0
      %v1322 = vcombine.low %v388, %v410
      %v1324 = vunpack.c.l.s4 1983009808
      %v1325 = vunpack.c.0.s8 %v1324
      %v1326 = vlaneseq
      %v1327 = vshrl.u32 %v1326, 7
      %v1328 = vsub.s32 %v1325, %v1327
      %v1329 = vrot.slane %v1322, %v1328
      %v1330 = vcombine.low %v399, %v421
      %v1332 = vunpack.c.l.s4 1983009808
      %v1333 = vunpack.c.0.s8 %v1332
      %v1334 = vlaneseq
      %v1335 = vshrl.u32 %v1334, 7
      %v1336 = vsub.s32 %v1333, %v1335
      %v1337 = vrot.slane %v1330, %v1336
      %v1338 = vcombine.low %v432, %v454
      %v1340 = vunpack.c.l.s4 1983009808
      %v1341 = vunpack.c.0.s8 %v1340
      %v1342 = vlaneseq
      %v1343 = vshrl.u32 %v1342, 7
      %v1344 = vsub.s32 %v1341, %v1343
      %v1345 = vrot.slane %v1338, %v1344
      %v1346 = vcombine.low %v443, %v465
      %v1348 = vunpack.c.l.s4 1983009808
      %v1349 = vunpack.c.0.s8 %v1348
      %v1350 = vlaneseq
      %v1351 = vshrl.u32 %v1350, 7
      %v1352 = vsub.s32 %v1349, %v1351
      %v1353 = vrot.slane %v1346, %v1352
      %v1354 = vcombine.low %v1329, %v1337
      %v1356 = vunpack.c.l.s4 1934713408
      %v1357 = vunpack.c.0.s8 %v1356
      %v1358 = vlaneseq
      %v1359 = vshrl.u32 %v1358, 7
      %v1360 = vsub.s32 %v1357, %v1359
      %v1361 = vrot.slane %v1354, %v1360
      %v1362 = vcombine.low %v1345, %v1353
      %v1364 = vunpack.c.l.s4 1934713408
      %v1365 = vunpack.c.0.s8 %v1364
      %v1366 = vlaneseq
      %v1367 = vshrl.u32 %v1366, 7
      %v1368 = vsub.s32 %v1365, %v1367
      %v1369 = vrot.slane %v1362, %v1368
      %v1370 = vcombine.low %v1361, %v1369
      %v1371 = vcombine.high %v1361, %v1369
      %s1373 = sor.u32 256, 8
      %1374 = vbcast.lane.b32.xlu0 %v469, %s1373
      %v1375 = vpop.permute.xlu0 %1374
      %s1377 = sor.u32 256, 8
      %1378 = vbcast.lane.b32.xlu0 %v476, %s1377
      %v1379 = vpop.permute.xlu0 %1378
      %v1380 = vcombine.low %v1375, %v1379
      %v1382 = vunpack.c.l.s4 1934713408
      %v1383 = vunpack.c.0.s8 %v1382
      %v1384 = vlaneseq
      %v1385 = vshrl.u32 %v1384, 7
      %v1386 = vsub.s32 %v1383, %v1385
      %v1387 = vrot.slane %v1380, %v1386
      %v1388 = vcombine.high %v1387, 0.0
      %v1389 = vcombine.low %v486, %v508
      %v1390 = vcombine.high %v486, %v508
      %v1392 = vunpack.c.l.s4 1983009808
      %v1393 = vunpack.c.0.s8 %v1392
      %v1394 = vlaneseq
      %v1395 = vshrl.u32 %v1394, 7
      %v1396 = vsub.s32 %v1393, %v1395
      %v1397 = vrot.slane %v1389, %v1396
      %v1399 = vunpack.c.l.s4 1983009808
      %v1400 = vunpack.c.0.s8 %v1399
      %v1401 = vlaneseq
      %v1402 = vshrl.u32 %v1401, 7
      %v1403 = vsub.s32 %v1400, %v1402
      %v1404 = vrot.slane %v1390, %v1403
      %v1405 = vcombine.low %v497, %v519
      %v1406 = vcombine.high %v497, %v519
      %v1408 = vunpack.c.l.s4 1983009808
      %v1409 = vunpack.c.0.s8 %v1408
      %v1410 = vlaneseq
      %v1411 = vshrl.u32 %v1410, 7
      %v1412 = vsub.s32 %v1409, %v1411
      %v1413 = vrot.slane %v1405, %v1412
      %v1415 = vunpack.c.l.s4 1983009808
      %v1416 = vunpack.c.0.s8 %v1415
      %v1417 = vlaneseq
      %v1418 = vshrl.u32 %v1417, 7
      %v1419 = vsub.s32 %v1416, %v1418
      %v1420 = vrot.slane %v1406, %v1419
      %v1421 = vcombine.low %v530, %v552
      %v1422 = vcombine.high %v530, %v552
      %v1424 = vunpack.c.l.s4 1983009808
      %v1425 = vunpack.c.0.s8 %v1424
      %v1426 = vlaneseq
      %v1427 = vshrl.u32 %v1426, 7
      %v1428 = vsub.s32 %v1425, %v1427
      %v1429 = vrot.slane %v1421, %v1428
      %v1431 = vunpack.c.l.s4 1983009808
      %v1432 = vunpack.c.0.s8 %v1431
      %v1433 = vlaneseq
      %v1434 = vshrl.u32 %v1433, 7
      %v1435 = vsub.s32 %v1432, %v1434
      %v1436 = vrot.slane %v1422, %v1435
      %v1437 = vcombine.low %v541, %v563
      %v1438 = vcombine.high %v541, %v563
      %v1440 = vunpack.c.l.s4 1983009808
      %v1441 = vunpack.c.0.s8 %v1440
      %v1442 = vlaneseq
      %v1443 = vshrl.u32 %v1442, 7
      %v1444 = vsub.s32 %v1441, %v1443
      %v1445 = vrot.slane %v1437, %v1444
      %v1447 = vunpack.c.l.s4 1983009808
      %v1448 = vunpack.c.0.s8 %v1447
      %v1449 = vlaneseq
      %v1450 = vshrl.u32 %v1449, 7
      %v1451 = vsub.s32 %v1448, %v1450
      %v1452 = vrot.slane %v1438, %v1451
      %v1453 = vcombine.low %v1397, %v1413
      %v1454 = vcombine.high %v1397, %v1413
      %v1456 = vunpack.c.l.s4 1934713408
      %v1457 = vunpack.c.0.s8 %v1456
      %v1458 = vlaneseq
      %v1459 = vshrl.u32 %v1458, 7
      %v1460 = vsub.s32 %v1457, %v1459
      %v1461 = vrot.slane %v1453, %v1460
      %v1463 = vunpack.c.l.s4 1934713408
      %v1464 = vunpack.c.0.s8 %v1463
      %v1465 = vlaneseq
      %v1466 = vshrl.u32 %v1465, 7
      %v1467 = vsub.s32 %v1464, %v1466
      %v1468 = vrot.slane %v1454, %v1467
      %v1469 = vcombine.low %v1404, %v1420
      %v1470 = vcombine.high %v1404, %v1420
      %v1472 = vunpack.c.l.s4 1934713408
      %v1473 = vunpack.c.0.s8 %v1472
      %v1474 = vlaneseq
      %v1475 = vshrl.u32 %v1474, 7
      %v1476 = vsub.s32 %v1473, %v1475
      %v1477 = vrot.slane %v1469, %v1476
      %v1479 = vunpack.c.l.s4 1934713408
      %v1480 = vunpack.c.0.s8 %v1479
      %v1481 = vlaneseq
      %v1482 = vshrl.u32 %v1481, 7
      %v1483 = vsub.s32 %v1480, %v1482
      %v1484 = vrot.slane %v1470, %v1483
      %v1485 = vcombine.low %v1429, %v1445
      %v1486 = vcombine.high %v1429, %v1445
      %v1488 = vunpack.c.l.s4 1934713408
      %v1489 = vunpack.c.0.s8 %v1488
      %v1490 = vlaneseq
      %v1491 = vshrl.u32 %v1490, 7
      %v1492 = vsub.s32 %v1489, %v1491
      %v1493 = vrot.slane %v1485, %v1492
      %v1495 = vunpack.c.l.s4 1934713408
      %v1496 = vunpack.c.0.s8 %v1495
      %v1497 = vlaneseq
      %v1498 = vshrl.u32 %v1497, 7
      %v1499 = vsub.s32 %v1496, %v1498
      %v1500 = vrot.slane %v1486, %v1499
      %v1501 = vcombine.low %v1436, %v1452
      %v1502 = vcombine.high %v1436, %v1452
      %v1504 = vunpack.c.l.s4 1934713408
      %v1505 = vunpack.c.0.s8 %v1504
      %v1506 = vlaneseq
      %v1507 = vshrl.u32 %v1506, 7
      %v1508 = vsub.s32 %v1505, %v1507
      %v1509 = vrot.slane %v1501, %v1508
      %v1511 = vunpack.c.l.s4 1934713408
      %v1512 = vunpack.c.0.s8 %v1511
      %v1513 = vlaneseq
      %v1514 = vshrl.u32 %v1513, 7
      %v1515 = vsub.s32 %v1512, %v1514
      %v1516 = vrot.slane %v1502, %v1515
      %v1517 = vcombine.low %v1461, %v1493
      %v1518 = vcombine.high %v1461, %v1493
      %v1519 = vcombine.low %v1468, %v1500
      %v1520 = vcombine.high %v1468, %v1500
      %v1521 = vcombine.low %v1477, %v1509
      %v1522 = vcombine.high %v1477, %v1509
      %v1523 = vcombine.low %v1484, %v1516
      %v1524 = vcombine.high %v1484, %v1516
      %v1525 = vcombine.high %v574, 0.0
      %v1527 = vunpack.c.l.s4 1983009808
      %v1528 = vunpack.c.0.s8 %v1527
      %v1529 = vlaneseq
      %v1530 = vshrl.u32 %v1529, 7
      %v1531 = vsub.s32 %v1528, %v1530
      %v1532 = vrot.slane %v574, %v1531
      %v1534 = vunpack.c.l.s4 1983009808
      %v1535 = vunpack.c.0.s8 %v1534
      %v1536 = vlaneseq
      %v1537 = vshrl.u32 %v1536, 7
      %v1538 = vsub.s32 %v1535, %v1537
      %v1539 = vrot.slane %v1525, %v1538
      %v1540 = vcombine.high %v581, 0.0
      %v1542 = vunpack.c.l.s4 1983009808
      %v1543 = vunpack.c.0.s8 %v1542
      %v1544 = vlaneseq
      %v1545 = vshrl.u32 %v1544, 7
      %v1546 = vsub.s32 %v1543, %v1545
      %v1547 = vrot.slane %v581, %v1546
      %v1549 = vunpack.c.l.s4 1983009808
      %v1550 = vunpack.c.0.s8 %v1549
      %v1551 = vlaneseq
      %v1552 = vshrl.u32 %v1551, 7
      %v1553 = vsub.s32 %v1550, %v1552
      %v1554 = vrot.slane %v1540, %v1553
      %v1555 = vcombine.low %v1532, %v1547
      %v1556 = vcombine.high %v1532, %v1547
      %v1558 = vunpack.c.l.s4 1934713408
      %v1559 = vunpack.c.0.s8 %v1558
      %v1560 = vlaneseq
      %v1561 = vshrl.u32 %v1560, 7
      %v1562 = vsub.s32 %v1559, %v1561
      %v1563 = vrot.slane %v1555, %v1562
      %v1565 = vunpack.c.l.s4 1934713408
      %v1566 = vunpack.c.0.s8 %v1565
      %v1567 = vlaneseq
      %v1568 = vshrl.u32 %v1567, 7
      %v1569 = vsub.s32 %v1566, %v1568
      %v1570 = vrot.slane %v1556, %v1569
      %v1571 = vcombine.low %v1539, %v1554
      %v1572 = vcombine.high %v1539, %v1554
      %v1574 = vunpack.c.l.s4 1934713408
      %v1575 = vunpack.c.0.s8 %v1574
      %v1576 = vlaneseq
      %v1577 = vshrl.u32 %v1576, 7
      %v1578 = vsub.s32 %v1575, %v1577
      %v1579 = vrot.slane %v1571, %v1578
      %v1581 = vunpack.c.l.s4 1934713408
      %v1582 = vunpack.c.0.s8 %v1581
      %v1583 = vlaneseq
      %v1584 = vshrl.u32 %v1583, 7
      %v1585 = vsub.s32 %v1582, %v1584
      %v1586 = vrot.slane %v1572, %v1585
      %v1587 = vcombine.high %v1563, 0.0
      %v1588 = vcombine.high %v1570, 0.0
      %v1589 = vcombine.high %v1579, 0.0
      %v1590 = vcombine.high %v1586, 0.0
      %v1591 = vcombine.low %v490, %v512
      %v1593 = vunpack.c.l.s4 1983009808
      %v1594 = vunpack.c.0.s8 %v1593
      %v1595 = vlaneseq
      %v1596 = vshrl.u32 %v1595, 7
      %v1597 = vsub.s32 %v1594, %v1596
      %v1598 = vrot.slane %v1591, %v1597
      %v1599 = vcombine.low %v501, %v523
      %v1601 = vunpack.c.l.s4 1983009808
      %v1602 = vunpack.c.0.s8 %v1601
      %v1603 = vlaneseq
      %v1604 = vshrl.u32 %v1603, 7
      %v1605 = vsub.s32 %v1602, %v1604
      %v1606 = vrot.slane %v1599, %v1605
      %v1607 = vcombine.low %v534, %v556
      %v1609 = vunpack.c.l.s4 1983009808
      %v1610 = vunpack.c.0.s8 %v1609
      %v1611 = vlaneseq
      %v1612 = vshrl.u32 %v1611, 7
      %v1613 = vsub.s32 %v1610, %v1612
      %v1614 = vrot.slane %v1607, %v1613
      %v1615 = vcombine.low %v545, %v567
      %v1617 = vunpack.c.l.s4 1983009808
      %v1618 = vunpack.c.0.s8 %v1617
      %v1619 = vlaneseq
      %v1620 = vshrl.u32 %v1619, 7
      %v1621 = vsub.s32 %v1618, %v1620
      %v1622 = vrot.slane %v1615, %v1621
      %v1623 = vcombine.low %v1598, %v1606
      %v1625 = vunpack.c.l.s4 1934713408
      %v1626 = vunpack.c.0.s8 %v1625
      %v1627 = vlaneseq
      %v1628 = vshrl.u32 %v1627, 7
      %v1629 = vsub.s32 %v1626, %v1628
      %v1630 = vrot.slane %v1623, %v1629
      %v1631 = vcombine.low %v1614, %v1622
      %v1633 = vunpack.c.l.s4 1934713408
      %v1634 = vunpack.c.0.s8 %v1633
      %v1635 = vlaneseq
      %v1636 = vshrl.u32 %v1635, 7
      %v1637 = vsub.s32 %v1634, %v1636
      %v1638 = vrot.slane %v1631, %v1637
      %v1639 = vcombine.low %v1630, %v1638
      %v1640 = vcombine.high %v1630, %v1638
      %s1642 = sor.u32 256, 8
      %1643 = vbcast.lane.b32.xlu0 %v571, %s1642
      %v1644 = vpop.permute.xlu0 %1643
      %s1646 = sor.u32 256, 8
      %1647 = vbcast.lane.b32.xlu0 %v578, %s1646
      %v1648 = vpop.permute.xlu0 %1647
      %v1649 = vcombine.low %v1644, %v1648
      %v1651 = vunpack.c.l.s4 1934713408
      %v1652 = vunpack.c.0.s8 %v1651
      %v1653 = vlaneseq
      %v1654 = vshrl.u32 %v1653, 7
      %v1655 = vsub.s32 %v1652, %v1654
      %v1656 = vrot.slane %v1649, %v1655
      %v1657 = vcombine.high %v1656, 0.0
      %1666 = vrot.lane.b32.xlu0 %v711, 2
      %v1667 = vpop.permute.xlu0 %1666
      %1668 = vrot.lane.b32.xlu0 %v780, 2
      %v1669 = vpop.permute.xlu0 %1668
      %1670 = vrot.lane.b32.xlu0 %v980, 2
      %v1671 = vpop.permute.xlu0 %1670
      %1672 = vrot.lane.b32.xlu0 %v1049, 2
      %v1673 = vpop.permute.xlu0 %1672
      %1674 = vrot.lane.b32.xlu0 %v1249, 2
      %v1675 = vpop.permute.xlu0 %1674
      %1676 = vrot.lane.b32.xlu0 %v1318, 2
      %v1677 = vpop.permute.xlu0 %1676
      %1678 = vrot.lane.b32.xlu0 %v1518, 2
      %v1679 = vpop.permute.xlu0 %1678
      %1680 = vrot.lane.b32.xlu0 %v1587, 2
      %v1681 = vpop.permute.xlu0 %1680
      %1698 = vrot.lane.b32.xlu0 %v712, 4
      %v1699 = vpop.permute.xlu0 %1698
      %1700 = vrot.lane.b32.xlu0 %v763, 4
      %v1701 = vpop.permute.xlu0 %1700
      %1702 = vrot.lane.b32.xlu0 %v981, 4
      %v1703 = vpop.permute.xlu0 %1702
      %1704 = vrot.lane.b32.xlu0 %v1032, 4
      %v1705 = vpop.permute.xlu0 %1704
      %1706 = vrot.lane.b32.xlu0 %v1250, 4
      %v1707 = vpop.permute.xlu0 %1706
      %1708 = vrot.lane.b32.xlu0 %v1301, 4
      %v1709 = vpop.permute.xlu0 %1708
      %1710 = vrot.lane.b32.xlu0 %v1519, 4
      %v1711 = vpop.permute.xlu0 %1710
      %1712 = vrot.lane.b32.xlu0 %v1570, 4
      %v1713 = vpop.permute.xlu0 %1712
      %1730 = vrot.lane.b32.xlu0 %v713, 6
      %v1731 = vpop.permute.xlu0 %1730
      %1732 = vrot.lane.b32.xlu0 %v781, 6
      %v1733 = vpop.permute.xlu0 %1732
      %1734 = vrot.lane.b32.xlu0 %v982, 6
      %v1735 = vpop.permute.xlu0 %1734
      %1736 = vrot.lane.b32.xlu0 %v1050, 6
      %v1737 = vpop.permute.xlu0 %1736
      %1738 = vrot.lane.b32.xlu0 %v1251, 6
      %v1739 = vpop.permute.xlu0 %1738
      %1740 = vrot.lane.b32.xlu0 %v1319, 6
      %v1741 = vpop.permute.xlu0 %1740
      %1742 = vrot.lane.b32.xlu0 %v1520, 6
      %v1743 = vpop.permute.xlu0 %1742
      %1744 = vrot.lane.b32.xlu0 %v1588, 6
      %v1745 = vpop.permute.xlu0 %1744
      %1762 = vrot.lane.b32.xlu0 %v714, 8
      %v1763 = vpop.permute.xlu0 %1762
      %1764 = vrot.lane.b32.xlu0 %v772, 8
      %v1765 = vpop.permute.xlu0 %1764
      %1766 = vrot.lane.b32.xlu0 %v983, 8
      %v1767 = vpop.permute.xlu0 %1766
      %1768 = vrot.lane.b32.xlu0 %v1041, 8
      %v1769 = vpop.permute.xlu0 %1768
      %1770 = vrot.lane.b32.xlu0 %v1252, 8
      %v1771 = vpop.permute.xlu0 %1770
      %1772 = vrot.lane.b32.xlu0 %v1310, 8
      %v1773 = vpop.permute.xlu0 %1772
      %1774 = vrot.lane.b32.xlu0 %v1521, 8
      %v1775 = vpop.permute.xlu0 %1774
      %1776 = vrot.lane.b32.xlu0 %v1579, 8
      %v1777 = vpop.permute.xlu0 %1776
      %1794 = vrot.lane.b32.xlu0 %v715, 10
      %v1795 = vpop.permute.xlu0 %1794
      %1796 = vrot.lane.b32.xlu0 %v782, 10
      %v1797 = vpop.permute.xlu0 %1796
      %1798 = vrot.lane.b32.xlu0 %v984, 10
      %v1799 = vpop.permute.xlu0 %1798
      %1800 = vrot.lane.b32.xlu0 %v1051, 10
      %v1801 = vpop.permute.xlu0 %1800
      %1802 = vrot.lane.b32.xlu0 %v1253, 10
      %v1803 = vpop.permute.xlu0 %1802
      %1804 = vrot.lane.b32.xlu0 %v1320, 10
      %v1805 = vpop.permute.xlu0 %1804
      %1806 = vrot.lane.b32.xlu0 %v1522, 10
      %v1807 = vpop.permute.xlu0 %1806
      %1808 = vrot.lane.b32.xlu0 %v1589, 10
      %v1809 = vpop.permute.xlu0 %1808
      %1826 = vrot.lane.b32.xlu0 %v716, 12
      %v1827 = vpop.permute.xlu0 %1826
      %1828 = vrot.lane.b32.xlu0 %v779, 12
      %v1829 = vpop.permute.xlu0 %1828
      %1830 = vrot.lane.b32.xlu0 %v985, 12
      %v1831 = vpop.permute.xlu0 %1830
      %1832 = vrot.lane.b32.xlu0 %v1048, 12
      %v1833 = vpop.permute.xlu0 %1832
      %1834 = vrot.lane.b32.xlu0 %v1254, 12
      %v1835 = vpop.permute.xlu0 %1834
      %1836 = vrot.lane.b32.xlu0 %v1317, 12
      %v1837 = vpop.permute.xlu0 %1836
      %1838 = vrot.lane.b32.xlu0 %v1523, 12
      %v1839 = vpop.permute.xlu0 %1838
      %1840 = vrot.lane.b32.xlu0 %v1586, 12
      %v1841 = vpop.permute.xlu0 %1840
      %1858 = vrot.lane.b32.xlu0 %v717, 14
      %v1859 = vpop.permute.xlu0 %1858
      %1860 = vrot.lane.b32.xlu0 %v783, 14
      %v1861 = vpop.permute.xlu0 %1860
      %1862 = vrot.lane.b32.xlu0 %v986, 14
      %v1863 = vpop.permute.xlu0 %1862
      %1864 = vrot.lane.b32.xlu0 %v1052, 14
      %v1865 = vpop.permute.xlu0 %1864
      %1866 = vrot.lane.b32.xlu0 %v1255, 14
      %v1867 = vpop.permute.xlu0 %1866
      %1868 = vrot.lane.b32.xlu0 %v1321, 14
      %v1869 = vpop.permute.xlu0 %1868
      %1870 = vrot.lane.b32.xlu0 %v1524, 14
      %v1871 = vpop.permute.xlu0 %1870
      %1872 = vrot.lane.b32.xlu0 %v1590, 14
      %v1873 = vpop.permute.xlu0 %1872
      %1890 = vrot.lane.b32.xlu0 %v832, 16
      %v1891 = vpop.permute.xlu0 %1890
      %1892 = vrot.lane.b32.xlu0 %v849, 16
      %v1893 = vpop.permute.xlu0 %1892
      %1894 = vrot.lane.b32.xlu0 %v1101, 16
      %v1895 = vpop.permute.xlu0 %1894
      %1896 = vrot.lane.b32.xlu0 %v1118, 16
      %v1897 = vpop.permute.xlu0 %1896
      %1898 = vrot.lane.b32.xlu0 %v1370, 16
      %v1899 = vpop.permute.xlu0 %1898
      %1900 = vrot.lane.b32.xlu0 %v1387, 16
      %v1901 = vpop.permute.xlu0 %1900
      %1902 = vrot.lane.b32.xlu0 %v1639, 16
      %v1903 = vpop.permute.xlu0 %1902
      %1904 = vrot.lane.b32.xlu0 %v1656, 16
      %v1905 = vpop.permute.xlu0 %1904
      %1922 = vrot.lane.b32.xlu0 %v833, 18
      %v1923 = vpop.permute.xlu0 %1922
      %1924 = vrot.lane.b32.xlu0 %v850, 18
      %v1925 = vpop.permute.xlu0 %1924
      %1926 = vrot.lane.b32.xlu0 %v1102, 18
      %v1927 = vpop.permute.xlu0 %1926
      %1928 = vrot.lane.b32.xlu0 %v1119, 18
      %v1929 = vpop.permute.xlu0 %1928
      %1930 = vrot.lane.b32.xlu0 %v1371, 18
      %v1931 = vpop.permute.xlu0 %1930
      %1932 = vrot.lane.b32.xlu0 %v1388, 18
      %v1933 = vpop.permute.xlu0 %1932
      %1934 = vrot.lane.b32.xlu0 %v1640, 18
      %v1935 = vpop.permute.xlu0 %1934
      %1936 = vrot.lane.b32.xlu0 %v1657, 18
      %v1937 = vpop.permute.xlu0 %1936
      %vm1946 = vcmask 15360
      %v1947 = vsel %vm1946, %v710, %v1667
      %v1948 = vsel %vm1946, %v756, %v1669
      %v1949 = vsel %vm1946, %v979, %v1671
      %v1950 = vsel %vm1946, %v1025, %v1673
      %v1951 = vsel %vm1946, %v1248, %v1675
      %v1952 = vsel %vm1946, %v1294, %v1677
      %v1953 = vsel %vm1946, %v1517, %v1679
      %v1954 = vsel %vm1946, %v1563, %v1681
      %vm1955 = vcmask 31744
      %v1956 = vsel %vm1955, %v1947, %v1699
      %v1957 = vsel %vm1955, %v1948, %v1701
      %v1958 = vsel %vm1955, %v1949, %v1703
      %v1959 = vsel %vm1955, %v1950, %v1705
      %v1960 = vsel %vm1955, %v1951, %v1707
      %v1961 = vsel %vm1955, %v1952, %v1709
      %v1962 = vsel %vm1955, %v1953, %v1711
      %v1963 = vsel %vm1955, %v1954, %v1713
      %vm1964 = vcmask 48128
      %v1965 = vsel %vm1964, %v1956, %v1731
      %v1966 = vsel %vm1964, %v1957, %v1733
      %v1967 = vsel %vm1964, %v1958, %v1735
      %v1968 = vsel %vm1964, %v1959, %v1737
      %v1969 = vsel %vm1964, %v1960, %v1739
      %v1970 = vsel %vm1964, %v1961, %v1741
      %v1971 = vsel %vm1964, %v1962, %v1743
      %v1972 = vsel %vm1964, %v1963, %v1745
      %vm1973 = vcmask 64512
      %v1974 = vsel %vm1973, %v1965, %v1763
      %v1975 = vsel %vm1973, %v1966, %v1765
      %v1976 = vsel %vm1973, %v1967, %v1767
      %v1977 = vsel %vm1973, %v1968, %v1769
      %v1978 = vsel %vm1973, %v1969, %v1771
      %v1979 = vsel %vm1973, %v1970, %v1773
      %v1980 = vsel %vm1973, %v1971, %v1775
      %v1981 = vsel %vm1973, %v1972, %v1777
      %vm1982 = vcmask 80896
      %v1983 = vsel %vm1982, %v1974, %v1795
      %v1984 = vsel %vm1982, %v1975, %v1797
      %v1985 = vsel %vm1982, %v1976, %v1799
      %v1986 = vsel %vm1982, %v1977, %v1801
      %v1987 = vsel %vm1982, %v1978, %v1803
      %v1988 = vsel %vm1982, %v1979, %v1805
      %v1989 = vsel %vm1982, %v1980, %v1807
      %v1990 = vsel %vm1982, %v1981, %v1809
      %vm1991 = vcmask 97280
      %v1992 = vsel %vm1991, %v1983, %v1827
      %v1993 = vsel %vm1991, %v1984, %v1829
      %v1994 = vsel %vm1991, %v1985, %v1831
      %v1995 = vsel %vm1991, %v1986, %v1833
      %v1996 = vsel %vm1991, %v1987, %v1835
      %v1997 = vsel %vm1991, %v1988, %v1837
      %v1998 = vsel %vm1991, %v1989, %v1839
      %v1999 = vsel %vm1991, %v1990, %v1841
      %vm2000 = vcmask 113664
      %v2001 = vsel %vm2000, %v1992, %v1859
      %v2002 = vsel %vm2000, %v1993, %v1861
      %v2003 = vsel %vm2000, %v1994, %v1863
      %v2004 = vsel %vm2000, %v1995, %v1865
      %v2005 = vsel %vm2000, %v1996, %v1867
      %v2006 = vsel %vm2000, %v1997, %v1869
      %v2007 = vsel %vm2000, %v1998, %v1871
      %v2008 = vsel %vm2000, %v1999, %v1873
      %vm2009 = vcmask 130048
      %v2010 = vsel %vm2009, %v2001, %v1891
      %v2011 = vsel %vm2009, %v2002, %v1893
      %v2012 = vsel %vm2009, %v2003, %v1895
      %v2013 = vsel %vm2009, %v2004, %v1897
      %v2014 = vsel %vm2009, %v2005, %v1899
      %v2015 = vsel %vm2009, %v2006, %v1901
      %v2016 = vsel %vm2009, %v2007, %v1903
      %v2017 = vsel %vm2009, %v2008, %v1905
      %vm2018 = vcmask 146432
      %v2019 = vsel %vm2018, %v2010, %v1923
      %v2020 = vsel %vm2018, %v2011, %v1925
      %v2021 = vsel %vm2018, %v2012, %v1927
      %v2022 = vsel %vm2018, %v2013, %v1929
      %v2023 = vsel %vm2018, %v2014, %v1931
      %v2024 = vsel %vm2018, %v2015, %v1933
      %v2025 = vsel %vm2018, %v2016, %v1935
      %v2026 = vsel %vm2018, %v2017, %v1937
      %vm2027 = vcmask 162816
      %2028 = vst.msk [vmem:[#allocation2] sm:$0xff] %vm2027, %v2019
      %vm2029 = vcmask 156672
      %2030 = vst.msk [vmem:[#allocation2 + $0x8] sm:$0x3] %vm2029, %v2020
      %2031 = vst.msk [vmem:[#allocation2 + $0x10] sm:$0xff] %vm2027, %v2021
      %2032 = vst.msk [vmem:[#allocation2 + $0x18] sm:$0x3] %vm2029, %v2022
      %2033 = vst.msk [vmem:[#allocation2 + $0x20] sm:$0xff] %vm2027, %v2023
      %2034 = vst.msk [vmem:[#allocation2 + $0x28] sm:$0x3] %vm2029, %v2024
      %2035 = vst.msk [vmem:[#allocation2 + $0x30] sm:$0xff] %vm2027, %v2025
      %2036 = vst.msk [vmem:[#allocation2 + $0x38] sm:$0x3] %vm2029, %v2026
      %v2037 = vld [vmem:[%s1] sm:$0xff]
      %v2038 = vld [vmem:[#allocation2] sm:$0xff]
      %v2039 = vld [vmem:[#allocation2 + $0x10] sm:$0xff]
      %v2040 = vld [vmem:[#allocation2 + $0x20] sm:$0xff]
      %v2041 = vld [vmem:[#allocation2 + $0x30] sm:$0xff]
      %2046 = vrot.lane.b32.xlu0 %v2038, 127
      %v2047 = vpop.permute.xlu0 %2046
      %2048 = vrot.lane.b32.xlu0 %v2039, 127
      %v2049 = vpop.permute.xlu0 %2048
      %2050 = vrot.lane.b32.xlu0 %v2040, 127
      %v2051 = vpop.permute.xlu0 %2050
      %2052 = vrot.lane.b32.xlu0 %v2041, 127
      %v2053 = vpop.permute.xlu0 %2052
      %v2058 = vcombine.low %v2047, %v2051
      %v2059 = vcombine.high %v2047, %v2051
      %v2061 = vunpack.c.l.s4 1983009808
      %v2062 = vunpack.c.0.s8 %v2061
      %v2063 = vlaneseq
      %v2064 = vshrl.u32 %v2063, 7
      %v2065 = vsub.s32 %v2062, %v2064
      %v2066 = vrot.slane %v2058, %v2065
      %v2068 = vunpack.c.l.s4 1983009808
      %v2069 = vunpack.c.0.s8 %v2068
      %v2070 = vlaneseq
      %v2071 = vshrl.u32 %v2070, 7
      %v2072 = vsub.s32 %v2069, %v2071
      %v2073 = vrot.slane %v2059, %v2072
      %v2074 = vcombine.low %v2049, %v2053
      %v2075 = vcombine.high %v2049, %v2053
      %v2077 = vunpack.c.l.s4 1983009808
      %v2078 = vunpack.c.0.s8 %v2077
      %v2079 = vlaneseq
      %v2080 = vshrl.u32 %v2079, 7
      %v2081 = vsub.s32 %v2078, %v2080
      %v2082 = vrot.slane %v2074, %v2081
      %v2084 = vunpack.c.l.s4 1983009808
      %v2085 = vunpack.c.0.s8 %v2084
      %v2086 = vlaneseq
      %v2087 = vshrl.u32 %v2086, 7
      %v2088 = vsub.s32 %v2085, %v2087
      %v2089 = vrot.slane %v2075, %v2088
      %v2090 = vcombine.low %v2066, %v2082
      %v2091 = vcombine.high %v2066, %v2082
      %v2093 = vunpack.c.l.s4 1934713408
      %v2094 = vunpack.c.0.s8 %v2093
      %v2095 = vlaneseq
      %v2096 = vshrl.u32 %v2095, 7
      %v2097 = vsub.s32 %v2094, %v2096
      %v2098 = vrot.slane %v2090, %v2097
      %v2100 = vunpack.c.l.s4 1934713408
      %v2101 = vunpack.c.0.s8 %v2100
      %v2102 = vlaneseq
      %v2103 = vshrl.u32 %v2102, 7
      %v2104 = vsub.s32 %v2101, %v2103
      %v2105 = vrot.slane %v2091, %v2104
      %v2106 = vcombine.low %v2073, %v2089
      %v2107 = vcombine.high %v2073, %v2089
      %v2109 = vunpack.c.l.s4 1934713408
      %v2110 = vunpack.c.0.s8 %v2109
      %v2111 = vlaneseq
      %v2112 = vshrl.u32 %v2111, 7
      %v2113 = vsub.s32 %v2110, %v2112
      %v2114 = vrot.slane %v2106, %v2113
      %v2116 = vunpack.c.l.s4 1934713408
      %v2117 = vunpack.c.0.s8 %v2116
      %v2118 = vlaneseq
      %v2119 = vshrl.u32 %v2118, 7
      %v2120 = vsub.s32 %v2117, %v2119
      %v2121 = vrot.slane %v2107, %v2120
      %v2122 = vcombine.high %v2098, 0.0
      %v2123 = vcombine.high %v2105, 0.0
      %v2124 = vcombine.high %v2114, 0.0
      %v2125 = vcombine.high %v2121, 0.0
      %2127 = vrot.lane.b32.xlu0 %v2122, 16
      %v2128 = vpop.permute.xlu0 %2127
      %2131 = vrot.lane.b32.xlu0 %v2105, 32
      %v2132 = vpop.permute.xlu0 %2131
      %2135 = vrot.lane.b32.xlu0 %v2123, 48
      %v2136 = vpop.permute.xlu0 %2135
      %2139 = vrot.lane.b32.xlu0 %v2114, 64
      %v2140 = vpop.permute.xlu0 %2139
      %2143 = vrot.lane.b32.xlu0 %v2124, 80
      %v2144 = vpop.permute.xlu0 %2143
      %2147 = vrot.lane.b32.xlu0 %v2121, 96
      %v2148 = vpop.permute.xlu0 %2147
      %2151 = vrot.lane.b32.xlu0 %v2125, 112
      %v2152 = vpop.permute.xlu0 %2151
      %v2154 = vsel %vm2009, %v2098, %v2128
      %vm2155 = vcmask 261120
      %v2156 = vsel %vm2155, %v2154, %v2132
      %vm2157 = vcmask 392192
      %v2158 = vsel %vm2157, %v2156, %v2136
      %vm2159 = vcmask 523264
      %v2160 = vsel %vm2159, %v2158, %v2140
      %vm2161 = vcmask 654336
      %v2162 = vsel %vm2161, %v2160, %v2144
      %vm2163 = vcmask 785408
      %v2164 = vsel %vm2163, %v2162, %v2148
      %vm2165 = vcmask 916480
      %v2166 = vsel %vm2165, %v2164, %v2152
      %s2167 = scalar_lea.vmem %s1, 8
      %v2168 = vld [vmem:[%s2167] sm:$0xff]
      %2169 = vrot.lane.b32.xlu0 %v2038, 126
      %v2170 = vpop.permute.xlu0 %2169
      %2171 = vrot.lane.b32.xlu0 %v2039, 126
      %v2172 = vpop.permute.xlu0 %2171
      %2173 = vrot.lane.b32.xlu0 %v2040, 126
      %v2174 = vpop.permute.xlu0 %2173
      %2175 = vrot.lane.b32.xlu0 %v2041, 126
      %v2176 = vpop.permute.xlu0 %2175
      %v2181 = vcombine.low %v2170, %v2174
      %v2182 = vcombine.high %v2170, %v2174
      %v2184 = vunpack.c.l.s4 1983009808
      %v2185 = vunpack.c.0.s8 %v2184
      %v2186 = vlaneseq
      %v2187 = vshrl.u32 %v2186, 7
      %v2188 = vsub.s32 %v2185, %v2187
      %v2189 = vrot.slane %v2181, %v2188
      %v2191 = vunpack.c.l.s4 1983009808
      %v2192 = vunpack.c.0.s8 %v2191
      %v2193 = vlaneseq
      %v2194 = vshrl.u32 %v2193, 7
      %v2195 = vsub.s32 %v2192, %v2194
      %v2196 = vrot.slane %v2182, %v2195
      %v2197 = vcombine.low %v2172, %v2176
      %v2198 = vcombine.high %v2172, %v2176
      %v2200 = vunpack.c.l.s4 1983009808
      %v2201 = vunpack.c.0.s8 %v2200
      %v2202 = vlaneseq
      %v2203 = vshrl.u32 %v2202, 7
      %v2204 = vsub.s32 %v2201, %v2203
      %v2205 = vrot.slane %v2197, %v2204
      %v2207 = vunpack.c.l.s4 1983009808
      %v2208 = vunpack.c.0.s8 %v2207
      %v2209 = vlaneseq
      %v2210 = vshrl.u32 %v2209, 7
      %v2211 = vsub.s32 %v2208, %v2210
      %v2212 = vrot.slane %v2198, %v2211
      %v2213 = vcombine.low %v2189, %v2205
      %v2214 = vcombine.high %v2189, %v2205
      %v2216 = vunpack.c.l.s4 1934713408
      %v2217 = vunpack.c.0.s8 %v2216
      %v2218 = vlaneseq
      %v2219 = vshrl.u32 %v2218, 7
      %v2220 = vsub.s32 %v2217, %v2219
      %v2221 = vrot.slane %v2213, %v2220
      %v2223 = vunpack.c.l.s4 1934713408
      %v2224 = vunpack.c.0.s8 %v2223
      %v2225 = vlaneseq
      %v2226 = vshrl.u32 %v2225, 7
      %v2227 = vsub.s32 %v2224, %v2226
      %v2228 = vrot.slane %v2214, %v2227
      %v2229 = vcombine.low %v2196, %v2212
      %v2230 = vcombine.high %v2196, %v2212
      %v2232 = vunpack.c.l.s4 1934713408
      %v2233 = vunpack.c.0.s8 %v2232
      %v2234 = vlaneseq
      %v2235 = vshrl.u32 %v2234, 7
      %v2236 = vsub.s32 %v2233, %v2235
      %v2237 = vrot.slane %v2229, %v2236
      %v2239 = vunpack.c.l.s4 1934713408
      %v2240 = vunpack.c.0.s8 %v2239
      %v2241 = vlaneseq
      %v2242 = vshrl.u32 %v2241, 7
      %v2243 = vsub.s32 %v2240, %v2242
      %v2244 = vrot.slane %v2230, %v2243
      %v2245 = vcombine.high %v2221, 0.0
      %v2246 = vcombine.high %v2228, 0.0
      %v2247 = vcombine.high %v2237, 0.0
      %v2248 = vcombine.high %v2244, 0.0
      %2250 = vrot.lane.b32.xlu0 %v2245, 16
      %v2251 = vpop.permute.xlu0 %2250
      %2254 = vrot.lane.b32.xlu0 %v2228, 32
      %v2255 = vpop.permute.xlu0 %2254
      %2258 = vrot.lane.b32.xlu0 %v2246, 48
      %v2259 = vpop.permute.xlu0 %2258
      %2262 = vrot.lane.b32.xlu0 %v2237, 64
      %v2263 = vpop.permute.xlu0 %2262
      %2266 = vrot.lane.b32.xlu0 %v2247, 80
      %v2267 = vpop.permute.xlu0 %2266
      %2270 = vrot.lane.b32.xlu0 %v2244, 96
      %v2271 = vpop.permute.xlu0 %2270
      %2274 = vrot.lane.b32.xlu0 %v2248, 112
      %v2275 = vpop.permute.xlu0 %2274
      %v2277 = vsel %vm2009, %v2221, %v2251
      %v2278 = vsel %vm2155, %v2277, %v2255
      %v2279 = vsel %vm2157, %v2278, %v2259
      %v2280 = vsel %vm2159, %v2279, %v2263
      %v2281 = vsel %vm2161, %v2280, %v2267
      %v2282 = vsel %vm2163, %v2281, %v2271
      %v2283 = vsel %vm2165, %v2282, %v2275
      %v2285 = vsel %vm1955, %v2168, 0
      %vm2287 = vcmask 1043456
      %v2289 = vsel %vm2287, %v2283, 0
      %2291 = vmatprep.subr.mxu0 0.0
      %2292 = vmatpush1.msra.mxu0 %v2289
      %2293 = vmatprep.subr.mxu0 0.0
      %2294 = vmatpush1.msra.mxu0 0.0
      %2295 = vmatprep.subr.mxu0 0.0
      %2296 = vmatpush1.msra.mxu0 0.0
      %2297 = vmatprep.subr.mxu0 0.0
      %2298 = vmatpush1.msra.mxu0 0.0
      %2299 = vmatprep.subr.mxu0 0.0
      %2300 = vmatpush1.msra.mxu0 0.0
      %2301 = vmatprep.subr.mxu0 0.0
      %2302 = vmatpush1.msra.mxu0 0.0
      %2303 = vmatprep.subr.mxu0 0.0
      %2304 = vmatpush1.msra.mxu0 0.0
      %2305 = vmatprep.subr.mxu0 0.0
      %2306 = vmatpush1.msra.mxu0 0.0
      %2307 = vmatprep.subr.mxu0 0.0
      %2308 = vmatpush1.msra.mxu0 0.0
      %2309 = vmatprep.subr.mxu0 0.0
      %2310 = vmatpush1.msra.mxu0 0.0
      %2311 = vmatprep.subr.mxu0 0.0
      %2312 = vmatpush1.msra.mxu0 0.0
      %2313 = vmatprep.subr.mxu0 0.0
      %2314 = vmatpush1.msra.mxu0 0.0
      %2315 = vmatprep.subr.mxu0 0.0
      %2316 = vmatpush1.msra.mxu0 0.0
      %2317 = vmatprep.subr.mxu0 0.0
      %2318 = vmatpush1.msra.mxu0 0.0
      %2319 = vmatprep.subr.mxu0 0.0
      %2320 = vmatpush1.msra.mxu0 0.0
      %2321 = vmatprep.subr.mxu0 0.0
      %2322 = vmatpush1.msra.mxu0 0.0
      %2323 = vmatprep.subr.mxu0 0.0
      %2324 = vmatpush1.msra.mxu0 0.0
      %2325 = vmatprep.subr.mxu0 0.0
      %2326 = vmatpush1.msra.mxu0 0.0
      %2327 = vmatprep.subr.mxu0 0.0
      %2328 = vmatpush1.msra.mxu0 0.0
      %2329 = vmatprep.subr.mxu0 0.0
      %2330 = vmatpush1.msra.mxu0 0.0
      %2331 = vmatprep.subr.mxu0 0.0
      %2332 = vmatpush1.msra.mxu0 0.0
      %2333 = vmatprep.subr.mxu0 0.0
      %2334 = vmatpush1.msra.mxu0 0.0
      %2335 = vmatprep.subr.mxu0 0.0
      %2336 = vmatpush1.msra.mxu0 0.0
      %2337 = vmatprep.subr.mxu0 0.0
      %2338 = vmatpush1.msra.mxu0 0.0
      %2339 = vmatprep.subr.mxu0 0.0
      %2340 = vmatpush1.msra.mxu0 0.0
      %2341 = vmatprep.subr.mxu0 0.0
      %2342 = vmatpush1.msra.mxu0 0.0
      %2343 = vmatprep.subr.mxu0 0.0
      %2344 = vmatpush1.msra.mxu0 0.0
      %2345 = vmatprep.subr.mxu0 0.0
      %2346 = vmatpush1.msra.mxu0 0.0
      %2347 = vmatprep.subr.mxu0 0.0
      %2348 = vmatpush1.msra.mxu0 0.0
      %2349 = vmatprep.subr.mxu0 0.0
      %2350 = vmatpush1.msra.mxu0 0.0
      %2351 = vmatprep.subr.mxu0 0.0
      %2352 = vmatpush1.msra.mxu0 0.0
      %2353 = vmatprep.subr.mxu0 0.0
      %2354 = vmatpush1.msra.mxu0 0.0
      %2355 = vmatprep.mubr.f32.mxu0 0.0
      %2356 = vmatmul.mubr.f32.gmra.mrb[0].mxu0 %v2285
      %v2357 = vpop.f32.mrb[0].mxu0
      %v2358 = vadd.f32 0.0, %v2357
      %v2359 = vpop.f32.mrb[0].mxu0
      %2360 = vdwg.mxu0
      %v2362 = vsel %vm1955, %v2037, 0
      %v2365 = vsel %vm2287, %v2166, 0
      %2367 = vmatprep.subr.mxu0 0.0
      %2368 = vmatpush1.msra.mxu0 %v2365
      %2369 = vmatprep.subr.mxu0 0.0
      %2370 = vmatpush1.msra.mxu0 0.0
      %2371 = vmatprep.subr.mxu0 0.0
      %2372 = vmatpush1.msra.mxu0 0.0
      %2373 = vmatprep.subr.mxu0 0.0
      %2374 = vmatpush1.msra.mxu0 0.0
      %2375 = vmatprep.subr.mxu0 0.0
      %2376 = vmatpush1.msra.mxu0 0.0
      %2377 = vmatprep.subr.mxu0 0.0
      %2378 = vmatpush1.msra.mxu0 0.0
      %2379 = vmatprep.subr.mxu0 0.0
      %2380 = vmatpush1.msra.mxu0 0.0
      %2381 = vmatprep.subr.mxu0 0.0
      %2382 = vmatpush1.msra.mxu0 0.0
      %2383 = vmatprep.subr.mxu0 0.0
      %2384 = vmatpush1.msra.mxu0 0.0
      %2385 = vmatprep.subr.mxu0 0.0
      %2386 = vmatpush1.msra.mxu0 0.0
      %2387 = vmatprep.subr.mxu0 0.0
      %2388 = vmatpush1.msra.mxu0 0.0
      %2389 = vmatprep.subr.mxu0 0.0
      %2390 = vmatpush1.msra.mxu0 0.0
      %2391 = vmatprep.subr.mxu0 0.0
      %2392 = vmatpush1.msra.mxu0 0.0
      %2393 = vmatprep.subr.mxu0 0.0
      %2394 = vmatpush1.msra.mxu0 0.0
      %2395 = vmatprep.subr.mxu0 0.0
      %2396 = vmatpush1.msra.mxu0 0.0
      %2397 = vmatprep.subr.mxu0 0.0
      %2398 = vmatpush1.msra.mxu0 0.0
      %2399 = vmatprep.subr.mxu0 0.0
      %2400 = vmatpush1.msra.mxu0 0.0
      %2401 = vmatprep.subr.mxu0 0.0
      %2402 = vmatpush1.msra.mxu0 0.0
      %2403 = vmatprep.subr.mxu0 0.0
      %2404 = vmatpush1.msra.mxu0 0.0
      %2405 = vmatprep.subr.mxu0 0.0
      %2406 = vmatpush1.msra.mxu0 0.0
      %2407 = vmatprep.subr.mxu0 0.0
      %2408 = vmatpush1.msra.mxu0 0.0
      %2409 = vmatprep.subr.mxu0 0.0
      %2410 = vmatpush1.msra.mxu0 0.0
      %2411 = vmatprep.subr.mxu0 0.0
      %2412 = vmatpush1.msra.mxu0 0.0
      %2413 = vmatprep.subr.mxu0 0.0
      %2414 = vmatpush1.msra.mxu0 0.0
      %2415 = vmatprep.subr.mxu0 0.0
      %2416 = vmatpush1.msra.mxu0 0.0
      %2417 = vmatprep.subr.mxu0 0.0
      %2418 = vmatpush1.msra.mxu0 0.0
      %2419 = vmatprep.subr.mxu0 0.0
      %2420 = vmatpush1.msra.mxu0 0.0
      %2421 = vmatprep.subr.mxu0 0.0
      %2422 = vmatpush1.msra.mxu0 0.0
      %2423 = vmatprep.subr.mxu0 0.0
      %2424 = vmatpush1.msra.mxu0 0.0
      %2425 = vmatprep.subr.mxu0 0.0
      %2426 = vmatpush1.msra.mxu0 0.0
      %2427 = vmatprep.subr.mxu0 0.0
      %2428 = vmatpush1.msra.mxu0 0.0
      %2429 = vmatprep.subr.mxu0 0.0
      %2430 = vmatpush1.msra.mxu0 0.0
      %2431 = vmatprep.mubr.f32.mxu0 0.0
      %2432 = vmatmul.mubr.f32.gmra.mrb[0].mxu0 %v2362
      %v2433 = vpop.f32.mrb[0].mxu0
      %v2434 = vadd.f32 %v2358, %v2433
      %v2435 = vpop.f32.mrb[0].mxu0
      %2436 = vdwg.mxu0
      %s2437 = scalar_lea.vmem %s1, 16
      %v2438 = vld [vmem:[%s2437] sm:$0xff]
      %v2439 = vld [vmem:[#allocation2] sm:$0xff]
      %v2440 = vld [vmem:[#allocation2 + $0x10] sm:$0xff]
      %v2441 = vld [vmem:[#allocation2 + $0x20] sm:$0xff]
      %v2442 = vld [vmem:[#allocation2 + $0x30] sm:$0xff]
      %2447 = vrot.lane.b32.xlu0 %v2439, 125
      %v2448 = vpop.permute.xlu0 %2447
      %2449 = vrot.lane.b32.xlu0 %v2440, 125
      %v2450 = vpop.permute.xlu0 %2449
      %2451 = vrot.lane.b32.xlu0 %v2441, 125
      %v2452 = vpop.permute.xlu0 %2451
      %2453 = vrot.lane.b32.xlu0 %v2442, 125
      %v2454 = vpop.permute.xlu0 %2453
      %v2459 = vcombine.low %v2448, %v2452
      %v2460 = vcombine.high %v2448, %v2452
      %v2462 = vunpack.c.l.s4 1983009808
      %v2463 = vunpack.c.0.s8 %v2462
      %v2464 = vlaneseq
      %v2465 = vshrl.u32 %v2464, 7
      %v2466 = vsub.s32 %v2463, %v2465
      %v2467 = vrot.slane %v2459, %v2466
      %v2469 = vunpack.c.l.s4 1983009808
      %v2470 = vunpack.c.0.s8 %v2469
      %v2471 = vlaneseq
      %v2472 = vshrl.u32 %v2471, 7
      %v2473 = vsub.s32 %v2470, %v2472
      %v2474 = vrot.slane %v2460, %v2473
      %v2475 = vcombine.low %v2450, %v2454
      %v2476 = vcombine.high %v2450, %v2454
      %v2478 = vunpack.c.l.s4 1983009808
      %v2479 = vunpack.c.0.s8 %v2478
      %v2480 = vlaneseq
      %v2481 = vshrl.u32 %v2480, 7
      %v2482 = vsub.s32 %v2479, %v2481
      %v2483 = vrot.slane %v2475, %v2482
      %v2485 = vunpack.c.l.s4 1983009808
      %v2486 = vunpack.c.0.s8 %v2485
      %v2487 = vlaneseq
      %v2488 = vshrl.u32 %v2487, 7
      %v2489 = vsub.s32 %v2486, %v2488
      %v2490 = vrot.slane %v2476, %v2489
      %v2491 = vcombine.low %v2467, %v2483
      %v2492 = vcombine.high %v2467, %v2483
      %v2494 = vunpack.c.l.s4 1934713408
      %v2495 = vunpack.c.0.s8 %v2494
      %v2496 = vlaneseq
      %v2497 = vshrl.u32 %v2496, 7
      %v2498 = vsub.s32 %v2495, %v2497
      %v2499 = vrot.slane %v2491, %v2498
      %v2501 = vunpack.c.l.s4 1934713408
      %v2502 = vunpack.c.0.s8 %v2501
      %v2503 = vlaneseq
      %v2504 = vshrl.u32 %v2503, 7
      %v2505 = vsub.s32 %v2502, %v2504
      %v2506 = vrot.slane %v2492, %v2505
      %v2507 = vcombine.low %v2474, %v2490
      %v2508 = vcombine.high %v2474, %v2490
      %v2510 = vunpack.c.l.s4 1934713408
      %v2511 = vunpack.c.0.s8 %v2510
      %v2512 = vlaneseq
      %v2513 = vshrl.u32 %v2512, 7
      %v2514 = vsub.s32 %v2511, %v2513
      %v2515 = vrot.slane %v2507, %v2514
      %v2517 = vunpack.c.l.s4 1934713408
      %v2518 = vunpack.c.0.s8 %v2517
      %v2519 = vlaneseq
      %v2520 = vshrl.u32 %v2519, 7
      %v2521 = vsub.s32 %v2518, %v2520
      %v2522 = vrot.slane %v2508, %v2521
      %v2523 = vcombine.high %v2499, 0.0
      %v2524 = vcombine.high %v2506, 0.0
      %v2525 = vcombine.high %v2515, 0.0
      %v2526 = vcombine.high %v2522, 0.0
      %2528 = vrot.lane.b32.xlu0 %v2523, 16
      %v2529 = vpop.permute.xlu0 %2528
      %2532 = vrot.lane.b32.xlu0 %v2506, 32
      %v2533 = vpop.permute.xlu0 %2532
      %2536 = vrot.lane.b32.xlu0 %v2524, 48
      %v2537 = vpop.permute.xlu0 %2536
      %2540 = vrot.lane.b32.xlu0 %v2515, 64
      %v2541 = vpop.permute.xlu0 %2540
      %2544 = vrot.lane.b32.xlu0 %v2525, 80
      %v2545 = vpop.permute.xlu0 %2544
      %2548 = vrot.lane.b32.xlu0 %v2522, 96
      %v2549 = vpop.permute.xlu0 %2548
      %2552 = vrot.lane.b32.xlu0 %v2526, 112
      %v2553 = vpop.permute.xlu0 %2552
      %v2555 = vsel %vm2009, %v2499, %v2529
      %v2556 = vsel %vm2155, %v2555, %v2533
      %v2557 = vsel %vm2157, %v2556, %v2537
      %v2558 = vsel %vm2159, %v2557, %v2541
      %v2559 = vsel %vm2161, %v2558, %v2545
      %v2560 = vsel %vm2163, %v2559, %v2549
      %v2561 = vsel %vm2165, %v2560, %v2553
      %v2563 = vsel %vm1955, %v2438, 0
      %v2566 = vsel %vm2287, %v2561, 0
      %2568 = vmatprep.subr.mxu0 0.0
      %2569 = vmatpush1.msra.mxu0 %v2566
      %2570 = vmatprep.subr.mxu0 0.0
      %2571 = vmatpush1.msra.mxu0 0.0
      %2572 = vmatprep.subr.mxu0 0.0
      %2573 = vmatpush1.msra.mxu0 0.0
      %2574 = vmatprep.subr.mxu0 0.0
      %2575 = vmatpush1.msra.mxu0 0.0
      %2576 = vmatprep.subr.mxu0 0.0
      %2577 = vmatpush1.msra.mxu0 0.0
      %2578 = vmatprep.subr.mxu0 0.0
      %2579 = vmatpush1.msra.mxu0 0.0
      %2580 = vmatprep.subr.mxu0 0.0
      %2581 = vmatpush1.msra.mxu0 0.0
      %2582 = vmatprep.subr.mxu0 0.0
      %2583 = vmatpush1.msra.mxu0 0.0
      %2584 = vmatprep.subr.mxu0 0.0
      %2585 = vmatpush1.msra.mxu0 0.0
      %2586 = vmatprep.subr.mxu0 0.0
      %2587 = vmatpush1.msra.mxu0 0.0
      %2588 = vmatprep.subr.mxu0 0.0
      %2589 = vmatpush1.msra.mxu0 0.0
      %2590 = vmatprep.subr.mxu0 0.0
      %2591 = vmatpush1.msra.mxu0 0.0
      %2592 = vmatprep.subr.mxu0 0.0
      %2593 = vmatpush1.msra.mxu0 0.0
      %2594 = vmatprep.subr.mxu0 0.0
      %2595 = vmatpush1.msra.mxu0 0.0
      %2596 = vmatprep.subr.mxu0 0.0
      %2597 = vmatpush1.msra.mxu0 0.0
      %2598 = vmatprep.subr.mxu0 0.0
      %2599 = vmatpush1.msra.mxu0 0.0
      %2600 = vmatprep.subr.mxu0 0.0
      %2601 = vmatpush1.msra.mxu0 0.0
      %2602 = vmatprep.subr.mxu0 0.0
      %2603 = vmatpush1.msra.mxu0 0.0
      %2604 = vmatprep.subr.mxu0 0.0
      %2605 = vmatpush1.msra.mxu0 0.0
      %2606 = vmatprep.subr.mxu0 0.0
      %2607 = vmatpush1.msra.mxu0 0.0
      %2608 = vmatprep.subr.mxu0 0.0
      %2609 = vmatpush1.msra.mxu0 0.0
      %2610 = vmatprep.subr.mxu0 0.0
      %2611 = vmatpush1.msra.mxu0 0.0
      %2612 = vmatprep.subr.mxu0 0.0
      %2613 = vmatpush1.msra.mxu0 0.0
      %2614 = vmatprep.subr.mxu0 0.0
      %2615 = vmatpush1.msra.mxu0 0.0
      %2616 = vmatprep.subr.mxu0 0.0
      %2617 = vmatpush1.msra.mxu0 0.0
      %2618 = vmatprep.subr.mxu0 0.0
      %2619 = vmatpush1.msra.mxu0 0.0
      %2620 = vmatprep.subr.mxu0 0.0
      %2621 = vmatpush1.msra.mxu0 0.0
      %2622 = vmatprep.subr.mxu0 0.0
      %2623 = vmatpush1.msra.mxu0 0.0
      %2624 = vmatprep.subr.mxu0 0.0
      %2625 = vmatpush1.msra.mxu0 0.0
      %2626 = vmatprep.subr.mxu0 0.0
      %2627 = vmatpush1.msra.mxu0 0.0
      %2628 = vmatprep.subr.mxu0 0.0
      %2629 = vmatpush1.msra.mxu0 0.0
      %2630 = vmatprep.subr.mxu0 0.0
      %2631 = vmatpush1.msra.mxu0 0.0
      %2632 = vmatprep.mubr.f32.mxu0 0.0
      %2633 = vmatmul.mubr.f32.gmra.mrb[0].mxu0 %v2563
      %v2634 = vpop.f32.mrb[0].mxu0
      %v2635 = vadd.f32 0.0, %v2634
      %v2636 = vpop.f32.mrb[0].mxu0
      %2637 = vdwg.mxu0
      %v2638 = vadd.f32 %v2434, %v2635
      %s2639 = scalar_lea.vmem %s1, 24
      %v2640 = vld [vmem:[%s2639] sm:$0xff]
      %v2641 = vld [vmem:[#allocation2 + $0x1] sm:$0xff]
      %v2642 = vld [vmem:[#allocation2 + $0x11] sm:$0xff]
      %v2643 = vld [vmem:[#allocation2 + $0x21] sm:$0xff]
      %v2644 = vld [vmem:[#allocation2 + $0x31] sm:$0xff]
      %2649 = vrot.lane.b32.xlu0 %v2641, 127
      %v2650 = vpop.permute.xlu0 %2649
      %2651 = vrot.lane.b32.xlu0 %v2642, 127
      %v2652 = vpop.permute.xlu0 %2651
      %2653 = vrot.lane.b32.xlu0 %v2643, 127
      %v2654 = vpop.permute.xlu0 %2653
      %2655 = vrot.lane.b32.xlu0 %v2644, 127
      %v2656 = vpop.permute.xlu0 %2655
      %v2661 = vcombine.low %v2650, %v2654
      %v2662 = vcombine.high %v2650, %v2654
      %v2664 = vunpack.c.l.s4 1983009808
      %v2665 = vunpack.c.0.s8 %v2664
      %v2666 = vlaneseq
      %v2667 = vshrl.u32 %v2666, 7
      %v2668 = vsub.s32 %v2665, %v2667
      %v2669 = vrot.slane %v2661, %v2668
      %v2671 = vunpack.c.l.s4 1983009808
      %v2672 = vunpack.c.0.s8 %v2671
      %v2673 = vlaneseq
      %v2674 = vshrl.u32 %v2673, 7
      %v2675 = vsub.s32 %v2672, %v2674
      %v2676 = vrot.slane %v2662, %v2675
      %v2677 = vcombine.low %v2652, %v2656
      %v2678 = vcombine.high %v2652, %v2656
      %v2680 = vunpack.c.l.s4 1983009808
      %v2681 = vunpack.c.0.s8 %v2680
      %v2682 = vlaneseq
      %v2683 = vshrl.u32 %v2682, 7
      %v2684 = vsub.s32 %v2681, %v2683
      %v2685 = vrot.slane %v2677, %v2684
      %v2687 = vunpack.c.l.s4 1983009808
      %v2688 = vunpack.c.0.s8 %v2687
      %v2689 = vlaneseq
      %v2690 = vshrl.u32 %v2689, 7
      %v2691 = vsub.s32 %v2688, %v2690
      %v2692 = vrot.slane %v2678, %v2691
      %v2693 = vcombine.low %v2669, %v2685
      %v2694 = vcombine.high %v2669, %v2685
      %v2696 = vunpack.c.l.s4 1934713408
      %v2697 = vunpack.c.0.s8 %v2696
      %v2698 = vlaneseq
      %v2699 = vshrl.u32 %v2698, 7
      %v2700 = vsub.s32 %v2697, %v2699
      %v2701 = vrot.slane %v2693, %v2700
      %v2703 = vunpack.c.l.s4 1934713408
      %v2704 = vunpack.c.0.s8 %v2703
      %v2705 = vlaneseq
      %v2706 = vshrl.u32 %v2705, 7
      %v2707 = vsub.s32 %v2704, %v2706
      %v2708 = vrot.slane %v2694, %v2707
      %v2709 = vcombine.low %v2676, %v2692
      %v2710 = vcombine.high %v2676, %v2692
      %v2712 = vunpack.c.l.s4 1934713408
      %v2713 = vunpack.c.0.s8 %v2712
      %v2714 = vlaneseq
      %v2715 = vshrl.u32 %v2714, 7
      %v2716 = vsub.s32 %v2713, %v2715
      %v2717 = vrot.slane %v2709, %v2716
      %v2719 = vunpack.c.l.s4 1934713408
      %v2720 = vunpack.c.0.s8 %v2719
      %v2721 = vlaneseq
      %v2722 = vshrl.u32 %v2721, 7
      %v2723 = vsub.s32 %v2720, %v2722
      %v2724 = vrot.slane %v2710, %v2723
      %v2725 = vcombine.high %v2701, 0.0
      %v2726 = vcombine.high %v2708, 0.0
      %v2727 = vcombine.high %v2717, 0.0
      %v2728 = vcombine.high %v2724, 0.0
      %2730 = vrot.lane.b32.xlu0 %v2725, 16
      %v2731 = vpop.permute.xlu0 %2730
      %2734 = vrot.lane.b32.xlu0 %v2708, 32
      %v2735 = vpop.permute.xlu0 %2734
      %2738 = vrot.lane.b32.xlu0 %v2726, 48
      %v2739 = vpop.permute.xlu0 %2738
      %2742 = vrot.lane.b32.xlu0 %v2717, 64
      %v2743 = vpop.permute.xlu0 %2742
      %2746 = vrot.lane.b32.xlu0 %v2727, 80
      %v2747 = vpop.permute.xlu0 %2746
      %2750 = vrot.lane.b32.xlu0 %v2724, 96
      %v2751 = vpop.permute.xlu0 %2750
      %2754 = vrot.lane.b32.xlu0 %v2728, 112
      %v2755 = vpop.permute.xlu0 %2754
      %v2757 = vsel %vm2009, %v2701, %v2731
      %v2758 = vsel %vm2155, %v2757, %v2735
      %v2759 = vsel %vm2157, %v2758, %v2739
      %v2760 = vsel %vm2159, %v2759, %v2743
      %v2761 = vsel %vm2161, %v2760, %v2747
      %v2762 = vsel %vm2163, %v2761, %v2751
      %v2763 = vsel %vm2165, %v2762, %v2755
      %v2765 = vsel %vm1955, %v2640, 0
      %v2768 = vsel %vm2287, %v2763, 0
      %2770 = vmatprep.subr.mxu0 0.0
      %2771 = vmatpush1.msra.mxu0 %v2768
      %2772 = vmatprep.subr.mxu0 0.0
      %2773 = vmatpush1.msra.mxu0 0.0
      %2774 = vmatprep.subr.mxu0 0.0
      %2775 = vmatpush1.msra.mxu0 0.0
      %2776 = vmatprep.subr.mxu0 0.0
      %2777 = vmatpush1.msra.mxu0 0.0
      %2778 = vmatprep.subr.mxu0 0.0
      %2779 = vmatpush1.msra.mxu0 0.0
      %2780 = vmatprep.subr.mxu0 0.0
      %2781 = vmatpush1.msra.mxu0 0.0
      %2782 = vmatprep.subr.mxu0 0.0
      %2783 = vmatpush1.msra.mxu0 0.0
      %2784 = vmatprep.subr.mxu0 0.0
      %2785 = vmatpush1.msra.mxu0 0.0
      %2786 = vmatprep.subr.mxu0 0.0
      %2787 = vmatpush1.msra.mxu0 0.0
      %2788 = vmatprep.subr.mxu0 0.0
      %2789 = vmatpush1.msra.mxu0 0.0
      %2790 = vmatprep.subr.mxu0 0.0
      %2791 = vmatpush1.msra.mxu0 0.0
      %2792 = vmatprep.subr.mxu0 0.0
      %2793 = vmatpush1.msra.mxu0 0.0
      %2794 = vmatprep.subr.mxu0 0.0
      %2795 = vmatpush1.msra.mxu0 0.0
      %2796 = vmatprep.subr.mxu0 0.0
      %2797 = vmatpush1.msra.mxu0 0.0
      %2798 = vmatprep.subr.mxu0 0.0
      %2799 = vmatpush1.msra.mxu0 0.0
      %2800 = vmatprep.subr.mxu0 0.0
      %2801 = vmatpush1.msra.mxu0 0.0
      %2802 = vmatprep.subr.mxu0 0.0
      %2803 = vmatpush1.msra.mxu0 0.0
      %2804 = vmatprep.subr.mxu0 0.0
      %2805 = vmatpush1.msra.mxu0 0.0
      %2806 = vmatprep.subr.mxu0 0.0
      %2807 = vmatpush1.msra.mxu0 0.0
      %2808 = vmatprep.subr.mxu0 0.0
      %2809 = vmatpush1.msra.mxu0 0.0
      %2810 = vmatprep.subr.mxu0 0.0
      %2811 = vmatpush1.msra.mxu0 0.0
      %2812 = vmatprep.subr.mxu0 0.0
      %2813 = vmatpush1.msra.mxu0 0.0
      %2814 = vmatprep.subr.mxu0 0.0
      %2815 = vmatpush1.msra.mxu0 0.0
      %2816 = vmatprep.subr.mxu0 0.0
      %2817 = vmatpush1.msra.mxu0 0.0
      %2818 = vmatprep.subr.mxu0 0.0
      %2819 = vmatpush1.msra.mxu0 0.0
      %2820 = vmatprep.subr.mxu0 0.0
      %2821 = vmatpush1.msra.mxu0 0.0
      %2822 = vmatprep.subr.mxu0 0.0
      %2823 = vmatpush1.msra.mxu0 0.0
      %2824 = vmatprep.subr.mxu0 0.0
      %2825 = vmatpush1.msra.mxu0 0.0
      %2826 = vmatprep.subr.mxu0 0.0
      %2827 = vmatpush1.msra.mxu0 0.0
      %2828 = vmatprep.subr.mxu0 0.0
      %2829 = vmatpush1.msra.mxu0 0.0
      %2830 = vmatprep.subr.mxu0 0.0
      %2831 = vmatpush1.msra.mxu0 0.0
      %2832 = vmatprep.subr.mxu0 0.0
      %2833 = vmatpush1.msra.mxu0 0.0
      %2834 = vmatprep.mubr.f32.mxu0 0.0
      %2835 = vmatmul.mubr.f32.gmra.mrb[0].mxu0 %v2765
      %v2836 = vpop.f32.mrb[0].mxu0
      %v2837 = vadd.f32 0.0, %v2836
      %v2838 = vpop.f32.mrb[0].mxu0
      %2839 = vdwg.mxu0
      %v2840 = vadd.f32 %v2638, %v2837
      %s2841 = scalar_lea.vmem %s1, 32
      %v2842 = vld [vmem:[%s2841] sm:$0xff]
      %v2843 = vld [vmem:[#allocation2 + $0x1] sm:$0xff]
      %v2844 = vld [vmem:[#allocation2 + $0x11] sm:$0xff]
      %v2845 = vld [vmem:[#allocation2 + $0x21] sm:$0xff]
      %v2846 = vld [vmem:[#allocation2 + $0x31] sm:$0xff]
      %2851 = vrot.lane.b32.xlu0 %v2843, 126
      %v2852 = vpop.permute.xlu0 %2851
      %2853 = vrot.lane.b32.xlu0 %v2844, 126
      %v2854 = vpop.permute.xlu0 %2853
      %2855 = vrot.lane.b32.xlu0 %v2845, 126
      %v2856 = vpop.permute.xlu0 %2855
      %2857 = vrot.lane.b32.xlu0 %v2846, 126
      %v2858 = vpop.permute.xlu0 %2857
      %v2863 = vcombine.low %v2852, %v2856
      %v2864 = vcombine.high %v2852, %v2856
      %v2866 = vunpack.c.l.s4 1983009808
      %v2867 = vunpack.c.0.s8 %v2866
      %v2868 = vlaneseq
      %v2869 = vshrl.u32 %v2868, 7
      %v2870 = vsub.s32 %v2867, %v2869
      %v2871 = vrot.slane %v2863, %v2870
      %v2873 = vunpack.c.l.s4 1983009808
      %v2874 = vunpack.c.0.s8 %v2873
      %v2875 = vlaneseq
      %v2876 = vshrl.u32 %v2875, 7
      %v2877 = vsub.s32 %v2874, %v2876
      %v2878 = vrot.slane %v2864, %v2877
      %v2879 = vcombine.low %v2854, %v2858
      %v2880 = vcombine.high %v2854, %v2858
      %v2882 = vunpack.c.l.s4 1983009808
      %v2883 = vunpack.c.0.s8 %v2882
      %v2884 = vlaneseq
      %v2885 = vshrl.u32 %v2884, 7
      %v2886 = vsub.s32 %v2883, %v2885
      %v2887 = vrot.slane %v2879, %v2886
      %v2889 = vunpack.c.l.s4 1983009808
      %v2890 = vunpack.c.0.s8 %v2889
      %v2891 = vlaneseq
      %v2892 = vshrl.u32 %v2891, 7
      %v2893 = vsub.s32 %v2890, %v2892
      %v2894 = vrot.slane %v2880, %v2893
      %v2895 = vcombine.low %v2871, %v2887
      %v2896 = vcombine.high %v2871, %v2887
      %v2898 = vunpack.c.l.s4 1934713408
      %v2899 = vunpack.c.0.s8 %v2898
      %v2900 = vlaneseq
      %v2901 = vshrl.u32 %v2900, 7
      %v2902 = vsub.s32 %v2899, %v2901
      %v2903 = vrot.slane %v2895, %v2902
      %v2905 = vunpack.c.l.s4 1934713408
      %v2906 = vunpack.c.0.s8 %v2905
      %v2907 = vlaneseq
      %v2908 = vshrl.u32 %v2907, 7
      %v2909 = vsub.s32 %v2906, %v2908
      %v2910 = vrot.slane %v2896, %v2909
      %v2911 = vcombine.low %v2878, %v2894
      %v2912 = vcombine.high %v2878, %v2894
      %v2914 = vunpack.c.l.s4 1934713408
      %v2915 = vunpack.c.0.s8 %v2914
      %v2916 = vlaneseq
      %v2917 = vshrl.u32 %v2916, 7
      %v2918 = vsub.s32 %v2915, %v2917
      %v2919 = vrot.slane %v2911, %v2918
      %v2921 = vunpack.c.l.s4 1934713408
      %v2922 = vunpack.c.0.s8 %v2921
      %v2923 = vlaneseq
      %v2924 = vshrl.u32 %v2923, 7
      %v2925 = vsub.s32 %v2922, %v2924
      %v2926 = vrot.slane %v2912, %v2925
      %v2927 = vcombine.high %v2903, 0.0
      %v2928 = vcombine.high %v2910, 0.0
      %v2929 = vcombine.high %v2919, 0.0
      %v2930 = vcombine.high %v2926, 0.0
      %2932 = vrot.lane.b32.xlu0 %v2927, 16
      %v2933 = vpop.permute.xlu0 %2932
      %2936 = vrot.lane.b32.xlu0 %v2910, 32
      %v2937 = vpop.permute.xlu0 %2936
      %2940 = vrot.lane.b32.xlu0 %v2928, 48
      %v2941 = vpop.permute.xlu0 %2940
      %2944 = vrot.lane.b32.xlu0 %v2919, 64
      %v2945 = vpop.permute.xlu0 %2944
      %2948 = vrot.lane.b32.xlu0 %v2929, 80
      %v2949 = vpop.permute.xlu0 %2948
      %2952 = vrot.lane.b32.xlu0 %v2926, 96
      %v2953 = vpop.permute.xlu0 %2952
      %2956 = vrot.lane.b32.xlu0 %v2930, 112
      %v2957 = vpop.permute.xlu0 %2956
      %v2959 = vsel %vm2009, %v2903, %v2933
      %v2960 = vsel %vm2155, %v2959, %v2937
      %v2961 = vsel %vm2157, %v2960, %v2941
      %v2962 = vsel %vm2159, %v2961, %v2945
      %v2963 = vsel %vm2161, %v2962, %v2949
      %v2964 = vsel %vm2163, %v2963, %v2953
      %v2965 = vsel %vm2165, %v2964, %v2957
      %v2967 = vsel %vm1955, %v2842, 0
      %v2970 = vsel %vm2287, %v2965, 0
      %2972 = vmatprep.subr.mxu0 0.0
      %2973 = vmatpush1.msra.mxu0 %v2970
      %2974 = vmatprep.subr.mxu0 0.0
      %2975 = vmatpush1.msra.mxu0 0.0
      %2976 = vmatprep.subr.mxu0 0.0
      %2977 = vmatpush1.msra.mxu0 0.0
      %2978 = vmatprep.subr.mxu0 0.0
      %2979 = vmatpush1.msra.mxu0 0.0
      %2980 = vmatprep.subr.mxu0 0.0
      %2981 = vmatpush1.msra.mxu0 0.0
      %2982 = vmatprep.subr.mxu0 0.0
      %2983 = vmatpush1.msra.mxu0 0.0
      %2984 = vmatprep.subr.mxu0 0.0
      %2985 = vmatpush1.msra.mxu0 0.0
      %2986 = vmatprep.subr.mxu0 0.0
      %2987 = vmatpush1.msra.mxu0 0.0
      %2988 = vmatprep.subr.mxu0 0.0
      %2989 = vmatpush1.msra.mxu0 0.0
      %2990 = vmatprep.subr.mxu0 0.0
      %2991 = vmatpush1.msra.mxu0 0.0
      %2992 = vmatprep.subr.mxu0 0.0
      %2993 = vmatpush1.msra.mxu0 0.0
      %2994 = vmatprep.subr.mxu0 0.0
      %2995 = vmatpush1.msra.mxu0 0.0
      %2996 = vmatprep.subr.mxu0 0.0
      %2997 = vmatpush1.msra.mxu0 0.0
      %2998 = vmatprep.subr.mxu0 0.0
      %2999 = vmatpush1.msra.mxu0 0.0
      %3000 = vmatprep.subr.mxu0 0.0
      %3001 = vmatpush1.msra.mxu0 0.0
      %3002 = vmatprep.subr.mxu0 0.0
      %3003 = vmatpush1.msra.mxu0 0.0
      %3004 = vmatprep.subr.mxu0 0.0
      %3005 = vmatpush1.msra.mxu0 0.0
      %3006 = vmatprep.subr.mxu0 0.0
      %3007 = vmatpush1.msra.mxu0 0.0
      %3008 = vmatprep.subr.mxu0 0.0
      %3009 = vmatpush1.msra.mxu0 0.0
      %3010 = vmatprep.subr.mxu0 0.0
      %3011 = vmatpush1.msra.mxu0 0.0
      %3012 = vmatprep.subr.mxu0 0.0
      %3013 = vmatpush1.msra.mxu0 0.0
      %3014 = vmatprep.subr.mxu0 0.0
      %3015 = vmatpush1.msra.mxu0 0.0
      %3016 = vmatprep.subr.mxu0 0.0
      %3017 = vmatpush1.msra.mxu0 0.0
      %3018 = vmatprep.subr.mxu0 0.0
      %3019 = vmatpush1.msra.mxu0 0.0
      %3020 = vmatprep.subr.mxu0 0.0
      %3021 = vmatpush1.msra.mxu0 0.0
      %3022 = vmatprep.subr.mxu0 0.0
      %3023 = vmatpush1.msra.mxu0 0.0
      %3024 = vmatprep.subr.mxu0 0.0
      %3025 = vmatpush1.msra.mxu0 0.0
      %3026 = vmatprep.subr.mxu0 0.0
      %3027 = vmatpush1.msra.mxu0 0.0
      %3028 = vmatprep.subr.mxu0 0.0
      %3029 = vmatpush1.msra.mxu0 0.0
      %3030 = vmatprep.subr.mxu0 0.0
      %3031 = vmatpush1.msra.mxu0 0.0
      %3032 = vmatprep.subr.mxu0 0.0
      %3033 = vmatpush1.msra.mxu0 0.0
      %3034 = vmatprep.subr.mxu0 0.0
      %3035 = vmatpush1.msra.mxu0 0.0
      %3036 = vmatprep.mubr.f32.mxu0 0.0
      %3037 = vmatmul.mubr.f32.gmra.mrb[0].mxu0 %v2967
      %v3038 = vpop.f32.mrb[0].mxu0
      %v3039 = vadd.f32 0.0, %v3038
      %v3040 = vpop.f32.mrb[0].mxu0
      %3041 = vdwg.mxu0
      %v3042 = vadd.f32 %v2840, %v3039
      %s3043 = scalar_lea.vmem %s1, 40
      %v3044 = vld [vmem:[%s3043] sm:$0xff]
      %v3045 = vld [vmem:[#allocation2 + $0x1] sm:$0xff]
      %v3046 = vld [vmem:[#allocation2 + $0x11] sm:$0xff]
      %v3047 = vld [vmem:[#allocation2 + $0x21] sm:$0xff]
      %v3048 = vld [vmem:[#allocation2 + $0x31] sm:$0xff]
      %3053 = vrot.lane.b32.xlu0 %v3045, 125
      %v3054 = vpop.permute.xlu0 %3053
      %3055 = vrot.lane.b32.xlu0 %v3046, 125
      %v3056 = vpop.permute.xlu0 %3055
      %3057 = vrot.lane.b32.xlu0 %v3047, 125
      %v3058 = vpop.permute.xlu0 %3057
      %3059 = vrot.lane.b32.xlu0 %v3048, 125
      %v3060 = vpop.permute.xlu0 %3059
      %v3065 = vcombine.low %v3054, %v3058
      %v3066 = vcombine.high %v3054, %v3058
      %v3068 = vunpack.c.l.s4 1983009808
      %v3069 = vunpack.c.0.s8 %v3068
      %v3070 = vlaneseq
      %v3071 = vshrl.u32 %v3070, 7
      %v3072 = vsub.s32 %v3069, %v3071
      %v3073 = vrot.slane %v3065, %v3072
      %v3075 = vunpack.c.l.s4 1983009808
      %v3076 = vunpack.c.0.s8 %v3075
      %v3077 = vlaneseq
      %v3078 = vshrl.u32 %v3077, 7
      %v3079 = vsub.s32 %v3076, %v3078
      %v3080 = vrot.slane %v3066, %v3079
      %v3081 = vcombine.low %v3056, %v3060
      %v3082 = vcombine.high %v3056, %v3060
      %v3084 = vunpack.c.l.s4 1983009808
      %v3085 = vunpack.c.0.s8 %v3084
      %v3086 = vlaneseq
      %v3087 = vshrl.u32 %v3086, 7
      %v3088 = vsub.s32 %v3085, %v3087
      %v3089 = vrot.slane %v3081, %v3088
      %v3091 = vunpack.c.l.s4 1983009808
      %v3092 = vunpack.c.0.s8 %v3091
      %v3093 = vlaneseq
      %v3094 = vshrl.u32 %v3093, 7
      %v3095 = vsub.s32 %v3092, %v3094
      %v3096 = vrot.slane %v3082, %v3095
      %v3097 = vcombine.low %v3073, %v3089
      %v3098 = vcombine.high %v3073, %v3089
      %v3100 = vunpack.c.l.s4 1934713408
      %v3101 = vunpack.c.0.s8 %v3100
      %v3102 = vlaneseq
      %v3103 = vshrl.u32 %v3102, 7
      %v3104 = vsub.s32 %v3101, %v3103
      %v3105 = vrot.slane %v3097, %v3104
      %v3107 = vunpack.c.l.s4 1934713408
      %v3108 = vunpack.c.0.s8 %v3107
      %v3109 = vlaneseq
      %v3110 = vshrl.u32 %v3109, 7
      %v3111 = vsub.s32 %v3108, %v3110
      %v3112 = vrot.slane %v3098, %v3111
      %v3113 = vcombine.low %v3080, %v3096
      %v3114 = vcombine.high %v3080, %v3096
      %v3116 = vunpack.c.l.s4 1934713408
      %v3117 = vunpack.c.0.s8 %v3116
      %v3118 = vlaneseq
      %v3119 = vshrl.u32 %v3118, 7
      %v3120 = vsub.s32 %v3117, %v3119
      %v3121 = vrot.slane %v3113, %v3120
      %v3123 = vunpack.c.l.s4 1934713408
      %v3124 = vunpack.c.0.s8 %v3123
      %v3125 = vlaneseq
      %v3126 = vshrl.u32 %v3125, 7
      %v3127 = vsub.s32 %v3124, %v3126
      %v3128 = vrot.slane %v3114, %v3127
      %v3129 = vcombine.high %v3105, 0.0
      %v3130 = vcombine.high %v3112, 0.0
      %v3131 = vcombine.high %v3121, 0.0
      %v3132 = vcombine.high %v3128, 0.0
      %3134 = vrot.lane.b32.xlu0 %v3129, 16
      %v3135 = vpop.permute.xlu0 %3134
      %3138 = vrot.lane.b32.xlu0 %v3112, 32
      %v3139 = vpop.permute.xlu0 %3138
      %3142 = vrot.lane.b32.xlu0 %v3130, 48
      %v3143 = vpop.permute.xlu0 %3142
      %3146 = vrot.lane.b32.xlu0 %v3121, 64
      %v3147 = vpop.permute.xlu0 %3146
      %3150 = vrot.lane.b32.xlu0 %v3131, 80
      %v3151 = vpop.permute.xlu0 %3150
      %3154 = vrot.lane.b32.xlu0 %v3128, 96
      %v3155 = vpop.permute.xlu0 %3154
      %3158 = vrot.lane.b32.xlu0 %v3132, 112
      %v3159 = vpop.permute.xlu0 %3158
      %v3161 = vsel %vm2009, %v3105, %v3135
      %v3162 = vsel %vm2155, %v3161, %v3139
      %v3163 = vsel %vm2157, %v3162, %v3143
      %v3164 = vsel %vm2159, %v3163, %v3147
      %v3165 = vsel %vm2161, %v3164, %v3151
      %v3166 = vsel %vm2163, %v3165, %v3155
      %v3167 = vsel %vm2165, %v3166, %v3159
      %v3169 = vsel %vm1955, %v3044, 0
      %v3172 = vsel %vm2287, %v3167, 0
      %3174 = vmatprep.subr.mxu0 0.0
      %3175 = vmatpush1.msra.mxu0 %v3172
      %3176 = vmatprep.subr.mxu0 0.0
      %3177 = vmatpush1.msra.mxu0 0.0
      %3178 = vmatprep.subr.mxu0 0.0
      %3179 = vmatpush1.msra.mxu0 0.0
      %3180 = vmatprep.subr.mxu0 0.0
      %3181 = vmatpush1.msra.mxu0 0.0
      %3182 = vmatprep.subr.mxu0 0.0
      %3183 = vmatpush1.msra.mxu0 0.0
      %3184 = vmatprep.subr.mxu0 0.0
      %3185 = vmatpush1.msra.mxu0 0.0
      %3186 = vmatprep.subr.mxu0 0.0
      %3187 = vmatpush1.msra.mxu0 0.0
      %3188 = vmatprep.subr.mxu0 0.0
      %3189 = vmatpush1.msra.mxu0 0.0
      %3190 = vmatprep.subr.mxu0 0.0
      %3191 = vmatpush1.msra.mxu0 0.0
      %3192 = vmatprep.subr.mxu0 0.0
      %3193 = vmatpush1.msra.mxu0 0.0
      %3194 = vmatprep.subr.mxu0 0.0
      %3195 = vmatpush1.msra.mxu0 0.0
      %3196 = vmatprep.subr.mxu0 0.0
      %3197 = vmatpush1.msra.mxu0 0.0
      %3198 = vmatprep.subr.mxu0 0.0
      %3199 = vmatpush1.msra.mxu0 0.0
      %3200 = vmatprep.subr.mxu0 0.0
      %3201 = vmatpush1.msra.mxu0 0.0
      %3202 = vmatprep.subr.mxu0 0.0
      %3203 = vmatpush1.msra.mxu0 0.0
      %3204 = vmatprep.subr.mxu0 0.0
      %3205 = vmatpush1.msra.mxu0 0.0
      %3206 = vmatprep.subr.mxu0 0.0
      %3207 = vmatpush1.msra.mxu0 0.0
      %3208 = vmatprep.subr.mxu0 0.0
      %3209 = vmatpush1.msra.mxu0 0.0
      %3210 = vmatprep.subr.mxu0 0.0
      %3211 = vmatpush1.msra.mxu0 0.0
      %3212 = vmatprep.subr.mxu0 0.0
      %3213 = vmatpush1.msra.mxu0 0.0
      %3214 = vmatprep.subr.mxu0 0.0
      %3215 = vmatpush1.msra.mxu0 0.0
      %3216 = vmatprep.subr.mxu0 0.0
      %3217 = vmatpush1.msra.mxu0 0.0
      %3218 = vmatprep.subr.mxu0 0.0
      %3219 = vmatpush1.msra.mxu0 0.0
      %3220 = vmatprep.subr.mxu0 0.0
      %3221 = vmatpush1.msra.mxu0 0.0
      %3222 = vmatprep.subr.mxu0 0.0
      %3223 = vmatpush1.msra.mxu0 0.0
      %3224 = vmatprep.subr.mxu0 0.0
      %3225 = vmatpush1.msra.mxu0 0.0
      %3226 = vmatprep.subr.mxu0 0.0
      %3227 = vmatpush1.msra.mxu0 0.0
      %3228 = vmatprep.subr.mxu0 0.0
      %3229 = vmatpush1.msra.mxu0 0.0
      %3230 = vmatprep.subr.mxu0 0.0
      %3231 = vmatpush1.msra.mxu0 0.0
      %3232 = vmatprep.subr.mxu0 0.0
      %3233 = vmatpush1.msra.mxu0 0.0
      %3234 = vmatprep.subr.mxu0 0.0
      %3235 = vmatpush1.msra.mxu0 0.0
      %3236 = vmatprep.subr.mxu0 0.0
      %3237 = vmatpush1.msra.mxu0 0.0
      %3238 = vmatprep.mubr.f32.mxu0 0.0
      %3239 = vmatmul.mubr.f32.gmra.mrb[0].mxu0 %v3169
      %v3240 = vpop.f32.mrb[0].mxu0
      %v3241 = vadd.f32 0.0, %v3240
      %v3242 = vpop.f32.mrb[0].mxu0
      %3243 = vdwg.mxu0
      %v3244 = vadd.f32 %v3042, %v3241
      %vm3245 = vcmp.gt.f32.partialorder %v3244, 0.0
      %v3246 = vmul.f32 %v3244, 0.1
      %v3247 = vsel %vm3245, %v3244, %v3246
      %3249 = vrot.lane.b32.xlu0 %v3247, 112
      %v3250 = vpop.permute.xlu0 %3249
      %3252 = vrot.lane.b32.xlu0 %v3247, 96
      %v3253 = vpop.permute.xlu0 %3252
      %3255 = vrot.lane.b32.xlu0 %v3247, 80
      %v3256 = vpop.permute.xlu0 %3255
      %3258 = vrot.lane.b32.xlu0 %v3247, 64
      %v3259 = vpop.permute.xlu0 %3258
      %3261 = vrot.lane.b32.xlu0 %v3247, 48
      %v3262 = vpop.permute.xlu0 %3261
      %3264 = vrot.lane.b32.xlu0 %v3247, 32
      %v3265 = vpop.permute.xlu0 %3264
      %3267 = vrot.lane.b32.xlu0 %v3247, 16
      %v3268 = vpop.permute.xlu0 %3267
      %v3270 = vcombine.low %v3247, %v3253
      %v3271 = vcombine.high %v3247, %v3253
      %v3273 = vunpack.c.l.s4 1983009808
      %v3274 = vunpack.c.0.s8 %v3273
      %v3275 = vlaneseq
      %v3276 = vshrl.u32 %v3275, 7
      %v3277 = vsub.s32 %v3274, %v3276
      %v3278 = vrot.slane %v3270, %v3277
      %v3280 = vunpack.c.l.s4 1983009808
      %v3281 = vunpack.c.0.s8 %v3280
      %v3282 = vlaneseq
      %v3283 = vshrl.u32 %v3282, 7
      %v3284 = vsub.s32 %v3281, %v3283
      %v3285 = vrot.slane %v3271, %v3284
      %v3286 = vcombine.low %v3250, %v3256
      %v3287 = vcombine.high %v3250, %v3256
      %v3289 = vunpack.c.l.s4 1983009808
      %v3290 = vunpack.c.0.s8 %v3289
      %v3291 = vlaneseq
      %v3292 = vshrl.u32 %v3291, 7
      %v3293 = vsub.s32 %v3290, %v3292
      %v3294 = vrot.slane %v3286, %v3293
      %v3296 = vunpack.c.l.s4 1983009808
      %v3297 = vunpack.c.0.s8 %v3296
      %v3298 = vlaneseq
      %v3299 = vshrl.u32 %v3298, 7
      %v3300 = vsub.s32 %v3297, %v3299
      %v3301 = vrot.slane %v3287, %v3300
      %v3302 = vcombine.low %v3259, %v3265
      %v3303 = vcombine.high %v3259, %v3265
      %v3305 = vunpack.c.l.s4 1983009808
      %v3306 = vunpack.c.0.s8 %v3305
      %v3307 = vlaneseq
      %v3308 = vshrl.u32 %v3307, 7
      %v3309 = vsub.s32 %v3306, %v3308
      %v3310 = vrot.slane %v3302, %v3309
      %v3312 = vunpack.c.l.s4 1983009808
      %v3313 = vunpack.c.0.s8 %v3312
      %v3314 = vlaneseq
      %v3315 = vshrl.u32 %v3314, 7
      %v3316 = vsub.s32 %v3313, %v3315
      %v3317 = vrot.slane %v3303, %v3316
      %v3318 = vcombine.low %v3262, %v3268
      %v3319 = vcombine.high %v3262, %v3268
      %v3321 = vunpack.c.l.s4 1983009808
      %v3322 = vunpack.c.0.s8 %v3321
      %v3323 = vlaneseq
      %v3324 = vshrl.u32 %v3323, 7
      %v3325 = vsub.s32 %v3322, %v3324
      %v3326 = vrot.slane %v3318, %v3325
      %v3328 = vunpack.c.l.s4 1983009808
      %v3329 = vunpack.c.0.s8 %v3328
      %v3330 = vlaneseq
      %v3331 = vshrl.u32 %v3330, 7
      %v3332 = vsub.s32 %v3329, %v3331
      %v3333 = vrot.slane %v3319, %v3332
      %v3334 = vcombine.low %v3278, %v3294
      %v3335 = vcombine.high %v3278, %v3294
      %v3337 = vunpack.c.l.s4 1934713408
      %v3338 = vunpack.c.0.s8 %v3337
      %v3339 = vlaneseq
      %v3340 = vshrl.u32 %v3339, 7
      %v3341 = vsub.s32 %v3338, %v3340
      %v3342 = vrot.slane %v3334, %v3341
      %v3344 = vunpack.c.l.s4 1934713408
      %v3345 = vunpack.c.0.s8 %v3344
      %v3346 = vlaneseq
      %v3347 = vshrl.u32 %v3346, 7
      %v3348 = vsub.s32 %v3345, %v3347
      %v3349 = vrot.slane %v3335, %v3348
      %v3350 = vcombine.low %v3285, %v3301
      %v3351 = vcombine.high %v3285, %v3301
      %v3353 = vunpack.c.l.s4 1934713408
      %v3354 = vunpack.c.0.s8 %v3353
      %v3355 = vlaneseq
      %v3356 = vshrl.u32 %v3355, 7
      %v3357 = vsub.s32 %v3354, %v3356
      %v3358 = vrot.slane %v3350, %v3357
      %v3360 = vunpack.c.l.s4 1934713408
      %v3361 = vunpack.c.0.s8 %v3360
      %v3362 = vlaneseq
      %v3363 = vshrl.u32 %v3362, 7
      %v3364 = vsub.s32 %v3361, %v3363
      %v3365 = vrot.slane %v3351, %v3364
      %v3366 = vcombine.low %v3310, %v3326
      %v3367 = vcombine.high %v3310, %v3326
      %v3369 = vunpack.c.l.s4 1934713408
      %v3370 = vunpack.c.0.s8 %v3369
      %v3371 = vlaneseq
      %v3372 = vshrl.u32 %v3371, 7
      %v3373 = vsub.s32 %v3370, %v3372
      %v3374 = vrot.slane %v3366, %v3373
      %v3376 = vunpack.c.l.s4 1934713408
      %v3377 = vunpack.c.0.s8 %v3376
      %v3378 = vlaneseq
      %v3379 = vshrl.u32 %v3378, 7
      %v3380 = vsub.s32 %v3377, %v3379
      %v3381 = vrot.slane %v3367, %v3380
      %v3382 = vcombine.low %v3317, %v3333
      %v3383 = vcombine.high %v3317, %v3333
      %v3385 = vunpack.c.l.s4 1934713408
      %v3386 = vunpack.c.0.s8 %v3385
      %v3387 = vlaneseq
      %v3388 = vshrl.u32 %v3387, 7
      %v3389 = vsub.s32 %v3386, %v3388
      %v3390 = vrot.slane %v3382, %v3389
      %v3392 = vunpack.c.l.s4 1934713408
      %v3393 = vunpack.c.0.s8 %v3392
      %v3394 = vlaneseq
      %v3395 = vshrl.u32 %v3394, 7
      %v3396 = vsub.s32 %v3393, %v3395
      %v3397 = vrot.slane %v3383, %v3396
      %v3398 = vcombine.low %v3342, %v3374
      %v3399 = vcombine.high %v3342, %v3374
      %v3400 = vcombine.low %v3349, %v3381
      %v3401 = vcombine.high %v3349, %v3381
      %v3402 = vcombine.low %v3358, %v3390
      %v3403 = vcombine.high %v3358, %v3390
      %v3404 = vcombine.low %v3365, %v3397
      %v3405 = vcombine.high %v3365, %v3397
      %3406 = vst.msk [vmem:[%s163] sm:$0xff] %vm2009, %v3398
      %3407 = vst.msk [vmem:[%s163 + $0x8] sm:$0xff] %vm2009, %v3399
      %3408 = vst.msk [vmem:[%s163 + $0x10] sm:$0xff] %vm2009, %v3400
      %3409 = vst.msk [vmem:[%s163 + $0x18] sm:$0xff] %vm2009, %v3401
      %3410 = vst.msk [vmem:[%s163 + $0x20] sm:$0xff] %vm2009, %v3402
      %3411 = vst.msk [vmem:[%s163 + $0x28] sm:$0xff] %vm2009, %v3403
      %3412 = vst.msk [vmem:[%s163 + $0x30] sm:$0xff] %vm2009, %v3404
      %3413 = vst.msk [vmem:[%s163 + $0x38] sm:$0xff] %vm2009, %v3405
      %s3414 = scalar_lea.vmem %s1, 48
      %v3415 = vld [vmem:[%s3414] sm:$0xff]
      %v3416 = vld [vmem:[#allocation2 + $0x1] sm:$0xff]
      %v3417 = vld [vmem:[#allocation2 + $0x11] sm:$0xff]
      %v3418 = vld [vmem:[#allocation2 + $0x21] sm:$0xff]
      %v3419 = vld [vmem:[#allocation2 + $0x31] sm:$0xff]
      %3424 = vrot.lane.b32.xlu0 %v3416, 127
      %v3425 = vpop.permute.xlu0 %3424
      %3426 = vrot.lane.b32.xlu0 %v3417, 127
      %v3427 = vpop.permute.xlu0 %3426
      %3428 = vrot.lane.b32.xlu0 %v3418, 127
      %v3429 = vpop.permute.xlu0 %3428
      %3430 = vrot.lane.b32.xlu0 %v3419, 127
      %v3431 = vpop.permute.xlu0 %3430
      %v3436 = vcombine.low %v3425, %v3429
      %v3437 = vcombine.high %v3425, %v3429
      %v3439 = vunpack.c.l.s4 1983009808
      %v3440 = vunpack.c.0.s8 %v3439
      %v3441 = vlaneseq
      %v3442 = vshrl.u32 %v3441, 7
      %v3443 = vsub.s32 %v3440, %v3442
      %v3444 = vrot.slane %v3436, %v3443
      %v3446 = vunpack.c.l.s4 1983009808
      %v3447 = vunpack.c.0.s8 %v3446
      %v3448 = vlaneseq
      %v3449 = vshrl.u32 %v3448, 7
      %v3450 = vsub.s32 %v3447, %v3449
      %v3451 = vrot.slane %v3437, %v3450
      %v3452 = vcombine.low %v3427, %v3431
      %v3453 = vcombine.high %v3427, %v3431
      %v3455 = vunpack.c.l.s4 1983009808
      %v3456 = vunpack.c.0.s8 %v3455
      %v3457 = vlaneseq
      %v3458 = vshrl.u32 %v3457, 7
      %v3459 = vsub.s32 %v3456, %v3458
      %v3460 = vrot.slane %v3452, %v3459
      %v3462 = vunpack.c.l.s4 1983009808
      %v3463 = vunpack.c.0.s8 %v3462
      %v3464 = vlaneseq
      %v3465 = vshrl.u32 %v3464, 7
      %v3466 = vsub.s32 %v3463, %v3465
      %v3467 = vrot.slane %v3453, %v3466
      %v3468 = vcombine.low %v3444, %v3460
      %v3469 = vcombine.high %v3444, %v3460
      %v3471 = vunpack.c.l.s4 1934713408
      %v3472 = vunpack.c.0.s8 %v3471
      %v3473 = vlaneseq
      %v3474 = vshrl.u32 %v3473, 7
      %v3475 = vsub.s32 %v3472, %v3474
      %v3476 = vrot.slane %v3468, %v3475
      %v3478 = vunpack.c.l.s4 1934713408
      %v3479 = vunpack.c.0.s8 %v3478
      %v3480 = vlaneseq
      %v3481 = vshrl.u32 %v3480, 7
      %v3482 = vsub.s32 %v3479, %v3481
      %v3483 = vrot.slane %v3469, %v3482
      %v3484 = vcombine.low %v3451, %v3467
      %v3485 = vcombine.high %v3451, %v3467
      %v3487 = vunpack.c.l.s4 1934713408
      %v3488 = vunpack.c.0.s8 %v3487
      %v3489 = vlaneseq
      %v3490 = vshrl.u32 %v3489, 7
      %v3491 = vsub.s32 %v3488, %v3490
      %v3492 = vrot.slane %v3484, %v3491
      %v3494 = vunpack.c.l.s4 1934713408
      %v3495 = vunpack.c.0.s8 %v3494
      %v3496 = vlaneseq
      %v3497 = vshrl.u32 %v3496, 7
      %v3498 = vsub.s32 %v3495, %v3497
      %v3499 = vrot.slane %v3485, %v3498
      %v3500 = vcombine.high %v3476, 0.0
      %v3501 = vcombine.high %v3483, 0.0
      %v3502 = vcombine.high %v3492, 0.0
      %v3503 = vcombine.high %v3499, 0.0
      %3505 = vrot.lane.b32.xlu0 %v3500, 16
      %v3506 = vpop.permute.xlu0 %3505
      %3509 = vrot.lane.b32.xlu0 %v3483, 32
      %v3510 = vpop.permute.xlu0 %3509
      %3513 = vrot.lane.b32.xlu0 %v3501, 48
      %v3514 = vpop.permute.xlu0 %3513
      %3517 = vrot.lane.b32.xlu0 %v3492, 64
      %v3518 = vpop.permute.xlu0 %3517
      %3521 = vrot.lane.b32.xlu0 %v3502, 80
      %v3522 = vpop.permute.xlu0 %3521
      %3525 = vrot.lane.b32.xlu0 %v3499, 96
      %v3526 = vpop.permute.xlu0 %3525
      %3529 = vrot.lane.b32.xlu0 %v3503, 112
      %v3530 = vpop.permute.xlu0 %3529
      %v3532 = vsel %vm2009, %v3476, %v3506
      %v3533 = vsel %vm2155, %v3532, %v3510
      %v3534 = vsel %vm2157, %v3533, %v3514
      %v3535 = vsel %vm2159, %v3534, %v3518
      %v3536 = vsel %vm2161, %v3535, %v3522
      %v3537 = vsel %vm2163, %v3536, %v3526
      %v3538 = vsel %vm2165, %v3537, %v3530
      %s3539 = scalar_lea.vmem %s1, 56
      %v3540 = vld [vmem:[%s3539] sm:$0xff]
      %3541 = vrot.lane.b32.xlu0 %v3416, 126
      %v3542 = vpop.permute.xlu0 %3541
      %3543 = vrot.lane.b32.xlu0 %v3417, 126
      %v3544 = vpop.permute.xlu0 %3543
      %3545 = vrot.lane.b32.xlu0 %v3418, 126
      %v3546 = vpop.permute.xlu0 %3545
      %3547 = vrot.lane.b32.xlu0 %v3419, 126
      %v3548 = vpop.permute.xlu0 %3547
      %v3553 = vcombine.low %v3542, %v3546
      %v3554 = vcombine.high %v3542, %v3546
      %v3556 = vunpack.c.l.s4 1983009808
      %v3557 = vunpack.c.0.s8 %v3556
      %v3558 = vlaneseq
      %v3559 = vshrl.u32 %v3558, 7
      %v3560 = vsub.s32 %v3557, %v3559
      %v3561 = vrot.slane %v3553, %v3560
      %v3563 = vunpack.c.l.s4 1983009808
      %v3564 = vunpack.c.0.s8 %v3563
      %v3565 = vlaneseq
      %v3566 = vshrl.u32 %v3565, 7
      %v3567 = vsub.s32 %v3564, %v3566
      %v3568 = vrot.slane %v3554, %v3567
      %v3569 = vcombine.low %v3544, %v3548
      %v3570 = vcombine.high %v3544, %v3548
      %v3572 = vunpack.c.l.s4 1983009808
      %v3573 = vunpack.c.0.s8 %v3572
      %v3574 = vlaneseq
      %v3575 = vshrl.u32 %v3574, 7
      %v3576 = vsub.s32 %v3573, %v3575
      %v3577 = vrot.slane %v3569, %v3576
      %v3579 = vunpack.c.l.s4 1983009808
      %v3580 = vunpack.c.0.s8 %v3579
      %v3581 = vlaneseq
      %v3582 = vshrl.u32 %v3581, 7
      %v3583 = vsub.s32 %v3580, %v3582
      %v3584 = vrot.slane %v3570, %v3583
      %v3585 = vcombine.low %v3561, %v3577
      %v3586 = vcombine.high %v3561, %v3577
      %v3588 = vunpack.c.l.s4 1934713408
      %v3589 = vunpack.c.0.s8 %v3588
      %v3590 = vlaneseq
      %v3591 = vshrl.u32 %v3590, 7
      %v3592 = vsub.s32 %v3589, %v3591
      %v3593 = vrot.slane %v3585, %v3592
      %v3595 = vunpack.c.l.s4 1934713408
      %v3596 = vunpack.c.0.s8 %v3595
      %v3597 = vlaneseq
      %v3598 = vshrl.u32 %v3597, 7
      %v3599 = vsub.s32 %v3596, %v3598
      %v3600 = vrot.slane %v3586, %v3599
      %v3601 = vcombine.low %v3568, %v3584
      %v3602 = vcombine.high %v3568, %v3584
      %v3604 = vunpack.c.l.s4 1934713408
      %v3605 = vunpack.c.0.s8 %v3604
      %v3606 = vlaneseq
      %v3607 = vshrl.u32 %v3606, 7
      %v3608 = vsub.s32 %v3605, %v3607
      %v3609 = vrot.slane %v3601, %v3608
      %v3611 = vunpack.c.l.s4 1934713408
      %v3612 = vunpack.c.0.s8 %v3611
      %v3613 = vlaneseq
      %v3614 = vshrl.u32 %v3613, 7
      %v3615 = vsub.s32 %v3612, %v3614
      %v3616 = vrot.slane %v3602, %v3615
      %v3617 = vcombine.high %v3593, 0.0
      %v3618 = vcombine.high %v3600, 0.0
      %v3619 = vcombine.high %v3609, 0.0
      %v3620 = vcombine.high %v3616, 0.0
      %3622 = vrot.lane.b32.xlu0 %v3617, 16
      %v3623 = vpop.permute.xlu0 %3622
      %3626 = vrot.lane.b32.xlu0 %v3600, 32
      %v3627 = vpop.permute.xlu0 %3626
      %3630 = vrot.lane.b32.xlu0 %v3618, 48
      %v3631 = vpop.permute.xlu0 %3630
      %3634 = vrot.lane.b32.xlu0 %v3609, 64
      %v3635 = vpop.permute.xlu0 %3634
      %3638 = vrot.lane.b32.xlu0 %v3619, 80
      %v3639 = vpop.permute.xlu0 %3638
      %3642 = vrot.lane.b32.xlu0 %v3616, 96
      %v3643 = vpop.permute.xlu0 %3642
      %3646 = vrot.lane.b32.xlu0 %v3620, 112
      %v3647 = vpop.permute.xlu0 %3646
      %v3649 = vsel %vm2009, %v3593, %v3623
      %v3650 = vsel %vm2155, %v3649, %v3627
      %v3651 = vsel %vm2157, %v3650, %v3631
      %v3652 = vsel %vm2159, %v3651, %v3635
      %v3653 = vsel %vm2161, %v3652, %v3639
      %v3654 = vsel %vm2163, %v3653, %v3643
      %v3655 = vsel %vm2165, %v3654, %v3647
      %v3657 = vsel %vm1955, %v3540, 0
      %v3660 = vsel %vm2287, %v3655, 0
      %3662 = vmatprep.subr.mxu0 0.0
      %3663 = vmatpush1.msra.mxu0 %v3660
      %3664 = vmatprep.subr.mxu0 0.0
      %3665 = vmatpush1.msra.mxu0 0.0
      %3666 = vmatprep.subr.mxu0 0.0
      %3667 = vmatpush1.msra.mxu0 0.0
      %3668 = vmatprep.subr.mxu0 0.0
      %3669 = vmatpush1.msra.mxu0 0.0
      %3670 = vmatprep.subr.mxu0 0.0
      %3671 = vmatpush1.msra.mxu0 0.0
      %3672 = vmatprep.subr.mxu0 0.0
      %3673 = vmatpush1.msra.mxu0 0.0
      %3674 = vmatprep.subr.mxu0 0.0
      %3675 = vmatpush1.msra.mxu0 0.0
      %3676 = vmatprep.subr.mxu0 0.0
      %3677 = vmatpush1.msra.mxu0 0.0
      %3678 = vmatprep.subr.mxu0 0.0
      %3679 = vmatpush1.msra.mxu0 0.0
      %3680 = vmatprep.subr.mxu0 0.0
      %3681 = vmatpush1.msra.mxu0 0.0
      %3682 = vmatprep.subr.mxu0 0.0
      %3683 = vmatpush1.msra.mxu0 0.0
      %3684 = vmatprep.subr.mxu0 0.0
      %3685 = vmatpush1.msra.mxu0 0.0
      %3686 = vmatprep.subr.mxu0 0.0
      %3687 = vmatpush1.msra.mxu0 0.0
      %3688 = vmatprep.subr.mxu0 0.0
      %3689 = vmatpush1.msra.mxu0 0.0
      %3690 = vmatprep.subr.mxu0 0.0
      %3691 = vmatpush1.msra.mxu0 0.0
      %3692 = vmatprep.subr.mxu0 0.0
      %3693 = vmatpush1.msra.mxu0 0.0
      %3694 = vmatprep.subr.mxu0 0.0
      %3695 = vmatpush1.msra.mxu0 0.0
      %3696 = vmatprep.subr.mxu0 0.0
      %3697 = vmatpush1.msra.mxu0 0.0
      %3698 = vmatprep.subr.mxu0 0.0
      %3699 = vmatpush1.msra.mxu0 0.0
      %3700 = vmatprep.subr.mxu0 0.0
      %3701 = vmatpush1.msra.mxu0 0.0
      %3702 = vmatprep.subr.mxu0 0.0
      %3703 = vmatpush1.msra.mxu0 0.0
      %3704 = vmatprep.subr.mxu0 0.0
      %3705 = vmatpush1.msra.mxu0 0.0
      %3706 = vmatprep.subr.mxu0 0.0
      %3707 = vmatpush1.msra.mxu0 0.0
      %3708 = vmatprep.subr.mxu0 0.0
      %3709 = vmatpush1.msra.mxu0 0.0
      %3710 = vmatprep.subr.mxu0 0.0
      %3711 = vmatpush1.msra.mxu0 0.0
      %3712 = vmatprep.subr.mxu0 0.0
      %3713 = vmatpush1.msra.mxu0 0.0
      %3714 = vmatprep.subr.mxu0 0.0
      %3715 = vmatpush1.msra.mxu0 0.0
      %3716 = vmatprep.subr.mxu0 0.0
      %3717 = vmatpush1.msra.mxu0 0.0
      %3718 = vmatprep.subr.mxu0 0.0
      %3719 = vmatpush1.msra.mxu0 0.0
      %3720 = vmatprep.subr.mxu0 0.0
      %3721 = vmatpush1.msra.mxu0 0.0
      %3722 = vmatprep.subr.mxu0 0.0
      %3723 = vmatpush1.msra.mxu0 0.0
      %3724 = vmatprep.subr.mxu0 0.0
      %3725 = vmatpush1.msra.mxu0 0.0
      %3726 = vmatprep.mubr.f32.mxu0 0.0
      %3727 = vmatmul.mubr.f32.gmra.mrb[0].mxu0 %v3657
      %v3728 = vpop.f32.mrb[0].mxu0
      %v3729 = vadd.f32 0.0, %v3728
      %v3730 = vpop.f32.mrb[0].mxu0
      %3731 = vdwg.mxu0
      %v3733 = vsel %vm1955, %v3415, 0
      %v3736 = vsel %vm2287, %v3538, 0
      %3738 = vmatprep.subr.mxu0 0.0
      %3739 = vmatpush1.msra.mxu0 %v3736
      %3740 = vmatprep.subr.mxu0 0.0
      %3741 = vmatpush1.msra.mxu0 0.0
      %3742 = vmatprep.subr.mxu0 0.0
      %3743 = vmatpush1.msra.mxu0 0.0
      %3744 = vmatprep.subr.mxu0 0.0
      %3745 = vmatpush1.msra.mxu0 0.0
      %3746 = vmatprep.subr.mxu0 0.0
      %3747 = vmatpush1.msra.mxu0 0.0
      %3748 = vmatprep.subr.mxu0 0.0
      %3749 = vmatpush1.msra.mxu0 0.0
      %3750 = vmatprep.subr.mxu0 0.0
      %3751 = vmatpush1.msra.mxu0 0.0
      %3752 = vmatprep.subr.mxu0 0.0
      %3753 = vmatpush1.msra.mxu0 0.0
      %3754 = vmatprep.subr.mxu0 0.0
      %3755 = vmatpush1.msra.mxu0 0.0
      %3756 = vmatprep.subr.mxu0 0.0
      %3757 = vmatpush1.msra.mxu0 0.0
      %3758 = vmatprep.subr.mxu0 0.0
      %3759 = vmatpush1.msra.mxu0 0.0
      %3760 = vmatprep.subr.mxu0 0.0
      %3761 = vmatpush1.msra.mxu0 0.0
      %3762 = vmatprep.subr.mxu0 0.0
      %3763 = vmatpush1.msra.mxu0 0.0
      %3764 = vmatprep.subr.mxu0 0.0
      %3765 = vmatpush1.msra.mxu0 0.0
      %3766 = vmatprep.subr.mxu0 0.0
      %3767 = vmatpush1.msra.mxu0 0.0
      %3768 = vmatprep.subr.mxu0 0.0
      %3769 = vmatpush1.msra.mxu0 0.0
      %3770 = vmatprep.subr.mxu0 0.0
      %3771 = vmatpush1.msra.mxu0 0.0
      %3772 = vmatprep.subr.mxu0 0.0
      %3773 = vmatpush1.msra.mxu0 0.0
      %3774 = vmatprep.subr.mxu0 0.0
      %3775 = vmatpush1.msra.mxu0 0.0
      %3776 = vmatprep.subr.mxu0 0.0
      %3777 = vmatpush1.msra.mxu0 0.0
      %3778 = vmatprep.subr.mxu0 0.0
      %3779 = vmatpush1.msra.mxu0 0.0
      %3780 = vmatprep.subr.mxu0 0.0
      %3781 = vmatpush1.msra.mxu0 0.0
      %3782 = vmatprep.subr.mxu0 0.0
      %3783 = vmatpush1.msra.mxu0 0.0
      %3784 = vmatprep.subr.mxu0 0.0
      %3785 = vmatpush1.msra.mxu0 0.0
      %3786 = vmatprep.subr.mxu0 0.0
      %3787 = vmatpush1.msra.mxu0 0.0
      %3788 = vmatprep.subr.mxu0 0.0
      %3789 = vmatpush1.msra.mxu0 0.0
      %3790 = vmatprep.subr.mxu0 0.0
      %3791 = vmatpush1.msra.mxu0 0.0
      %3792 = vmatprep.subr.mxu0 0.0
      %3793 = vmatpush1.msra.mxu0 0.0
      %3794 = vmatprep.subr.mxu0 0.0
      %3795 = vmatpush1.msra.mxu0 0.0
      %3796 = vmatprep.subr.mxu0 0.0
      %3797 = vmatpush1.msra.mxu0 0.0
      %3798 = vmatprep.subr.mxu0 0.0
      %3799 = vmatpush1.msra.mxu0 0.0
      %3800 = vmatprep.subr.mxu0 0.0
      %3801 = vmatpush1.msra.mxu0 0.0
      %3802 = vmatprep.mubr.f32.mxu0 0.0
      %3803 = vmatmul.mubr.f32.gmra.mrb[0].mxu0 %v3733
      %v3804 = vpop.f32.mrb[0].mxu0
      %v3805 = vadd.f32 %v3729, %v3804
      %v3806 = vpop.f32.mrb[0].mxu0
      %3807 = vdwg.mxu0
      %s3808 = scalar_lea.vmem %s1, 64
      %v3809 = vld [vmem:[%s3808] sm:$0xff]
      %v3810 = vld [vmem:[#allocation2 + $0x1] sm:$0xff]
      %v3811 = vld [vmem:[#allocation2 + $0x11] sm:$0xff]
      %v3812 = vld [vmem:[#allocation2 + $0x21] sm:$0xff]
      %v3813 = vld [vmem:[#allocation2 + $0x31] sm:$0xff]
      %3818 = vrot.lane.b32.xlu0 %v3810, 125
      %v3819 = vpop.permute.xlu0 %3818
      %3820 = vrot.lane.b32.xlu0 %v3811, 125
      %v3821 = vpop.permute.xlu0 %3820
      %3822 = vrot.lane.b32.xlu0 %v3812, 125
      %v3823 = vpop.permute.xlu0 %3822
      %3824 = vrot.lane.b32.xlu0 %v3813, 125
      %v3825 = vpop.permute.xlu0 %3824
      %v3830 = vcombine.low %v3819, %v3823
      %v3831 = vcombine.high %v3819, %v3823
      %v3833 = vunpack.c.l.s4 1983009808
      %v3834 = vunpack.c.0.s8 %v3833
      %v3835 = vlaneseq
      %v3836 = vshrl.u32 %v3835, 7
      %v3837 = vsub.s32 %v3834, %v3836
      %v3838 = vrot.slane %v3830, %v3837
      %v3840 = vunpack.c.l.s4 1983009808
      %v3841 = vunpack.c.0.s8 %v3840
      %v3842 = vlaneseq
      %v3843 = vshrl.u32 %v3842, 7
      %v3844 = vsub.s32 %v3841, %v3843
      %v3845 = vrot.slane %v3831, %v3844
      %v3846 = vcombine.low %v3821, %v3825
      %v3847 = vcombine.high %v3821, %v3825
      %v3849 = vunpack.c.l.s4 1983009808
      %v3850 = vunpack.c.0.s8 %v3849
      %v3851 = vlaneseq
      %v3852 = vshrl.u32 %v3851, 7
      %v3853 = vsub.s32 %v3850, %v3852
      %v3854 = vrot.slane %v3846, %v3853
      %v3856 = vunpack.c.l.s4 1983009808
      %v3857 = vunpack.c.0.s8 %v3856
      %v3858 = vlaneseq
      %v3859 = vshrl.u32 %v3858, 7
      %v3860 = vsub.s32 %v3857, %v3859
      %v3861 = vrot.slane %v3847, %v3860
      %v3862 = vcombine.low %v3838, %v3854
      %v3863 = vcombine.high %v3838, %v3854
      %v3865 = vunpack.c.l.s4 1934713408
      %v3866 = vunpack.c.0.s8 %v3865
      %v3867 = vlaneseq
      %v3868 = vshrl.u32 %v3867, 7
      %v3869 = vsub.s32 %v3866, %v3868
      %v3870 = vrot.slane %v3862, %v3869
      %v3872 = vunpack.c.l.s4 1934713408
      %v3873 = vunpack.c.0.s8 %v3872
      %v3874 = vlaneseq
      %v3875 = vshrl.u32 %v3874, 7
      %v3876 = vsub.s32 %v3873, %v3875
      %v3877 = vrot.slane %v3863, %v3876
      %v3878 = vcombine.low %v3845, %v3861
      %v3879 = vcombine.high %v3845, %v3861
      %v3881 = vunpack.c.l.s4 1934713408
      %v3882 = vunpack.c.0.s8 %v3881
      %v3883 = vlaneseq
      %v3884 = vshrl.u32 %v3883, 7
      %v3885 = vsub.s32 %v3882, %v3884
      %v3886 = vrot.slane %v3878, %v3885
      %v3888 = vunpack.c.l.s4 1934713408
      %v3889 = vunpack.c.0.s8 %v3888
      %v3890 = vlaneseq
      %v3891 = vshrl.u32 %v3890, 7
      %v3892 = vsub.s32 %v3889, %v3891
      %v3893 = vrot.slane %v3879, %v3892
      %v3894 = vcombine.high %v3870, 0.0
      %v3895 = vcombine.high %v3877, 0.0
      %v3896 = vcombine.high %v3886, 0.0
      %v3897 = vcombine.high %v3893, 0.0
      %3899 = vrot.lane.b32.xlu0 %v3894, 16
      %v3900 = vpop.permute.xlu0 %3899
      %3903 = vrot.lane.b32.xlu0 %v3877, 32
      %v3904 = vpop.permute.xlu0 %3903
      %3907 = vrot.lane.b32.xlu0 %v3895, 48
      %v3908 = vpop.permute.xlu0 %3907
      %3911 = vrot.lane.b32.xlu0 %v3886, 64
      %v3912 = vpop.permute.xlu0 %3911
      %3915 = vrot.lane.b32.xlu0 %v3896, 80
      %v3916 = vpop.permute.xlu0 %3915
      %3919 = vrot.lane.b32.xlu0 %v3893, 96
      %v3920 = vpop.permute.xlu0 %3919
      %3923 = vrot.lane.b32.xlu0 %v3897, 112
      %v3924 = vpop.permute.xlu0 %3923
      %v3926 = vsel %vm2009, %v3870, %v3900
      %v3927 = vsel %vm2155, %v3926, %v3904
      %v3928 = vsel %vm2157, %v3927, %v3908
      %v3929 = vsel %vm2159, %v3928, %v3912
      %v3930 = vsel %vm2161, %v3929, %v3916
      %v3931 = vsel %vm2163, %v3930, %v3920
      %v3932 = vsel %vm2165, %v3931, %v3924
      %v3934 = vsel %vm1955, %v3809, 0
      %v3937 = vsel %vm2287, %v3932, 0
      %3939 = vmatprep.subr.mxu0 0.0
      %3940 = vmatpush1.msra.mxu0 %v3937
      %3941 = vmatprep.subr.mxu0 0.0
      %3942 = vmatpush1.msra.mxu0 0.0
      %3943 = vmatprep.subr.mxu0 0.0
      %3944 = vmatpush1.msra.mxu0 0.0
      %3945 = vmatprep.subr.mxu0 0.0
      %3946 = vmatpush1.msra.mxu0 0.0
      %3947 = vmatprep.subr.mxu0 0.0
      %3948 = vmatpush1.msra.mxu0 0.0
      %3949 = vmatprep.subr.mxu0 0.0
      %3950 = vmatpush1.msra.mxu0 0.0
      %3951 = vmatprep.subr.mxu0 0.0
      %3952 = vmatpush1.msra.mxu0 0.0
      %3953 = vmatprep.subr.mxu0 0.0
      %3954 = vmatpush1.msra.mxu0 0.0
      %3955 = vmatprep.subr.mxu0 0.0
      %3956 = vmatpush1.msra.mxu0 0.0
      %3957 = vmatprep.subr.mxu0 0.0
      %3958 = vmatpush1.msra.mxu0 0.0
      %3959 = vmatprep.subr.mxu0 0.0
      %3960 = vmatpush1.msra.mxu0 0.0
      %3961 = vmatprep.subr.mxu0 0.0
      %3962 = vmatpush1.msra.mxu0 0.0
      %3963 = vmatprep.subr.mxu0 0.0
      %3964 = vmatpush1.msra.mxu0 0.0
      %3965 = vmatprep.subr.mxu0 0.0
      %3966 = vmatpush1.msra.mxu0 0.0
      %3967 = vmatprep.subr.mxu0 0.0
      %3968 = vmatpush1.msra.mxu0 0.0
      %3969 = vmatprep.subr.mxu0 0.0
      %3970 = vmatpush1.msra.mxu0 0.0
      %3971 = vmatprep.subr.mxu0 0.0
      %3972 = vmatpush1.msra.mxu0 0.0
      %3973 = vmatprep.subr.mxu0 0.0
      %3974 = vmatpush1.msra.mxu0 0.0
      %3975 = vmatprep.subr.mxu0 0.0
      %3976 = vmatpush1.msra.mxu0 0.0
      %3977 = vmatprep.subr.mxu0 0.0
      %3978 = vmatpush1.msra.mxu0 0.0
      %3979 = vmatprep.subr.mxu0 0.0
      %3980 = vmatpush1.msra.mxu0 0.0
      %3981 = vmatprep.subr.mxu0 0.0
      %3982 = vmatpush1.msra.mxu0 0.0
      %3983 = vmatprep.subr.mxu0 0.0
      %3984 = vmatpush1.msra.mxu0 0.0
      %3985 = vmatprep.subr.mxu0 0.0
      %3986 = vmatpush1.msra.mxu0 0.0
      %3987 = vmatprep.subr.mxu0 0.0
      %3988 = vmatpush1.msra.mxu0 0.0
      %3989 = vmatprep.subr.mxu0 0.0
      %3990 = vmatpush1.msra.mxu0 0.0
      %3991 = vmatprep.subr.mxu0 0.0
      %3992 = vmatpush1.msra.mxu0 0.0
      %3993 = vmatprep.subr.mxu0 0.0
      %3994 = vmatpush1.msra.mxu0 0.0
      %3995 = vmatprep.subr.mxu0 0.0
      %3996 = vmatpush1.msra.mxu0 0.0
      %3997 = vmatprep.subr.mxu0 0.0
      %3998 = vmatpush1.msra.mxu0 0.0
      %3999 = vmatprep.subr.mxu0 0.0
      %4000 = vmatpush1.msra.mxu0 0.0
      %4001 = vmatprep.subr.mxu0 0.0
      %4002 = vmatpush1.msra.mxu0 0.0
      %4003 = vmatprep.mubr.f32.mxu0 0.0
      %4004 = vmatmul.mubr.f32.gmra.mrb[0].mxu0 %v3934
      %v4005 = vpop.f32.mrb[0].mxu0
      %v4006 = vadd.f32 0.0, %v4005
      %v4007 = vpop.f32.mrb[0].mxu0
      %4008 = vdwg.mxu0
      %v4009 = vadd.f32 %v3805, %v4006
      %s4010 = scalar_lea.vmem %s1, 72
      %v4011 = vld [vmem:[%s4010] sm:$0xff]
      %v4012 = vld [vmem:[#allocation2 + $0x2] sm:$0xff]
      %v4013 = vld [vmem:[#allocation2 + $0x12] sm:$0xff]
      %v4014 = vld [vmem:[#allocation2 + $0x22] sm:$0xff]
      %v4015 = vld [vmem:[#allocation2 + $0x32] sm:$0xff]
      %4020 = vrot.lane.b32.xlu0 %v4012, 127
      %v4021 = vpop.permute.xlu0 %4020
      %4022 = vrot.lane.b32.xlu0 %v4013, 127
      %v4023 = vpop.permute.xlu0 %4022
      %4024 = vrot.lane.b32.xlu0 %v4014, 127
      %v4025 = vpop.permute.xlu0 %4024
      %4026 = vrot.lane.b32.xlu0 %v4015, 127
      %v4027 = vpop.permute.xlu0 %4026
      %v4032 = vcombine.low %v4021, %v4025
      %v4033 = vcombine.high %v4021, %v4025
      %v4035 = vunpack.c.l.s4 1983009808
      %v4036 = vunpack.c.0.s8 %v4035
      %v4037 = vlaneseq
      %v4038 = vshrl.u32 %v4037, 7
      %v4039 = vsub.s32 %v4036, %v4038
      %v4040 = vrot.slane %v4032, %v4039
      %v4042 = vunpack.c.l.s4 1983009808
      %v4043 = vunpack.c.0.s8 %v4042
      %v4044 = vlaneseq
      %v4045 = vshrl.u32 %v4044, 7
      %v4046 = vsub.s32 %v4043, %v4045
      %v4047 = vrot.slane %v4033, %v4046
      %v4048 = vcombine.low %v4023, %v4027
      %v4049 = vcombine.high %v4023, %v4027
      %v4051 = vunpack.c.l.s4 1983009808
      %v4052 = vunpack.c.0.s8 %v4051
      %v4053 = vlaneseq
      %v4054 = vshrl.u32 %v4053, 7
      %v4055 = vsub.s32 %v4052, %v4054
      %v4056 = vrot.slane %v4048, %v4055
      %v4058 = vunpack.c.l.s4 1983009808
      %v4059 = vunpack.c.0.s8 %v4058
      %v4060 = vlaneseq
      %v4061 = vshrl.u32 %v4060, 7
      %v4062 = vsub.s32 %v4059, %v4061
      %v4063 = vrot.slane %v4049, %v4062
      %v4064 = vcombine.low %v4040, %v4056
      %v4065 = vcombine.high %v4040, %v4056
      %v4067 = vunpack.c.l.s4 1934713408
      %v4068 = vunpack.c.0.s8 %v4067
      %v4069 = vlaneseq
      %v4070 = vshrl.u32 %v4069, 7
      %v4071 = vsub.s32 %v4068, %v4070
      %v4072 = vrot.slane %v4064, %v4071
      %v4074 = vunpack.c.l.s4 1934713408
      %v4075 = vunpack.c.0.s8 %v4074
      %v4076 = vlaneseq
      %v4077 = vshrl.u32 %v4076, 7
      %v4078 = vsub.s32 %v4075, %v4077
      %v4079 = vrot.slane %v4065, %v4078
      %v4080 = vcombine.low %v4047, %v4063
      %v4081 = vcombine.high %v4047, %v4063
      %v4083 = vunpack.c.l.s4 1934713408
      %v4084 = vunpack.c.0.s8 %v4083
      %v4085 = vlaneseq
      %v4086 = vshrl.u32 %v4085, 7
      %v4087 = vsub.s32 %v4084, %v4086
      %v4088 = vrot.slane %v4080, %v4087
      %v4090 = vunpack.c.l.s4 1934713408
      %v4091 = vunpack.c.0.s8 %v4090
      %v4092 = vlaneseq
      %v4093 = vshrl.u32 %v4092, 7
      %v4094 = vsub.s32 %v4091, %v4093
      %v4095 = vrot.slane %v4081, %v4094
      %v4096 = vcombine.high %v4072, 0.0
      %v4097 = vcombine.high %v4079, 0.0
      %v4098 = vcombine.high %v4088, 0.0
      %v4099 = vcombine.high %v4095, 0.0
      %4101 = vrot.lane.b32.xlu0 %v4096, 16
      %v4102 = vpop.permute.xlu0 %4101
      %4105 = vrot.lane.b32.xlu0 %v4079, 32
      %v4106 = vpop.permute.xlu0 %4105
      %4109 = vrot.lane.b32.xlu0 %v4097, 48
      %v4110 = vpop.permute.xlu0 %4109
      %4113 = vrot.lane.b32.xlu0 %v4088, 64
      %v4114 = vpop.permute.xlu0 %4113
      %4117 = vrot.lane.b32.xlu0 %v4098, 80
      %v4118 = vpop.permute.xlu0 %4117
      %4121 = vrot.lane.b32.xlu0 %v4095, 96
      %v4122 = vpop.permute.xlu0 %4121
      %4125 = vrot.lane.b32.xlu0 %v4099, 112
      %v4126 = vpop.permute.xlu0 %4125
      %v4128 = vsel %vm2009, %v4072, %v4102
      %v4129 = vsel %vm2155, %v4128, %v4106
      %v4130 = vsel %vm2157, %v4129, %v4110
      %v4131 = vsel %vm2159, %v4130, %v4114
      %v4132 = vsel %vm2161, %v4131, %v4118
      %v4133 = vsel %vm2163, %v4132, %v4122
      %v4134 = vsel %vm2165, %v4133, %v4126
      %v4136 = vsel %vm1955, %v4011, 0
      %v4139 = vsel %vm2287, %v4134, 0
      %4141 = vmatprep.subr.mxu0 0.0
      %4142 = vmatpush1.msra.mxu0 %v4139
      %4143 = vmatprep.subr.mxu0 0.0
      %4144 = vmatpush1.msra.mxu0 0.0
      %4145 = vmatprep.subr.mxu0 0.0
      %4146 = vmatpush1.msra.mxu0 0.0
      %4147 = vmatprep.subr.mxu0 0.0
      %4148 = vmatpush1.msra.mxu0 0.0
      %4149 = vmatprep.subr.mxu0 0.0
      %4150 = vmatpush1.msra.mxu0 0.0
      %4151 = vmatprep.subr.mxu0 0.0
      %4152 = vmatpush1.msra.mxu0 0.0
      %4153 = vmatprep.subr.mxu0 0.0
      %4154 = vmatpush1.msra.mxu0 0.0
      %4155 = vmatprep.subr.mxu0 0.0
      %4156 = vmatpush1.msra.mxu0 0.0
      %4157 = vmatprep.subr.mxu0 0.0
      %4158 = vmatpush1.msra.mxu0 0.0
      %4159 = vmatprep.subr.mxu0 0.0
      %4160 = vmatpush1.msra.mxu0 0.0
      %4161 = vmatprep.subr.mxu0 0.0
      %4162 = vmatpush1.msra.mxu0 0.0
      %4163 = vmatprep.subr.mxu0 0.0
      %4164 = vmatpush1.msra.mxu0 0.0
      %4165 = vmatprep.subr.mxu0 0.0
      %4166 = vmatpush1.msra.mxu0 0.0
      %4167 = vmatprep.subr.mxu0 0.0
      %4168 = vmatpush1.msra.mxu0 0.0
      %4169 = vmatprep.subr.mxu0 0.0
      %4170 = vmatpush1.msra.mxu0 0.0
      %4171 = vmatprep.subr.mxu0 0.0
      %4172 = vmatpush1.msra.mxu0 0.0
      %4173 = vmatprep.subr.mxu0 0.0
      %4174 = vmatpush1.msra.mxu0 0.0
      %4175 = vmatprep.subr.mxu0 0.0
      %4176 = vmatpush1.msra.mxu0 0.0
      %4177 = vmatprep.subr.mxu0 0.0
      %4178 = vmatpush1.msra.mxu0 0.0
      %4179 = vmatprep.subr.mxu0 0.0
      %4180 = vmatpush1.msra.mxu0 0.0
      %4181 = vmatprep.subr.mxu0 0.0
      %4182 = vmatpush1.msra.mxu0 0.0
      %4183 = vmatprep.subr.mxu0 0.0
      %4184 = vmatpush1.msra.mxu0 0.0
      %4185 = vmatprep.subr.mxu0 0.0
      %4186 = vmatpush1.msra.mxu0 0.0
      %4187 = vmatprep.subr.mxu0 0.0
      %4188 = vmatpush1.msra.mxu0 0.0
      %4189 = vmatprep.subr.mxu0 0.0
      %4190 = vmatpush1.msra.mxu0 0.0
      %4191 = vmatprep.subr.mxu0 0.0
      %4192 = vmatpush1.msra.mxu0 0.0
      %4193 = vmatprep.subr.mxu0 0.0
      %4194 = vmatpush1.msra.mxu0 0.0
      %4195 = vmatprep.subr.mxu0 0.0
      %4196 = vmatpush1.msra.mxu0 0.0
      %4197 = vmatprep.subr.mxu0 0.0
      %4198 = vmatpush1.msra.mxu0 0.0
      %4199 = vmatprep.subr.mxu0 0.0
      %4200 = vmatpush1.msra.mxu0 0.0
      %4201 = vmatprep.subr.mxu0 0.0
      %4202 = vmatpush1.msra.mxu0 0.0
      %4203 = vmatprep.subr.mxu0 0.0
      %4204 = vmatpush1.msra.mxu0 0.0
      %4205 = vmatprep.mubr.f32.mxu0 0.0
      %4206 = vmatmul.mubr.f32.gmra.mrb[0].mxu0 %v4136
      %v4207 = vpop.f32.mrb[0].mxu0
      %v4208 = vadd.f32 0.0, %v4207
      %v4209 = vpop.f32.mrb[0].mxu0
      %4210 = vdwg.mxu0
      %v4211 = vadd.f32 %v4009, %v4208
      %s4212 = scalar_lea.vmem %s1, 80
      %v4213 = vld [vmem:[%s4212] sm:$0xff]
      %v4214 = vld [vmem:[#allocation2 + $0x2] sm:$0xff]
      %v4215 = vld [vmem:[#allocation2 + $0x12] sm:$0xff]
      %v4216 = vld [vmem:[#allocation2 + $0x22] sm:$0xff]
      %v4217 = vld [vmem:[#allocation2 + $0x32] sm:$0xff]
      %4222 = vrot.lane.b32.xlu0 %v4214, 126
      %v4223 = vpop.permute.xlu0 %4222
      %4224 = vrot.lane.b32.xlu0 %v4215, 126
      %v4225 = vpop.permute.xlu0 %4224
      %4226 = vrot.lane.b32.xlu0 %v4216, 126
      %v4227 = vpop.permute.xlu0 %4226
      %4228 = vrot.lane.b32.xlu0 %v4217, 126
      %v4229 = vpop.permute.xlu0 %4228
      %v4234 = vcombine.low %v4223, %v4227
      %v4235 = vcombine.high %v4223, %v4227
      %v4237 = vunpack.c.l.s4 1983009808
      %v4238 = vunpack.c.0.s8 %v4237
      %v4239 = vlaneseq
      %v4240 = vshrl.u32 %v4239, 7
      %v4241 = vsub.s32 %v4238, %v4240
      %v4242 = vrot.slane %v4234, %v4241
      %v4244 = vunpack.c.l.s4 1983009808
      %v4245 = vunpack.c.0.s8 %v4244
      %v4246 = vlaneseq
      %v4247 = vshrl.u32 %v4246, 7
      %v4248 = vsub.s32 %v4245, %v4247
      %v4249 = vrot.slane %v4235, %v4248
      %v4250 = vcombine.low %v4225, %v4229
      %v4251 = vcombine.high %v4225, %v4229
      %v4253 = vunpack.c.l.s4 1983009808
      %v4254 = vunpack.c.0.s8 %v4253
      %v4255 = vlaneseq
      %v4256 = vshrl.u32 %v4255, 7
      %v4257 = vsub.s32 %v4254, %v4256
      %v4258 = vrot.slane %v4250, %v4257
      %v4260 = vunpack.c.l.s4 1983009808
      %v4261 = vunpack.c.0.s8 %v4260
      %v4262 = vlaneseq
      %v4263 = vshrl.u32 %v4262, 7
      %v4264 = vsub.s32 %v4261, %v4263
      %v4265 = vrot.slane %v4251, %v4264
      %v4266 = vcombine.low %v4242, %v4258
      %v4267 = vcombine.high %v4242, %v4258
      %v4269 = vunpack.c.l.s4 1934713408
      %v4270 = vunpack.c.0.s8 %v4269
      %v4271 = vlaneseq
      %v4272 = vshrl.u32 %v4271, 7
      %v4273 = vsub.s32 %v4270, %v4272
      %v4274 = vrot.slane %v4266, %v4273
      %v4276 = vunpack.c.l.s4 1934713408
      %v4277 = vunpack.c.0.s8 %v4276
      %v4278 = vlaneseq
      %v4279 = vshrl.u32 %v4278, 7
      %v4280 = vsub.s32 %v4277, %v4279
      %v4281 = vrot.slane %v4267, %v4280
      %v4282 = vcombine.low %v4249, %v4265
      %v4283 = vcombine.high %v4249, %v4265
      %v4285 = vunpack.c.l.s4 1934713408
      %v4286 = vunpack.c.0.s8 %v4285
      %v4287 = vlaneseq
      %v4288 = vshrl.u32 %v4287, 7
      %v4289 = vsub.s32 %v4286, %v4288
      %v4290 = vrot.slane %v4282, %v4289
      %v4292 = vunpack.c.l.s4 1934713408
      %v4293 = vunpack.c.0.s8 %v4292
      %v4294 = vlaneseq
      %v4295 = vshrl.u32 %v4294, 7
      %v4296 = vsub.s32 %v4293, %v4295
      %v4297 = vrot.slane %v4283, %v4296
      %v4298 = vcombine.high %v4274, 0.0
      %v4299 = vcombine.high %v4281, 0.0
      %v4300 = vcombine.high %v4290, 0.0
      %v4301 = vcombine.high %v4297, 0.0
      %4303 = vrot.lane.b32.xlu0 %v4298, 16
      %v4304 = vpop.permute.xlu0 %4303
      %4307 = vrot.lane.b32.xlu0 %v4281, 32
      %v4308 = vpop.permute.xlu0 %4307
      %4311 = vrot.lane.b32.xlu0 %v4299, 48
      %v4312 = vpop.permute.xlu0 %4311
      %4315 = vrot.lane.b32.xlu0 %v4290, 64
      %v4316 = vpop.permute.xlu0 %4315
      %4319 = vrot.lane.b32.xlu0 %v4300, 80
      %v4320 = vpop.permute.xlu0 %4319
      %4323 = vrot.lane.b32.xlu0 %v4297, 96
      %v4324 = vpop.permute.xlu0 %4323
      %4327 = vrot.lane.b32.xlu0 %v4301, 112
      %v4328 = vpop.permute.xlu0 %4327
      %v4330 = vsel %vm2009, %v4274, %v4304
      %v4331 = vsel %vm2155, %v4330, %v4308
      %v4332 = vsel %vm2157, %v4331, %v4312
      %v4333 = vsel %vm2159, %v4332, %v4316
      %v4334 = vsel %vm2161, %v4333, %v4320
      %v4335 = vsel %vm2163, %v4334, %v4324
      %v4336 = vsel %vm2165, %v4335, %v4328
      %v4338 = vsel %vm1955, %v4213, 0
      %v4341 = vsel %vm2287, %v4336, 0
      %4343 = vmatprep.subr.mxu0 0.0
      %4344 = vmatpush1.msra.mxu0 %v4341
      %4345 = vmatprep.subr.mxu0 0.0
      %4346 = vmatpush1.msra.mxu0 0.0
      %4347 = vmatprep.subr.mxu0 0.0
      %4348 = vmatpush1.msra.mxu0 0.0
      %4349 = vmatprep.subr.mxu0 0.0
      %4350 = vmatpush1.msra.mxu0 0.0
      %4351 = vmatprep.subr.mxu0 0.0
      %4352 = vmatpush1.msra.mxu0 0.0
      %4353 = vmatprep.subr.mxu0 0.0
      %4354 = vmatpush1.msra.mxu0 0.0
      %4355 = vmatprep.subr.mxu0 0.0
      %4356 = vmatpush1.msra.mxu0 0.0
      %4357 = vmatprep.subr.mxu0 0.0
      %4358 = vmatpush1.msra.mxu0 0.0
      %4359 = vmatprep.subr.mxu0 0.0
      %4360 = vmatpush1.msra.mxu0 0.0
      %4361 = vmatprep.subr.mxu0 0.0
      %4362 = vmatpush1.msra.mxu0 0.0
      %4363 = vmatprep.subr.mxu0 0.0
      %4364 = vmatpush1.msra.mxu0 0.0
      %4365 = vmatprep.subr.mxu0 0.0
      %4366 = vmatpush1.msra.mxu0 0.0
      %4367 = vmatprep.subr.mxu0 0.0
      %4368 = vmatpush1.msra.mxu0 0.0
      %4369 = vmatprep.subr.mxu0 0.0
      %4370 = vmatpush1.msra.mxu0 0.0
      %4371 = vmatprep.subr.mxu0 0.0
      %4372 = vmatpush1.msra.mxu0 0.0
      %4373 = vmatprep.subr.mxu0 0.0
      %4374 = vmatpush1.msra.mxu0 0.0
      %4375 = vmatprep.subr.mxu0 0.0
      %4376 = vmatpush1.msra.mxu0 0.0
      %4377 = vmatprep.subr.mxu0 0.0
      %4378 = vmatpush1.msra.mxu0 0.0
      %4379 = vmatprep.subr.mxu0 0.0
      %4380 = vmatpush1.msra.mxu0 0.0
      %4381 = vmatprep.subr.mxu0 0.0
      %4382 = vmatpush1.msra.mxu0 0.0
      %4383 = vmatprep.subr.mxu0 0.0
      %4384 = vmatpush1.msra.mxu0 0.0
      %4385 = vmatprep.subr.mxu0 0.0
      %4386 = vmatpush1.msra.mxu0 0.0
      %4387 = vmatprep.subr.mxu0 0.0
      %4388 = vmatpush1.msra.mxu0 0.0
      %4389 = vmatprep.subr.mxu0 0.0
      %4390 = vmatpush1.msra.mxu0 0.0
      %4391 = vmatprep.subr.mxu0 0.0
      %4392 = vmatpush1.msra.mxu0 0.0
      %4393 = vmatprep.subr.mxu0 0.0
      %4394 = vmatpush1.msra.mxu0 0.0
      %4395 = vmatprep.subr.mxu0 0.0
      %4396 = vmatpush1.msra.mxu0 0.0
      %4397 = vmatprep.subr.mxu0 0.0
      %4398 = vmatpush1.msra.mxu0 0.0
      %4399 = vmatprep.subr.mxu0 0.0
      %4400 = vmatpush1.msra.mxu0 0.0
      %4401 = vmatprep.subr.mxu0 0.0
      %4402 = vmatpush1.msra.mxu0 0.0
      %4403 = vmatprep.subr.mxu0 0.0
      %4404 = vmatpush1.msra.mxu0 0.0
      %4405 = vmatprep.subr.mxu0 0.0
      %4406 = vmatpush1.msra.mxu0 0.0
      %4407 = vmatprep.mubr.f32.mxu0 0.0
      %4408 = vmatmul.mubr.f32.gmra.mrb[0].mxu0 %v4338
      %v4409 = vpop.f32.mrb[0].mxu0
      %v4410 = vadd.f32 0.0, %v4409
      %v4411 = vpop.f32.mrb[0].mxu0
      %4412 = vdwg.mxu0
      %v4413 = vadd.f32 %v4211, %v4410
      %s4414 = scalar_lea.vmem %s1, 88
      %v4415 = vld [vmem:[%s4414] sm:$0xff]
      %v4416 = vld [vmem:[#allocation2 + $0x2] sm:$0xff]
      %v4417 = vld [vmem:[#allocation2 + $0x12] sm:$0xff]
      %v4418 = vld [vmem:[#allocation2 + $0x22] sm:$0xff]
      %v4419 = vld [vmem:[#allocation2 + $0x32] sm:$0xff]
      %4424 = vrot.lane.b32.xlu0 %v4416, 125
      %v4425 = vpop.permute.xlu0 %4424
      %4426 = vrot.lane.b32.xlu0 %v4417, 125
      %v4427 = vpop.permute.xlu0 %4426
      %4428 = vrot.lane.b32.xlu0 %v4418, 125
      %v4429 = vpop.permute.xlu0 %4428
      %4430 = vrot.lane.b32.xlu0 %v4419, 125
      %v4431 = vpop.permute.xlu0 %4430
      %v4436 = vcombine.low %v4425, %v4429
      %v4437 = vcombine.high %v4425, %v4429
      %v4439 = vunpack.c.l.s4 1983009808
      %v4440 = vunpack.c.0.s8 %v4439
      %v4441 = vlaneseq
      %v4442 = vshrl.u32 %v4441, 7
      %v4443 = vsub.s32 %v4440, %v4442
      %v4444 = vrot.slane %v4436, %v4443
      %v4446 = vunpack.c.l.s4 1983009808
      %v4447 = vunpack.c.0.s8 %v4446
      %v4448 = vlaneseq
      %v4449 = vshrl.u32 %v4448, 7
      %v4450 = vsub.s32 %v4447, %v4449
      %v4451 = vrot.slane %v4437, %v4450
      %v4452 = vcombine.low %v4427, %v4431
      %v4453 = vcombine.high %v4427, %v4431
      %v4455 = vunpack.c.l.s4 1983009808
      %v4456 = vunpack.c.0.s8 %v4455
      %v4457 = vlaneseq
      %v4458 = vshrl.u32 %v4457, 7
      %v4459 = vsub.s32 %v4456, %v4458
      %v4460 = vrot.slane %v4452, %v4459
      %v4462 = vunpack.c.l.s4 1983009808
      %v4463 = vunpack.c.0.s8 %v4462
      %v4464 = vlaneseq
      %v4465 = vshrl.u32 %v4464, 7
      %v4466 = vsub.s32 %v4463, %v4465
      %v4467 = vrot.slane %v4453, %v4466
      %v4468 = vcombine.low %v4444, %v4460
      %v4469 = vcombine.high %v4444, %v4460
      %v4471 = vunpack.c.l.s4 1934713408
      %v4472 = vunpack.c.0.s8 %v4471
      %v4473 = vlaneseq
      %v4474 = vshrl.u32 %v4473, 7
      %v4475 = vsub.s32 %v4472, %v4474
      %v4476 = vrot.slane %v4468, %v4475
      %v4478 = vunpack.c.l.s4 1934713408
      %v4479 = vunpack.c.0.s8 %v4478
      %v4480 = vlaneseq
      %v4481 = vshrl.u32 %v4480, 7
      %v4482 = vsub.s32 %v4479, %v4481
      %v4483 = vrot.slane %v4469, %v4482
      %v4484 = vcombine.low %v4451, %v4467
      %v4485 = vcombine.high %v4451, %v4467
      %v4487 = vunpack.c.l.s4 1934713408
      %v4488 = vunpack.c.0.s8 %v4487
      %v4489 = vlaneseq
      %v4490 = vshrl.u32 %v4489, 7
      %v4491 = vsub.s32 %v4488, %v4490
      %v4492 = vrot.slane %v4484, %v4491
      %v4494 = vunpack.c.l.s4 1934713408
      %v4495 = vunpack.c.0.s8 %v4494
      %v4496 = vlaneseq
      %v4497 = vshrl.u32 %v4496, 7
      %v4498 = vsub.s32 %v4495, %v4497
      %v4499 = vrot.slane %v4485, %v4498
      %v4500 = vcombine.high %v4476, 0.0
      %v4501 = vcombine.high %v4483, 0.0
      %v4502 = vcombine.high %v4492, 0.0
      %v4503 = vcombine.high %v4499, 0.0
      %4505 = vrot.lane.b32.xlu0 %v4500, 16
      %v4506 = vpop.permute.xlu0 %4505
      %4509 = vrot.lane.b32.xlu0 %v4483, 32
      %v4510 = vpop.permute.xlu0 %4509
      %4513 = vrot.lane.b32.xlu0 %v4501, 48
      %v4514 = vpop.permute.xlu0 %4513
      %4517 = vrot.lane.b32.xlu0 %v4492, 64
      %v4518 = vpop.permute.xlu0 %4517
      %4521 = vrot.lane.b32.xlu0 %v4502, 80
      %v4522 = vpop.permute.xlu0 %4521
      %4525 = vrot.lane.b32.xlu0 %v4499, 96
      %v4526 = vpop.permute.xlu0 %4525
      %4529 = vrot.lane.b32.xlu0 %v4503, 112
      %v4530 = vpop.permute.xlu0 %4529
      %v4532 = vsel %vm2009, %v4476, %v4506
      %v4533 = vsel %vm2155, %v4532, %v4510
      %v4534 = vsel %vm2157, %v4533, %v4514
      %v4535 = vsel %vm2159, %v4534, %v4518
      %v4536 = vsel %vm2161, %v4535, %v4522
      %v4537 = vsel %vm2163, %v4536, %v4526
      %v4538 = vsel %vm2165, %v4537, %v4530
      %v4540 = vsel %vm1955, %v4415, 0
      %v4543 = vsel %vm2287, %v4538, 0
      %4545 = vmatprep.subr.mxu0 0.0
      %4546 = vmatpush1.msra.mxu0 %v4543
      %4547 = vmatprep.subr.mxu0 0.0
      %4548 = vmatpush1.msra.mxu0 0.0
      %4549 = vmatprep.subr.mxu0 0.0
      %4550 = vmatpush1.msra.mxu0 0.0
      %4551 = vmatprep.subr.mxu0 0.0
      %4552 = vmatpush1.msra.mxu0 0.0
      %4553 = vmatprep.subr.mxu0 0.0
      %4554 = vmatpush1.msra.mxu0 0.0
      %4555 = vmatprep.subr.mxu0 0.0
      %4556 = vmatpush1.msra.mxu0 0.0
      %4557 = vmatprep.subr.mxu0 0.0
      %4558 = vmatpush1.msra.mxu0 0.0
      %4559 = vmatprep.subr.mxu0 0.0
      %4560 = vmatpush1.msra.mxu0 0.0
      %4561 = vmatprep.subr.mxu0 0.0
      %4562 = vmatpush1.msra.mxu0 0.0
      %4563 = vmatprep.subr.mxu0 0.0
      %4564 = vmatpush1.msra.mxu0 0.0
      %4565 = vmatprep.subr.mxu0 0.0
      %4566 = vmatpush1.msra.mxu0 0.0
      %4567 = vmatprep.subr.mxu0 0.0
      %4568 = vmatpush1.msra.mxu0 0.0
      %4569 = vmatprep.subr.mxu0 0.0
      %4570 = vmatpush1.msra.mxu0 0.0
      %4571 = vmatprep.subr.mxu0 0.0
      %4572 = vmatpush1.msra.mxu0 0.0
      %4573 = vmatprep.subr.mxu0 0.0
      %4574 = vmatpush1.msra.mxu0 0.0
      %4575 = vmatprep.subr.mxu0 0.0
      %4576 = vmatpush1.msra.mxu0 0.0
      %4577 = vmatprep.subr.mxu0 0.0
      %4578 = vmatpush1.msra.mxu0 0.0
      %4579 = vmatprep.subr.mxu0 0.0
      %4580 = vmatpush1.msra.mxu0 0.0
      %4581 = vmatprep.subr.mxu0 0.0
      %4582 = vmatpush1.msra.mxu0 0.0
      %4583 = vmatprep.subr.mxu0 0.0
      %4584 = vmatpush1.msra.mxu0 0.0
      %4585 = vmatprep.subr.mxu0 0.0
      %4586 = vmatpush1.msra.mxu0 0.0
      %4587 = vmatprep.subr.mxu0 0.0
      %4588 = vmatpush1.msra.mxu0 0.0
      %4589 = vmatprep.subr.mxu0 0.0
      %4590 = vmatpush1.msra.mxu0 0.0
      %4591 = vmatprep.subr.mxu0 0.0
      %4592 = vmatpush1.msra.mxu0 0.0
      %4593 = vmatprep.subr.mxu0 0.0
      %4594 = vmatpush1.msra.mxu0 0.0
      %4595 = vmatprep.subr.mxu0 0.0
      %4596 = vmatpush1.msra.mxu0 0.0
      %4597 = vmatprep.subr.mxu0 0.0
      %4598 = vmatpush1.msra.mxu0 0.0
      %4599 = vmatprep.subr.mxu0 0.0
      %4600 = vmatpush1.msra.mxu0 0.0
      %4601 = vmatprep.subr.mxu0 0.0
      %4602 = vmatpush1.msra.mxu0 0.0
      %4603 = vmatprep.subr.mxu0 0.0
      %4604 = vmatpush1.msra.mxu0 0.0
      %4605 = vmatprep.subr.mxu0 0.0
      %4606 = vmatpush1.msra.mxu0 0.0
      %4607 = vmatprep.subr.mxu0 0.0
      %4608 = vmatpush1.msra.mxu0 0.0
      %4609 = vmatprep.mubr.f32.mxu0 0.0
      %4610 = vmatmul.mubr.f32.gmra.mrb[0].mxu0 %v4540
      %v4611 = vpop.f32.mrb[0].mxu0
      %v4612 = vadd.f32 0.0, %v4611
      %v4613 = vpop.f32.mrb[0].mxu0
      %4614 = vdwg.mxu0
      %v4615 = vadd.f32 %v4413, %v4612
      %vm4616 = vcmp.gt.f32.partialorder %v4615, 0.0
      %v4617 = vmul.f32 %v4615, 0.1
      %v4618 = vsel %vm4616, %v4615, %v4617
      %4620 = vrot.lane.b32.xlu0 %v4618, 112
      %v4621 = vpop.permute.xlu0 %4620
      %4623 = vrot.lane.b32.xlu0 %v4618, 96
      %v4624 = vpop.permute.xlu0 %4623
      %4626 = vrot.lane.b32.xlu0 %v4618, 80
      %v4627 = vpop.permute.xlu0 %4626
      %4629 = vrot.lane.b32.xlu0 %v4618, 64
      %v4630 = vpop.permute.xlu0 %4629
      %4632 = vrot.lane.b32.xlu0 %v4618, 48
      %v4633 = vpop.permute.xlu0 %4632
      %4635 = vrot.lane.b32.xlu0 %v4618, 32
      %v4636 = vpop.permute.xlu0 %4635
      %4638 = vrot.lane.b32.xlu0 %v4618, 16
      %v4639 = vpop.permute.xlu0 %4638
      %v4641 = vcombine.low %v4618, %v4624
      %v4642 = vcombine.high %v4618, %v4624
      %v4644 = vunpack.c.l.s4 1983009808
      %v4645 = vunpack.c.0.s8 %v4644
      %v4646 = vlaneseq
      %v4647 = vshrl.u32 %v4646, 7
      %v4648 = vsub.s32 %v4645, %v4647
      %v4649 = vrot.slane %v4641, %v4648
      %v4651 = vunpack.c.l.s4 1983009808
      %v4652 = vunpack.c.0.s8 %v4651
      %v4653 = vlaneseq
      %v4654 = vshrl.u32 %v4653, 7
      %v4655 = vsub.s32 %v4652, %v4654
      %v4656 = vrot.slane %v4642, %v4655
      %v4657 = vcombine.low %v4621, %v4627
      %v4658 = vcombine.high %v4621, %v4627
      %v4660 = vunpack.c.l.s4 1983009808
      %v4661 = vunpack.c.0.s8 %v4660
      %v4662 = vlaneseq
      %v4663 = vshrl.u32 %v4662, 7
      %v4664 = vsub.s32 %v4661, %v4663
      %v4665 = vrot.slane %v4657, %v4664
      %v4667 = vunpack.c.l.s4 1983009808
      %v4668 = vunpack.c.0.s8 %v4667
      %v4669 = vlaneseq
      %v4670 = vshrl.u32 %v4669, 7
      %v4671 = vsub.s32 %v4668, %v4670
      %v4672 = vrot.slane %v4658, %v4671
      %v4673 = vcombine.low %v4630, %v4636
      %v4674 = vcombine.high %v4630, %v4636
      %v4676 = vunpack.c.l.s4 1983009808
      %v4677 = vunpack.c.0.s8 %v4676
      %v4678 = vlaneseq
      %v4679 = vshrl.u32 %v4678, 7
      %v4680 = vsub.s32 %v4677, %v4679
      %v4681 = vrot.slane %v4673, %v4680
      %v4683 = vunpack.c.l.s4 1983009808
      %v4684 = vunpack.c.0.s8 %v4683
      %v4685 = vlaneseq
      %v4686 = vshrl.u32 %v4685, 7
      %v4687 = vsub.s32 %v4684, %v4686
      %v4688 = vrot.slane %v4674, %v4687
      %v4689 = vcombine.low %v4633, %v4639
      %v4690 = vcombine.high %v4633, %v4639
      %v4692 = vunpack.c.l.s4 1983009808
      %v4693 = vunpack.c.0.s8 %v4692
      %v4694 = vlaneseq
      %v4695 = vshrl.u32 %v4694, 7
      %v4696 = vsub.s32 %v4693, %v4695
      %v4697 = vrot.slane %v4689, %v4696
      %v4699 = vunpack.c.l.s4 1983009808
      %v4700 = vunpack.c.0.s8 %v4699
      %v4701 = vlaneseq
      %v4702 = vshrl.u32 %v4701, 7
      %v4703 = vsub.s32 %v4700, %v4702
      %v4704 = vrot.slane %v4690, %v4703
      %v4705 = vcombine.low %v4649, %v4665
      %v4706 = vcombine.high %v4649, %v4665
      %v4708 = vunpack.c.l.s4 1934713408
      %v4709 = vunpack.c.0.s8 %v4708
      %v4710 = vlaneseq
      %v4711 = vshrl.u32 %v4710, 7
      %v4712 = vsub.s32 %v4709, %v4711
      %v4713 = vrot.slane %v4705, %v4712
      %v4715 = vunpack.c.l.s4 1934713408
      %v4716 = vunpack.c.0.s8 %v4715
      %v4717 = vlaneseq
      %v4718 = vshrl.u32 %v4717, 7
      %v4719 = vsub.s32 %v4716, %v4718
      %v4720 = vrot.slane %v4706, %v4719
      %v4721 = vcombine.low %v4656, %v4672
      %v4722 = vcombine.high %v4656, %v4672
      %v4724 = vunpack.c.l.s4 1934713408
      %v4725 = vunpack.c.0.s8 %v4724
      %v4726 = vlaneseq
      %v4727 = vshrl.u32 %v4726, 7
      %v4728 = vsub.s32 %v4725, %v4727
      %v4729 = vrot.slane %v4721, %v4728
      %v4731 = vunpack.c.l.s4 1934713408
      %v4732 = vunpack.c.0.s8 %v4731
      %v4733 = vlaneseq
      %v4734 = vshrl.u32 %v4733, 7
      %v4735 = vsub.s32 %v4732, %v4734
      %v4736 = vrot.slane %v4722, %v4735
      %v4737 = vcombine.low %v4681, %v4697
      %v4738 = vcombine.high %v4681, %v4697
      %v4740 = vunpack.c.l.s4 1934713408
      %v4741 = vunpack.c.0.s8 %v4740
      %v4742 = vlaneseq
      %v4743 = vshrl.u32 %v4742, 7
      %v4744 = vsub.s32 %v4741, %v4743
      %v4745 = vrot.slane %v4737, %v4744
      %v4747 = vunpack.c.l.s4 1934713408
      %v4748 = vunpack.c.0.s8 %v4747
      %v4749 = vlaneseq
      %v4750 = vshrl.u32 %v4749, 7
      %v4751 = vsub.s32 %v4748, %v4750
      %v4752 = vrot.slane %v4738, %v4751
      %v4753 = vcombine.low %v4688, %v4704
      %v4754 = vcombine.high %v4688, %v4704
      %v4756 = vunpack.c.l.s4 1934713408
      %v4757 = vunpack.c.0.s8 %v4756
      %v4758 = vlaneseq
      %v4759 = vshrl.u32 %v4758, 7
      %v4760 = vsub.s32 %v4757, %v4759
      %v4761 = vrot.slane %v4753, %v4760
      %v4763 = vunpack.c.l.s4 1934713408
      %v4764 = vunpack.c.0.s8 %v4763
      %v4765 = vlaneseq
      %v4766 = vshrl.u32 %v4765, 7
      %v4767 = vsub.s32 %v4764, %v4766
      %v4768 = vrot.slane %v4754, %v4767
      %v4769 = vcombine.low %v4713, %v4745
      %v4770 = vcombine.high %v4713, %v4745
      %v4771 = vcombine.low %v4720, %v4752
      %v4772 = vcombine.high %v4720, %v4752
      %v4773 = vcombine.low %v4729, %v4761
      %v4774 = vcombine.high %v4729, %v4761
      %v4775 = vcombine.low %v4736, %v4768
      %v4776 = vcombine.high %v4736, %v4768
      %4785 = vrot.lane.b32.xlu0 %v4769, 16
      %v4786 = vpop.permute.xlu0 %4785
      %4787 = vrot.lane.b32.xlu0 %v4770, 16
      %v4788 = vpop.permute.xlu0 %4787
      %4789 = vrot.lane.b32.xlu0 %v4771, 16
      %v4790 = vpop.permute.xlu0 %4789
      %4791 = vrot.lane.b32.xlu0 %v4772, 16
      %v4792 = vpop.permute.xlu0 %4791
      %4793 = vrot.lane.b32.xlu0 %v4773, 16
      %v4794 = vpop.permute.xlu0 %4793
      %4795 = vrot.lane.b32.xlu0 %v4774, 16
      %v4796 = vpop.permute.xlu0 %4795
      %4797 = vrot.lane.b32.xlu0 %v4775, 16
      %v4798 = vpop.permute.xlu0 %4797
      %4799 = vrot.lane.b32.xlu0 %v4776, 16
      %v4800 = vpop.permute.xlu0 %4799
      %vm4809 = vcmask 261248
      %4810 = vst.msk [vmem:[%s163] sm:$0xff] %vm4809, %v4786
      %4811 = vst.msk [vmem:[%s163 + $0x8] sm:$0xff] %vm4809, %v4788
      %4812 = vst.msk [vmem:[%s163 + $0x10] sm:$0xff] %vm4809, %v4790
      %4813 = vst.msk [vmem:[%s163 + $0x18] sm:$0xff] %vm4809, %v4792
      %4814 = vst.msk [vmem:[%s163 + $0x20] sm:$0xff] %vm4809, %v4794
      %4815 = vst.msk [vmem:[%s163 + $0x28] sm:$0xff] %vm4809, %v4796
      %4816 = vst.msk [vmem:[%s163 + $0x30] sm:$0xff] %vm4809, %v4798
      %4817 = vst.msk [vmem:[%s163 + $0x38] sm:$0xff] %vm4809, %v4800
      %p4818 = scmp.lt.s32.totalorder %s17, 1
      %s4819 = scalar_select %p4818, %s17, 1
      %p4820 = scmp.lt.s32.totalorder %s18, 0
      %s4821 = scalar_select %p4820, %s18, 0
      %s4822 = smul.addr %s4819, 8
      %s4823 = sadd.s32 %s4821, %s4822
      %s4824 = smul.addr %s4823, 8
      %s4825 = scalar_lea.vmem %s2, %s4824
      // Predicated region
      $region29: #{upconv2d.1} parent=27 // pred_check
        %p4826 = pneg %p92
      $region30: #{upconv2d.1} parent=27 // pred_check_branch
        %4828 = sbr.rel (%p4826) target = $region32
      $region31: #{upconv2d.1} parent=27 // pred_region
        _
      $region32: #{upconv2d.1} parent=27 // pred_fallthru
        _
    $region28: #{upconv2d.1} parent=5 // pred_fallthru
      _
    %p4829 = scmp.le.s32.totalorder 2, %s8
    // Predicated region
    $region33: #{upconv2d.1} parent=5 // pred_check
      %p4830 = pneg %p4829
    $region34: #{upconv2d.1} parent=5 // pred_check_branch
      %4832 = sbr.rel (%p4830) target = $region36
    $region35: #{upconv2d.1} parent=5 // pred_region
      %s4833 = ssub.s32 %s8, 2
      // Predicated region
      $region37: #{upconv2d.1} parent=35 // pred_check
        %p4834 = pneg %p98
      $region38: #{upconv2d.1} parent=35 // pred_check_branch
        %4836 = sbr.rel (%p4834) target = $region40
      $region39: #{upconv2d.1} parent=35 // pred_region
        %p4837 = scmp.lt.s32.totalorder %s19, 1
        %s4838 = scalar_select %p4837, %s19, 1
        %p4839 = scmp.lt.s32.totalorder %s20, 0
        %s4840 = scalar_select %p4839, %s20, 0
        %s4841 = smul.addr %s4838, 8
        %s4842 = sadd.s32 %s4840, %s4841
        %s4843 = smul.addr %s4842, 8
        %s4844 = scalar_lea.vmem %s2, %s4843
      $region40: #{upconv2d.1} parent=35 // pred_fallthru
        _
    $region36: #{upconv2d.1} parent=5 // pred_fallthru
      _
  $region6: #{upconv2d.1} parent=0 // loop_footer
    %s12 = sadd.s32 1, %s8
  $region7: #{upconv2d.1} parent=0 // loop_footer_branch
    %7 = sbr.rel target = $region3
  $region8: #{upconv2d.1} parent=0 // loop_exit
    _

</llo_original>
